<compile_context>
chip_gen: v6e
topology: v6e:2x2x1
jax: 0.10.0
libtpu: 0.0.40
codegen_flags: <defaults>
</compile_context>

<pallas_src>
import jax
import jax.numpy as jnp
from jax import lax
from jax.experimental import pallas as pl
from jax.experimental.pallas import tpu as pltpu

NUM_CLASSES = 10
PAD_CLASSES = 128          # lane-aligned padding for the logits
BN_EPS = 1e-5
FEAT_DIM = 1024            # l3_points.view(B, 1024)
HID1, HID2 = 512, 256
NUM_HEADS = 2              # classifiers[0] (old) and classifiers[1] (new)
NEG_BIG = -1e30            # plain Python float (NOT a jnp array -> no capture)


# ----------------------------------------------------------------------------
# Kernel A (single-TC chips, grid=()): both heads in one step, fc1 concatenated.
#   h_cat  = relu(x @ [w1_old | w1_new] + [t1_old | t1_new])       (B, 1024)
#   per head: h = relu(h_half @ w2 + t2); logits = h @ w3 + b3 (padded, bias
#   pad lanes = -1e30); out = log_softmax over the 128 lanes (pads vanish).
# ----------------------------------------------------------------------------
def _heads_fused_kernel(x_ref, w1c_ref, t1c_ref, w2s_ref, t2s_ref,
                        w3s_ref, b3s_ref, logp_ref):
    x = x_ref[...]                                                  # (B, 1024) bf16
    hc = jnp.dot(x, w1c_ref[...], preferred_element_type=jnp.float32) + t1c_ref[...]
    hc = jnp.maximum(hc, 0.0)                                       # (B, 2*HID1) f32
    for h in range(NUM_HEADS):                                      # unrolled (2 heads)
        hh = hc[:, h * HID1:(h + 1) * HID1].astype(jnp.bfloat16)
        g = jnp.dot(hh, w2s_ref[h], preferred_element_type=jnp.float32) + t2s_ref[h]
        g = jnp.maximum(g, 0.0)
        logits = (jnp.dot(g.astype(jnp.bfloat16), w3s_ref[h],
                          preferred_element_type=jnp.float32) + b3s_ref[h])
        m = jnp.max(logits, axis=-1, keepdims=True)
        z = logits - m
        lse = jnp.log(jnp.sum(jnp.exp(z), axis=-1, keepdims=True))
        logp_ref[h] = z - lse


# ----------------------------------------------------------------------------
# Kernel B (dual-TC v7x, grid=(NUM_HEADS,), "parallel"): one head per core.
# ----------------------------------------------------------------------------
def _head_per_core_kernel(x_ref, w1_ref, t1_ref, w2_ref, t2_ref,
                          w3_ref, b3_ref, logp_ref):
    x = x_ref[...]                                                  # (B, 1024) bf16
    h = jnp.maximum(jnp.dot(x, w1_ref[...],
                            preferred_element_type=jnp.float32) + t1_ref[...], 0.0)
    h = jnp.maximum(jnp.dot(h.astype(jnp.bfloat16), w2_ref[...],
                            preferred_element_type=jnp.float32) + t2_ref[...], 0.0)
    logits = (jnp.dot(h.astype(jnp.bfloat16), w3_ref[...],
                      preferred_element_type=jnp.float32) + b3_ref[...])
    m = jnp.max(logits, axis=-1, keepdims=True)
    z = logits - m
    lse = jnp.log(jnp.sum(jnp.exp(z), axis=-1, keepdims=True))
    logp_ref[...] = z - lse


# ----------------------------------------------------------------------------
# Dispatch / wrapper
# ----------------------------------------------------------------------------
def _num_tensorcores_per_chip():
    try:
        kind = jax.devices()[0].device_kind.lower()
    except Exception:
        return 1
    return 2 if ("v7" in kind or "tpu7" in kind) else 1


def _cost_estimate(B):
    flops = 2 * B * NUM_HEADS * (FEAT_DIM * HID1 + HID1 * HID2 + HID2 * PAD_CLASSES)
    transcendentals = NUM_HEADS * B * (PAD_CLASSES + 1)
    weight_bytes = NUM_HEADS * (FEAT_DIM * HID1 + HID1 * HID2 + HID2 * PAD_CLASSES) * 2
    io_bytes = (B * FEAT_DIM * 2 + NUM_HEADS * B * PAD_CLASSES * 4
                + NUM_HEADS * (HID1 + HID2 + PAD_CLASSES) * 4)
    return pl.CostEstimate(flops=int(flops), transcendentals=int(transcendentals),
                           bytes_accessed=int(weight_bytes + io_bytes))


def run_heads(x_bf16, old_p, new_p):
    """x_bf16: (B, FEAT_DIM) bf16. Returns (NUM_HEADS, B, PAD_CLASSES) f32 log-probs."""
    B = x_bf16.shape[0]
    w2s = jnp.stack([old_p["w2"], new_p["w2"]])
    t2s = jnp.stack([old_p["t2"], new_p["t2"]])
    w3s = jnp.stack([old_p["w3"], new_p["w3"]])
    b3s = jnp.stack([old_p["b3"], new_p["b3"]])

    if _num_tensorcores_per_chip() >= 2:
        # v7x: shard the two heads across the two TensorCores.
        w1s = jnp.stack([old_p["w1"], new_p["w1"]])
        t1s = jnp.stack([old_p["t1"], new_p["t1"]])
        return pl.pallas_call(
            _head_per_core_kernel,
            grid=(NUM_HEADS,),
            in_specs=[
                pl.BlockSpec((B, FEAT_DIM), lambda h: (0, 0)),
                pl.BlockSpec((None, FEAT_DIM, HID1), lambda h: (h, 0, 0)),
                pl.BlockSpec((None, 1, HID1), lambda h: (h, 0, 0)),
                pl.BlockSpec((None, HID1, HID2), lambda h: (h, 0, 0)),
                pl.BlockSpec((None, 1, HID2), lambda h: (h, 0, 0)),
                pl.BlockSpec((None, HID2, PAD_CLASSES), lambda h: (h, 0, 0)),
                pl.BlockSpec((None, 1, PAD_CLASSES), lambda h: (h, 0, 0)),
            ],
            out_specs=pl.BlockSpec((None, B, PAD_CLASSES), lambda h: (h, 0, 0)),
            out_shape=jax.ShapeDtypeStruct((NUM_HEADS, B, PAD_CLASSES), jnp.float32),
            compiler_params=pltpu.CompilerParams(dimension_semantics=("parallel",)),
            cost_estimate=_cost_estimate(B),
        )(x_bf16, w1s, t1s, w2s, t2s, w3s, b3s)

    # v5e / v6e (single TensorCore): one kernel step, fc1 of both heads fused.
    w1c = jnp.concatenate([old_p["w1"], new_p["w1"]], axis=1)   # (1024, 2*HID1) bf16
    t1c = jnp.concatenate([old_p["t1"], new_p["t1"]], axis=1)   # (1, 2*HID1) f32
    return pl.pallas_call(
        _heads_fused_kernel,
        out_shape=jax.ShapeDtypeStruct((NUM_HEADS, B, PAD_CLASSES), jnp.float32),
        cost_estimate=_cost_estimate(B),
    )(x_bf16, w1c, t1c, w2s, t2s, w3s, b3s)


def pointconv_lwf_forward(xyz, feat, enc_w, old_p, new_p):
    """Forward pass: stand-in encoder (plain XLA, runs once) + fused classifier
    heads (Pallas).  Returns (log_probs_old, log_probs_new, feat)."""
    pooled = standin_pool(xyz, feat)                                       # (B, 14)
    x = jnp.tanh(jnp.dot(pooled, enc_w, precision=lax.Precision.HIGHEST))  # (B, 1024) f32
    logp = run_heads(x.astype(jnp.bfloat16), old_p, new_p)
    return logp[0, :, :NUM_CLASSES], logp[1, :, :NUM_CLASSES], x


# ----------------------------------------------------------------------------
# Parameter construction (deterministic, in-script), BN folded into the fc.
# ----------------------------------------------------------------------------
def _xavier(key, fan_in, fan_out):
    a = (6.0 / (fan_in + fan_out)) ** 0.5
    return jax.random.uniform(key, (fan_in, fan_out), jnp.float32, -a, a)


def make_head_params(key):
    ks = jax.random.split(key, 11)
    w1 = _xavier(ks[0], FEAT_DIM, HID1)
    b1 = jnp.zeros((HID1,), jnp.float32)
    w2 = _xavier(ks[1], HID1, HID2)
    b2 = jnp.zeros((HID2,), jnp.float32)
    w3 = _xavier(ks[2], HID2, NUM_CLASSES)
    b3 = jnp.zeros((NUM_CLASSES,), jnp.float32)

    # BatchNorm1d params / running stats (eval mode), deterministic but non-trivial.
    g1 = 1.0 + 0.1 * jax.random.normal(ks[3], (HID1,), jnp.float32)
    be1 = 0.1 * jax.random.normal(ks[4], (HID1,), jnp.float32)
    m1 = 0.1 * jax.random.normal(ks[5], (HID1,), jnp.float32)
    v1 = jnp.abs(jax.random.normal(ks[6], (HID1,), jnp.float32)) + 0.5
    g2 = 1.0 + 0.1 * jax.random.normal(ks[7], (HID2,), jnp.float32)
    be2 = 0.1 * jax.random.normal(ks[8], (HID2,), jnp.float32)
    m2 = 0.1 * jax.random.normal(ks[9], (HID2,), jnp.float32)
    v2 = jnp.abs(jax.random.normal(ks[10], (HID2,), jnp.float32)) + 0.5

    # Fold eval-mode BN:  bn(fc(x)) = x @ (w * s) + (b * s + shift)
    s1 = g1 / jnp.sqrt(v1 + BN_EPS)
    sh1 = be1 - m1 * s1
    s2 = g2 / jnp.sqrt(v2 + BN_EPS)
    sh2 = be2 - m2 * s2

    w1f = (w1 * s1[None, :]).astype(jnp.bfloat16)
    t1 = (b1 * s1 + sh1).reshape(1, HID1)
    w2f = (w2 * s2[None, :]).astype(jnp.bfloat16)
    t2 = (b2 * s2 + sh2).reshape(1, HID2)

    # Pad fc3 to 128 output lanes: weight pad columns are zero, bias pad lanes are
    # -1e30, so padded logits come out pre-masked (no iota/where in the kernel).
    w3p = (jnp.zeros((HID2, PAD_CLASSES), jnp.float32)
           .at[:, :NUM_CLASSES].set(w3)).astype(jnp.bfloat16)
    b3p = jnp.full((1, PAD_CLASSES), NEG_BIG, jnp.float32).at[0, :NUM_CLASSES].set(b3)

    return dict(w1=w1f, t1=t1, w2=w2f, t2=t2, w3=w3p, b3=b3p)


# ----------------------------------------------------------------------------
# Stand-in for shared_model.sa1 / sa2 / sa3 (global pooling; see TODO at top).
# ----------------------------------------------------------------------------
def standin_pool(xyz, feat):
    return jnp.concatenate(
        [jnp.max(xyz, axis=-1), jnp.mean(xyz, axis=-1),
         jnp.max(feat, axis=-1), jnp.mean(feat, axis=-1)], axis=-1)


# ----------------------------------------------------------------------------
# Pure-JAX reference (same math / dtypes as the kernel) for correctness checks.
# ----------------------------------------------------------------------------
def _ref_head(x, p):
    xb = x.astype(jnp.bfloat16)
    h = jnp.maximum(jnp.dot(xb, p["w1"],
                            preferred_element_type=jnp.float32) + p["t1"], 0.0)
    h = jnp.maximum(jnp.dot(h.astype(jnp.bfloat16), p["w2"],
                            preferred_element_type=jnp.float32) + p["t2"], 0.0)
    logits = (jnp.dot(h.astype(jnp.bfloat16), p["w3"][:, :NUM_CLASSES],
                      preferred_element_type=jnp.float32) + p["b3"][:, :NUM_CLASSES])
    return jax.nn.log_softmax(logits, axis=-1)


if __name__ == "__main__":
    key = jax.random.PRNGKey(0)
    k_xyz, k_feat, k_enc, k_old, k_new = jax.random.split(key, 5)

    B, C, N = 8, 4, 64
    xyz = jax.random.normal(k_xyz, (B, 3, N), jnp.float32)     # point coords   (B, 3, N)
    feat = jax.random.normal(k_feat, (B, C, N), jnp.float32)   # point features (B, C, N)

    pool_dim = 2 * (3 + C)                                     # = 14
    enc_w = 0.1 * jax.random.normal(k_enc, (pool_dim, FEAT_DIM), jnp.float32)

    old_p = make_head_params(k_old)
    new_p = make_head_params(k_new)

    old, new, feat_out = pointconv_lwf_forward(xyz, feat, enc_w, old_p, new_p)
    old = jax.block_until_ready(old)
    new = jax.block_until_ready(new)
    feat_out = jax.block_until_ready(feat_out)

    # --- correctness checks against pure-JAX references ---
    assert old.shape == (B, NUM_CLASSES) and new.shape == (B, NUM_CLASSES)
    assert feat_out.shape == (B, FEAT_DIM)

    ref_x = jnp.tanh(jnp.dot(standin_pool(xyz, feat), enc_w,
                             precision=lax.Precision.HIGHEST))
    assert jnp.allclose(feat_out, ref_x, atol=1e-5, rtol=1e-5)

    ref_old = _ref_head(feat_out, old_p)
    ref_new = _ref_head(feat_out, new_p)
    assert jnp.allclose(old, ref_old, atol=2e-3, rtol=2e-3)
    assert jnp.allclose(new, ref_new, atol=2e-3, rtol=2e-3)

    # log-probs sanity: exp sums to 1 over the real classes
    assert jnp.allclose(jnp.sum(jnp.exp(old), axis=-1), 1.0, atol=1e-4)
    assert jnp.allclose(jnp.sum(jnp.exp(new), axis=-1), 1.0, atol=1e-4)

    print("KERNEL_OK")
</pallas_src>

<mosaic_0001>
module attributes {stable_mosaic.version = 11 : i64} {
  func.func @_heads_fused_kernel(%arg0: memref<8x1024xbf16, #tpu.memory_space<vmem>>, %arg1: memref<1024x1024xbf16, #tpu.memory_space<vmem>>, %arg2: memref<1x1024xf32, #tpu.memory_space<vmem>>, %arg3: memref<2x512x256xbf16, #tpu.memory_space<vmem>>, %arg4: memref<2x1x256xf32, #tpu.memory_space<vmem>>, %arg5: memref<2x256x128xbf16, #tpu.memory_space<vmem>>, %arg6: memref<2x1x128xf32, #tpu.memory_space<vmem>>, %arg7: memref<2x8x128xf32, #tpu.memory_space<vmem>>) attributes {dimension_semantics = [], scalar_prefetch = 0 : i64, scratch_operands = 0 : i64, tpu.core_type = #tpu.core_type<tc>} {
    %c0 = arith.constant 0 : index
    %c0_0 = arith.constant 0 : index
    %0 = vector.load %arg0[%c0, %c0_0] : memref<8x1024xbf16, #tpu.memory_space<vmem>>, vector<8x1024xbf16>
    %c0_1 = arith.constant 0 : index
    %c0_2 = arith.constant 0 : index
    %1 = vector.load %arg1[%c0_1, %c0_2] : memref<1024x1024xbf16, #tpu.memory_space<vmem>>, vector<1024x1024xbf16>
    %cst = arith.constant dense<0.000000e+00> : vector<8x1024xf32>
    %2 = tpu.matmul %0, %1, %cst {dimension_numbers = #tpu.dot_dimension_numbers<[1], [0], [0], [1], [0, 0, 1, 1], [], []>} : vector<8x1024xbf16>, vector<1024x1024xbf16>, vector<8x1024xf32> -> vector<8x1024xf32>
    %c0_3 = arith.constant 0 : index
    %c0_4 = arith.constant 0 : index
    %3 = vector.load %arg2[%c0_3, %c0_4] : memref<1x1024xf32, #tpu.memory_space<vmem>>, vector<1x1024xf32>
    %4 = vector.broadcast %3 : vector<1x1024xf32> to vector<8x1024xf32>
    %5 = arith.addf %2, %4 : vector<8x1024xf32>
    %cst_5 = arith.constant 0.000000e+00 : f32
    %6 = vector.broadcast %cst_5 : f32 to vector<8x1024xf32>
    %7 = arith.maximumf %5, %6 : vector<8x1024xf32>
    %8 = vector.extract_strided_slice %7 {offsets = [0, 0], sizes = [8, 512], strides = [1, 1]} : vector<8x1024xf32> to vector<8x512xf32>
    %9 = arith.truncf %8 : vector<8x512xf32> to vector<8x512xbf16>
    %c0_6 = arith.constant 0 : index
    %c0_7 = arith.constant 0 : index
    %c0_8 = arith.constant 0 : index
    %10 = vector.load %arg3[%c0_6, %c0_7, %c0_8] : memref<2x512x256xbf16, #tpu.memory_space<vmem>>, vector<1x512x256xbf16>
    %11 = vector.shape_cast %10 : vector<1x512x256xbf16> to vector<512x256xbf16>
    %cst_9 = arith.constant dense<0.000000e+00> : vector<8x256xf32>
    %12 = tpu.matmul %9, %11, %cst_9 {dimension_numbers = #tpu.dot_dimension_numbers<[1], [0], [0], [1], [0, 0, 1, 1], [], []>} : vector<8x512xbf16>, vector<512x256xbf16>, vector<8x256xf32> -> vector<8x256xf32>
    %c0_10 = arith.constant 0 : index
    %c0_11 = arith.constant 0 : index
    %c0_12 = arith.constant 0 : index
    %13 = vector.load %arg4[%c0_10, %c0_11, %c0_12] : memref<2x1x256xf32, #tpu.memory_space<vmem>>, vector<1x1x256xf32>
    %14 = vector.shape_cast %13 : vector<1x1x256xf32> to vector<1x256xf32>
    %15 = vector.broadcast %14 : vector<1x256xf32> to vector<8x256xf32>
    %16 = arith.addf %12, %15 : vector<8x256xf32>
    %cst_13 = arith.constant 0.000000e+00 : f32
    %17 = vector.broadcast %cst_13 : f32 to vector<8x256xf32>
    %18 = arith.maximumf %16, %17 : vector<8x256xf32>
    %19 = arith.truncf %18 : vector<8x256xf32> to vector<8x256xbf16>
    %c0_14 = arith.constant 0 : index
    %c0_15 = arith.constant 0 : index
    %c0_16 = arith.constant 0 : index
    %20 = vector.load %arg5[%c0_14, %c0_15, %c0_16] : memref<2x256x128xbf16, #tpu.memory_space<vmem>>, vector<1x256x128xbf16>
    %21 = vector.shape_cast %20 : vector<1x256x128xbf16> to vector<256x128xbf16>
    %cst_17 = arith.constant dense<0.000000e+00> : vector<8x128xf32>
    %22 = tpu.matmul %19, %21, %cst_17 {dimension_numbers = #tpu.dot_dimension_numbers<[1], [0], [0], [1], [0, 0, 1, 1], [], []>} : vector<8x256xbf16>, vector<256x128xbf16>, vector<8x128xf32> -> vector<8x128xf32>
    %c0_18 = arith.constant 0 : index
    %c0_19 = arith.constant 0 : index
    %c0_20 = arith.constant 0 : index
    %23 = vector.load %arg6[%c0_18, %c0_19, %c0_20] : memref<2x1x128xf32, #tpu.memory_space<vmem>>, vector<1x1x128xf32>
    %24 = vector.shape_cast %23 : vector<1x1x128xf32> to vector<1x128xf32>
    %25 = vector.broadcast %24 : vector<1x128xf32> to vector<8x128xf32>
    %26 = arith.addf %22, %25 : vector<8x128xf32>
    %cst_21 = arith.constant dense<0xFF800000> : vector<8xf32>
    %27 = vector.multi_reduction <maximumf>, %26, %cst_21 [1] : vector<8x128xf32> to vector<8xf32>
    %28 = vector.shape_cast %27 : vector<8xf32> to vector<8x1xf32>
    %29 = vector.broadcast %28 : vector<8x1xf32> to vector<8x128xf32>
    %30 = arith.subf %26, %29 : vector<8x128xf32>
    %31 = math.exp %30 : vector<8x128xf32>
    %cst_22 = arith.constant dense<0.000000e+00> : vector<8xf32>
    %32 = vector.multi_reduction <add>, %31, %cst_22 [1] : vector<8x128xf32> to vector<8xf32>
    %33 = vector.shape_cast %32 : vector<8xf32> to vector<8x1xf32>
    %34 = math.log %33 : vector<8x1xf32>
    %35 = vector.broadcast %34 : vector<8x1xf32> to vector<8x128xf32>
    %36 = arith.subf %30, %35 : vector<8x128xf32>
    %c0_23 = arith.constant 0 : index
    %c0_24 = arith.constant 0 : index
    %c0_25 = arith.constant 0 : index
    %37 = vector.load %arg7[%c0_23, %c0_24, %c0_25] : memref<2x8x128xf32, #tpu.memory_space<vmem>>, vector<1x8x128xf32>
    %38 = vector.shape_cast %37 : vector<1x8x128xf32> to vector<8x128xf32>
    %39 = vector.shape_cast %36 : vector<8x128xf32> to vector<1x8x128xf32>
    tpu.vector_store %arg7[%c0_23, %c0_24, %c0_25], %39 {strides = array<i32>} : memref<2x8x128xf32, #tpu.memory_space<vmem>>, vector<1x8x128xf32>,
    %40 = vector.extract_strided_slice %7 {offsets = [0, 512], sizes = [8, 512], strides = [1, 1]} : vector<8x1024xf32> to vector<8x512xf32>
    %41 = arith.truncf %40 : vector<8x512xf32> to vector<8x512xbf16>
    %c1 = arith.constant 1 : index
    %c0_26 = arith.constant 0 : index
    %c0_27 = arith.constant 0 : index
    %42 = vector.load %arg3[%c1, %c0_26, %c0_27] : memref<2x512x256xbf16, #tpu.memory_space<vmem>>, vector<1x512x256xbf16>
    %43 = vector.shape_cast %42 : vector<1x512x256xbf16> to vector<512x256xbf16>
    %cst_28 = arith.constant dense<0.000000e+00> : vector<8x256xf32>
    %44 = tpu.matmul %41, %43, %cst_28 {dimension_numbers = #tpu.dot_dimension_numbers<[1], [0], [0], [1], [0, 0, 1, 1], [], []>} : vector<8x512xbf16>, vector<512x256xbf16>, vector<8x256xf32> -> vector<8x256xf32>
    %c1_29 = arith.constant 1 : index
    %c0_30 = arith.constant 0 : index
    %c0_31 = arith.constant 0 : index
    %45 = vector.load %arg4[%c1_29, %c0_30, %c0_31] : memref<2x1x256xf32, #tpu.memory_space<vmem>>, vector<1x1x256xf32>
    %46 = vector.shape_cast %45 : vector<1x1x256xf32> to vector<1x256xf32>
    %47 = vector.broadcast %46 : vector<1x256xf32> to vector<8x256xf32>
    %48 = arith.addf %44, %47 : vector<8x256xf32>
    %cst_32 = arith.constant 0.000000e+00 : f32
    %49 = vector.broadcast %cst_32 : f32 to vector<8x256xf32>
    %50 = arith.maximumf %48, %49 : vector<8x256xf32>
    %51 = arith.truncf %50 : vector<8x256xf32> to vector<8x256xbf16>
    %c1_33 = arith.constant 1 : index
    %c0_34 = arith.constant 0 : index
    %c0_35 = arith.constant 0 : index
    %52 = vector.load %arg5[%c1_33, %c0_34, %c0_35] : memref<2x256x128xbf16, #tpu.memory_space<vmem>>, vector<1x256x128xbf16>
    %53 = vector.shape_cast %52 : vector<1x256x128xbf16> to vector<256x128xbf16>
    %cst_36 = arith.constant dense<0.000000e+00> : vector<8x128xf32>
    %54 = tpu.matmul %51, %53, %cst_36 {dimension_numbers = #tpu.dot_dimension_numbers<[1], [0], [0], [1], [0, 0, 1, 1], [], []>} : vector<8x256xbf16>, vector<256x128xbf16>, vector<8x128xf32> -> vector<8x128xf32>
    %c1_37 = arith.constant 1 : index
    %c0_38 = arith.constant 0 : index
    %c0_39 = arith.constant 0 : index
    %55 = vector.load %arg6[%c1_37, %c0_38, %c0_39] : memref<2x1x128xf32, #tpu.memory_space<vmem>>, vector<1x1x128xf32>
    %56 = vector.shape_cast %55 : vector<1x1x128xf32> to vector<1x128xf32>
    %57 = vector.broadcast %56 : vector<1x128xf32> to vector<8x128xf32>
    %58 = arith.addf %54, %57 : vector<8x128xf32>
    %cst_40 = arith.constant dense<0xFF800000> : vector<8xf32>
    %59 = vector.multi_reduction <maximumf>, %58, %cst_40 [1] : vector<8x128xf32> to vector<8xf32>
    %60 = vector.shape_cast %59 : vector<8xf32> to vector<8x1xf32>
    %61 = vector.broadcast %60 : vector<8x1xf32> to vector<8x128xf32>
    %62 = arith.subf %58, %61 : vector<8x128xf32>
    %63 = math.exp %62 : vector<8x128xf32>
    %cst_41 = arith.constant dense<0.000000e+00> : vector<8xf32>
    %64 = vector.multi_reduction <add>, %63, %cst_41 [1] : vector<8x128xf32> to vector<8xf32>
    %65 = vector.shape_cast %64 : vector<8xf32> to vector<8x1xf32>
    %66 = math.log %65 : vector<8x1xf32>
    %67 = vector.broadcast %66 : vector<8x1xf32> to vector<8x128xf32>
    %68 = arith.subf %62, %67 : vector<8x128xf32>
    %c1_42 = arith.constant 1 : index
    %c0_43 = arith.constant 0 : index
    %c0_44 = arith.constant 0 : index
    %69 = vector.load %arg7[%c1_42, %c0_43, %c0_44] : memref<2x8x128xf32, #tpu.memory_space<vmem>>, vector<1x8x128xf32>
    %70 = vector.shape_cast %69 : vector<1x8x128xf32> to vector<8x128xf32>
    %71 = vector.shape_cast %68 : vector<8x128xf32> to vector<1x8x128xf32>
    tpu.vector_store %arg7[%c1_42, %c0_43, %c0_44], %71 {strides = array<i32>} : memref<2x8x128xf32, #tpu.memory_space<vmem>>, vector<1x8x128xf32>,
    return
  }
}

</mosaic_0001>

<llo_original>
// kernel: tpu_custom_call.1
$region0: #{tpu_custom_call.1}
  #allocation0 [shape = 'u32[]', space=smem, size = 0x4, offset = 0x4, fixed_abs, tag = 'smem constant byte address 0x4 - core index']
  #allocation1 [shape = 'u32[144,128]{1,0:T(1,128)}', space=vmem, size = 0x12000, scoped, tag = 'internal scratch']
  %s0 = inlined_call_operand.hbm [shape: bf16[8,1024], index: 0, kind: input, shape index: {}]
  %s1 = inlined_call_operand.hbm [shape: bf16[1024,1024], index: 1, kind: input, shape index: {}]
  %s2 = inlined_call_operand.hbm [shape: f32[1,1024], index: 2, kind: input, shape index: {}]
  %s3 = inlined_call_operand.hbm [shape: bf16[2,512,256], index: 3, kind: input, shape index: {}]
  %s4 = inlined_call_operand.hbm [shape: f32[2,1,256], index: 4, kind: input, shape index: {}]
  %s5 = inlined_call_operand.hbm [shape: bf16[2,256,128], index: 5, kind: input, shape index: {}]
  %s6 = inlined_call_operand.hbm [shape: f32[2,1,128], index: 6, kind: input, shape index: {}]
  %s7 = inlined_call_operand.hbm [shape: f32[2,8,128], index: 7, kind: output, shape index: {}]
  %s8 = sld [smem:[#allocation0]]
  $region66: #{tpu_custom_call.1} parent=0
    _
  %s10 = ssub.s32 1, %s8
  %s11 = scalar_select 0, %s10, %s8
  $region1: #{tpu_custom_call.1} parent=0
    #allocation2 [shape = 'u8[16384]{0}', space=vmem, size = 0x4000, scoped, tag = 'input window, operand 0, single buffered']
    #allocation3 [shape = 's32[1]{0}', space=sflag, size = 0x4, scoped, tag = 'scoped memory for tpu_custom_call.1']
    #allocation4 [shape = 's32[1]{0}', space=sflag, size = 0x4, scoped, tag = 'scoped memory for tpu_custom_call.1']
    #allocation5 [shape = 'u8[2097152]{0}', space=vmem, size = 0x200000, scoped, tag = 'input window, operand 1, single buffered']
    #allocation6 [shape = 's32[1]{0}', space=sflag, size = 0x4, scoped, tag = 'scoped memory for tpu_custom_call.1']
    #allocation7 [shape = 'u8[4096]{0}', space=vmem, size = 0x1000, scoped, tag = 'input window, operand 2, single buffered']
    #allocation8 [shape = 'u8[524288]{0}', space=vmem, size = 0x80000, scoped, tag = 'input window, operand 3, single buffered']
    #allocation9 [shape = 's32[1]{0}', space=sflag, size = 0x4, scoped, tag = 'scoped memory for tpu_custom_call.1']
    #allocation10 [shape = 'u8[2048]{0}', space=vmem, size = 0x800, scoped, tag = 'input window, operand 4, single buffered']
    #allocation11 [shape = 'u8[131072]{0}', space=vmem, size = 0x20000, scoped, tag = 'input window, operand 5, single buffered']
    #allocation12 [shape = 's32[1]{0}', space=sflag, size = 0x4, scoped, tag = 'scoped memory for tpu_custom_call.1']
    #allocation13 [shape = 'u8[1024]{0}', space=vmem, size = 0x400, scoped, tag = 'input window, operand 6, single buffered']
    #allocation14 [shape = 'u8[8192]{0}', space=vmem, size = 0x2000, scoped, tag = 'output window, operand 0, single buffered']
    %12 = vsyncpa [#allocation3], 0
    %13 = vsyncpa [#allocation6], 0
    %14 = vsyncpa [#allocation9], 0
    %15 = vsyncpa [#allocation12], 0
    %16 = vsyncpa [#allocation4], 0
    // Predicated region
    $region2: #{tpu_custom_call.1} parent=1 // pred_check
      _
    $region3: #{tpu_custom_call.1} parent=1 // pred_check_branch
      %18 = sbr.rel (0) target = $region5
    $region4: #{tpu_custom_call.1} parent=1 // pred_region
      %s20 = ssub.s32 512, 512
      %21 = vsyncadd [#allocation3], %s20
      %s23 = sshll.u32 [#allocation2], 4
      %s24 = int_to_ptr.vmem [resolvable:$true] %s23
      %26 = dma.hbm_to_vmem [thread:$0]  %s0, 512, %s24, [#allocation3]
    $region5: #{tpu_custom_call.1} parent=1 // pred_fallthru
      _
    // Predicated region
    $region6: #{tpu_custom_call.1} parent=1 // pred_check
      _
    $region7: #{tpu_custom_call.1} parent=1 // pred_check_branch
      %28 = sbr.rel (0) target = $region9
    $region8: #{tpu_custom_call.1} parent=1 // pred_region
      %s30 = ssub.s32 65536, 65536
      %31 = vsyncadd [#allocation6], %s30
      %s32 = sshll.u32 [#allocation5], 4
      %s33 = int_to_ptr.vmem [resolvable:$true] %s32
      %38 = dma.hbm_to_vmem [thread:$0]  %s1, 65536, %s33, [#allocation6], 512, 512, 32
    $region9: #{tpu_custom_call.1} parent=1 // pred_fallthru
      _
    // Predicated region
    $region10: #{tpu_custom_call.1} parent=1 // pred_check
      _
    $region11: #{tpu_custom_call.1} parent=1 // pred_check_branch
      %40 = sbr.rel (0) target = $region13
    $region12: #{tpu_custom_call.1} parent=1 // pred_region
      %s42 = ssub.s32 128, 128
      %43 = vsyncadd [#allocation6], %s42
      %s45 = sshll.u32 [#allocation7], 4
      %s46 = int_to_ptr.vmem [resolvable:$true] %s45
      %48 = dma.hbm_to_vmem [thread:$0]  %s2, 128, %s46, [#allocation6]
    $region13: #{tpu_custom_call.1} parent=1 // pred_fallthru
      _
    // Predicated region
    $region14: #{tpu_custom_call.1} parent=1 // pred_check
      _
    $region15: #{tpu_custom_call.1} parent=1 // pred_check_branch
      %50 = sbr.rel (0) target = $region17
    $region16: #{tpu_custom_call.1} parent=1 // pred_region
      %s52 = ssub.s32 16384, 16384
      %53 = vsyncadd [#allocation9], %s52
      %s54 = sshll.u32 [#allocation8], 4
      %s55 = int_to_ptr.vmem [resolvable:$true] %s54
      %60 = dma.hbm_to_vmem [thread:$0]  %s3, 16384, %s55, [#allocation9], 128, 128, 8
    $region17: #{tpu_custom_call.1} parent=1 // pred_fallthru
      _
    // Predicated region
    $region18: #{tpu_custom_call.1} parent=1 // pred_check
      _
    $region19: #{tpu_custom_call.1} parent=1 // pred_check_branch
      %62 = sbr.rel (0) target = $region21
    $region20: #{tpu_custom_call.1} parent=1 // pred_region
      %s64 = ssub.s32 64, 64
      %65 = vsyncadd [#allocation9], %s64
      %s66 = sshll.u32 [#allocation10], 4
      %s67 = int_to_ptr.vmem [resolvable:$true] %s66
      %72 = dma.hbm_to_vmem [thread:$0]  %s4, 64, %s67, [#allocation9], 32, 32, 2
    $region21: #{tpu_custom_call.1} parent=1 // pred_fallthru
      _
    // Predicated region
    $region22: #{tpu_custom_call.1} parent=1 // pred_check
      _
    $region23: #{tpu_custom_call.1} parent=1 // pred_check_branch
      %74 = sbr.rel (0) target = $region25
    $region24: #{tpu_custom_call.1} parent=1 // pred_region
      %s76 = ssub.s32 4096, 4096
      %77 = vsyncadd [#allocation12], %s76
      %s78 = sshll.u32 [#allocation11], 4
      %s79 = int_to_ptr.vmem [resolvable:$true] %s78
      %84 = dma.hbm_to_vmem [thread:$0]  %s5, 4096, %s79, [#allocation12], 64, 64, 4
    $region25: #{tpu_custom_call.1} parent=1 // pred_fallthru
      _
    // Predicated region
    $region26: #{tpu_custom_call.1} parent=1 // pred_check
      _
    $region27: #{tpu_custom_call.1} parent=1 // pred_check_branch
      %86 = sbr.rel (0) target = $region29
    $region28: #{tpu_custom_call.1} parent=1 // pred_region
      %s88 = ssub.s32 32, 32
      %89 = vsyncadd [#allocation12], %s88
      %s90 = sshll.u32 [#allocation13], 4
      %s91 = int_to_ptr.vmem [resolvable:$true] %s90
      %96 = dma.hbm_to_vmem [thread:$0]  %s6, 32, %s91, [#allocation12], 16, 16, 1
    $region29: #{tpu_custom_call.1} parent=1 // pred_fallthru
      _
    // Predicated region
    $region30: #{tpu_custom_call.1} parent=1 // pred_check
      _
    $region31: #{tpu_custom_call.1} parent=1 // pred_check_branch
      %98 = sbr.rel (0) target = $region33
    $region32: #{tpu_custom_call.1} parent=1 // pred_region
      %99 = dma.done [#allocation3], 512
    $region33: #{tpu_custom_call.1} parent=1 // pred_fallthru
      _
    // Predicated region
    $region34: #{tpu_custom_call.1} parent=1 // pred_check
      _
    $region35: #{tpu_custom_call.1} parent=1 // pred_check_branch
      %101 = sbr.rel (0) target = $region37
    $region36: #{tpu_custom_call.1} parent=1 // pred_region
      %102 = dma.done [#allocation6], 65536
    $region37: #{tpu_custom_call.1} parent=1 // pred_fallthru
      _
    // Predicated region
    $region38: #{tpu_custom_call.1} parent=1 // pred_check
      _
    $region39: #{tpu_custom_call.1} parent=1 // pred_check_branch
      %104 = sbr.rel (0) target = $region41
    $region40: #{tpu_custom_call.1} parent=1 // pred_region
      %105 = dma.done [#allocation6], 128
    $region41: #{tpu_custom_call.1} parent=1 // pred_fallthru
      _
    // Predicated region
    $region42: #{tpu_custom_call.1} parent=1 // pred_check
      _
    $region43: #{tpu_custom_call.1} parent=1 // pred_check_branch
      %107 = sbr.rel (0) target = $region45
    $region44: #{tpu_custom_call.1} parent=1 // pred_region
      %108 = dma.done [#allocation9], 16384
    $region45: #{tpu_custom_call.1} parent=1 // pred_fallthru
      _
    // Predicated region
    $region46: #{tpu_custom_call.1} parent=1 // pred_check
      _
    $region47: #{tpu_custom_call.1} parent=1 // pred_check_branch
      %110 = sbr.rel (0) target = $region49
    $region48: #{tpu_custom_call.1} parent=1 // pred_region
      %111 = dma.done [#allocation9], 64
    $region49: #{tpu_custom_call.1} parent=1 // pred_fallthru
      _
    // Predicated region
    $region50: #{tpu_custom_call.1} parent=1 // pred_check
      _
    $region51: #{tpu_custom_call.1} parent=1 // pred_check_branch
      %113 = sbr.rel (0) target = $region53
    $region52: #{tpu_custom_call.1} parent=1 // pred_region
      %114 = dma.done [#allocation12], 4096
    $region53: #{tpu_custom_call.1} parent=1 // pred_fallthru
      _
    // Predicated region
    $region54: #{tpu_custom_call.1} parent=1 // pred_check
      _
    $region55: #{tpu_custom_call.1} parent=1 // pred_check_branch
      %116 = sbr.rel (0) target = $region57
    $region56: #{tpu_custom_call.1} parent=1 // pred_region
      %117 = dma.done [#allocation12], 32
    $region57: #{tpu_custom_call.1} parent=1 // pred_fallthru
      _
    %v119 = vld [vmem:[#allocation2] sm:$0xff]
    %v120 = vld [vmem:[#allocation2 + $0x8] sm:$0xff]
    %v121 = vld [vmem:[#allocation2 + $0x10] sm:$0xff]
    %v122 = vld [vmem:[#allocation2 + $0x18] sm:$0xff]
    %v123 = vld [vmem:[#allocation5] sm:$0xff]
    %v124 = vld [vmem:[#allocation5 + $0x8] sm:$0xff]
    %v125 = vld [vmem:[#allocation5 + $0x10] sm:$0xff]
    %v126 = vld [vmem:[#allocation5 + $0x18] sm:$0xff]
    %v127 = vld [vmem:[#allocation5 + $0x20] sm:$0xff]
    %v128 = vld [vmem:[#allocation5 + $0x28] sm:$0xff]
    %v129 = vld [vmem:[#allocation5 + $0x30] sm:$0xff]
    %v130 = vld [vmem:[#allocation5 + $0x38] sm:$0xff]
    %v131 = vld [vmem:[#allocation5 + $0x40] sm:$0xff]
    %v132 = vld [vmem:[#allocation5 + $0x48] sm:$0xff]
    %v133 = vld [vmem:[#allocation5 + $0x50] sm:$0xff]
    %v134 = vld [vmem:[#allocation5 + $0x58] sm:$0xff]
    %v135 = vld [vmem:[#allocation5 + $0x60] sm:$0xff]
    %v136 = vld [vmem:[#allocation5 + $0x68] sm:$0xff]
    %v137 = vld [vmem:[#allocation5 + $0x70] sm:$0xff]
    %v138 = vld [vmem:[#allocation5 + $0x78] sm:$0xff]
    %v139 = vld [vmem:[#allocation5 + $0x80] sm:$0xff]
    %v140 = vld [vmem:[#allocation5 + $0x88] sm:$0xff]
    %v141 = vld [vmem:[#allocation5 + $0x90] sm:$0xff]
    %v142 = vld [vmem:[#allocation5 + $0x98] sm:$0xff]
    %v143 = vld [vmem:[#allocation5 + $0xa0] sm:$0xff]
    %v144 = vld [vmem:[#allocation5 + $0xa8] sm:$0xff]
    %v145 = vld [vmem:[#allocation5 + $0xb0] sm:$0xff]
    %v146 = vld [vmem:[#allocation5 + $0xb8] sm:$0xff]
    %v147 = vld [vmem:[#allocation5 + $0xc0] sm:$0xff]
    %v148 = vld [vmem:[#allocation5 + $0xc8] sm:$0xff]
    %v149 = vld [vmem:[#allocation5 + $0xd0] sm:$0xff]
    %v150 = vld [vmem:[#allocation5 + $0xd8] sm:$0xff]
    %v151 = vld [vmem:[#allocation5 + $0xe0] sm:$0xff]
    %v152 = vld [vmem:[#allocation5 + $0xe8] sm:$0xff]
    %v153 = vld [vmem:[#allocation5 + $0xf0] sm:$0xff]
    %v154 = vld [vmem:[#allocation5 + $0xf8] sm:$0xff]
    %v155 = vld [vmem:[#allocation5 + $0x100] sm:$0xff]
    %v156 = vld [vmem:[#allocation5 + $0x108] sm:$0xff]
    %v157 = vld [vmem:[#allocation5 + $0x110] sm:$0xff]
    %v158 = vld [vmem:[#allocation5 + $0x118] sm:$0xff]
    %v159 = vld [vmem:[#allocation5 + $0x120] sm:$0xff]
    %v160 = vld [vmem:[#allocation5 + $0x128] sm:$0xff]
    %v161 = vld [vmem:[#allocation5 + $0x130] sm:$0xff]
    %v162 = vld [vmem:[#allocation5 + $0x138] sm:$0xff]
    %v163 = vld [vmem:[#allocation5 + $0x140] sm:$0xff]
    %v164 = vld [vmem:[#allocation5 + $0x148] sm:$0xff]
    %v165 = vld [vmem:[#allocation5 + $0x150] sm:$0xff]
    %v166 = vld [vmem:[#allocation5 + $0x158] sm:$0xff]
    %v167 = vld [vmem:[#allocation5 + $0x160] sm:$0xff]
    %v168 = vld [vmem:[#allocation5 + $0x168] sm:$0xff]
    %v169 = vld [vmem:[#allocation5 + $0x170] sm:$0xff]
    %v170 = vld [vmem:[#allocation5 + $0x178] sm:$0xff]
    %v171 = vld [vmem:[#allocation5 + $0x180] sm:$0xff]
    %v172 = vld [vmem:[#allocation5 + $0x188] sm:$0xff]
    %v173 = vld [vmem:[#allocation5 + $0x190] sm:$0xff]
    %v174 = vld [vmem:[#allocation5 + $0x198] sm:$0xff]
    %v175 = vld [vmem:[#allocation5 + $0x1a0] sm:$0xff]
    %v176 = vld [vmem:[#allocation5 + $0x1a8] sm:$0xff]
    %v177 = vld [vmem:[#allocation5 + $0x1b0] sm:$0xff]
    %v178 = vld [vmem:[#allocation5 + $0x1b8] sm:$0xff]
    %v179 = vld [vmem:[#allocation5 + $0x1c0] sm:$0xff]
    %v180 = vld [vmem:[#allocation5 + $0x1c8] sm:$0xff]
    %v181 = vld [vmem:[#allocation5 + $0x1d0] sm:$0xff]
    %v182 = vld [vmem:[#allocation5 + $0x1d8] sm:$0xff]
    %v183 = vld [vmem:[#allocation5 + $0x1e0] sm:$0xff]
    %v184 = vld [vmem:[#allocation5 + $0x1e8] sm:$0xff]
    %v185 = vld [vmem:[#allocation5 + $0x1f0] sm:$0xff]
    %v186 = vld [vmem:[#allocation5 + $0x1f8] sm:$0xff]
    %v187 = vld [vmem:[#allocation5 + $0x200] sm:$0xff]
    %v188 = vld [vmem:[#allocation5 + $0x208] sm:$0xff]
    %v189 = vld [vmem:[#allocation5 + $0x210] sm:$0xff]
    %v190 = vld [vmem:[#allocation5 + $0x218] sm:$0xff]
    %v191 = vld [vmem:[#allocation5 + $0x220] sm:$0xff]
    %v192 = vld [vmem:[#allocation5 + $0x228] sm:$0xff]
    %v193 = vld [vmem:[#allocation5 + $0x230] sm:$0xff]
    %v194 = vld [vmem:[#allocation5 + $0x238] sm:$0xff]
    %v195 = vld [vmem:[#allocation5 + $0x240] sm:$0xff]
    %v196 = vld [vmem:[#allocation5 + $0x248] sm:$0xff]
    %v197 = vld [vmem:[#allocation5 + $0x250] sm:$0xff]
    %v198 = vld [vmem:[#allocation5 + $0x258] sm:$0xff]
    %v199 = vld [vmem:[#allocation5 + $0x260] sm:$0xff]
    %v200 = vld [vmem:[#allocation5 + $0x268] sm:$0xff]
    %v201 = vld [vmem:[#allocation5 + $0x270] sm:$0xff]
    %v202 = vld [vmem:[#allocation5 + $0x278] sm:$0xff]
    %v203 = vld [vmem:[#allocation5 + $0x280] sm:$0xff]
    %v204 = vld [vmem:[#allocation5 + $0x288] sm:$0xff]
    %v205 = vld [vmem:[#allocation5 + $0x290] sm:$0xff]
    %v206 = vld [vmem:[#allocation5 + $0x298] sm:$0xff]
    %v207 = vld [vmem:[#allocation5 + $0x2a0] sm:$0xff]
    %v208 = vld [vmem:[#allocation5 + $0x2a8] sm:$0xff]
    %v209 = vld [vmem:[#allocation5 + $0x2b0] sm:$0xff]
    %v210 = vld [vmem:[#allocation5 + $0x2b8] sm:$0xff]
    %v211 = vld [vmem:[#allocation5 + $0x2c0] sm:$0xff]
    %v212 = vld [vmem:[#allocation5 + $0x2c8] sm:$0xff]
    %v213 = vld [vmem:[#allocation5 + $0x2d0] sm:$0xff]
    %v214 = vld [vmem:[#allocation5 + $0x2d8] sm:$0xff]
    %v215 = vld [vmem:[#allocation5 + $0x2e0] sm:$0xff]
    %v216 = vld [vmem:[#allocation5 + $0x2e8] sm:$0xff]
    %v217 = vld [vmem:[#allocation5 + $0x2f0] sm:$0xff]
    %v218 = vld [vmem:[#allocation5 + $0x2f8] sm:$0xff]
    %v219 = vld [vmem:[#allocation5 + $0x300] sm:$0xff]
    %v220 = vld [vmem:[#allocation5 + $0x308] sm:$0xff]
    %v221 = vld [vmem:[#allocation5 + $0x310] sm:$0xff]
    %v222 = vld [vmem:[#allocation5 + $0x318] sm:$0xff]
    %v223 = vld [vmem:[#allocation5 + $0x320] sm:$0xff]
    %v224 = vld [vmem:[#allocation5 + $0x328] sm:$0xff]
    %v225 = vld [vmem:[#allocation5 + $0x330] sm:$0xff]
    %v226 = vld [vmem:[#allocation5 + $0x338] sm:$0xff]
    %v227 = vld [vmem:[#allocation5 + $0x340] sm:$0xff]
    %v228 = vld [vmem:[#allocation5 + $0x348] sm:$0xff]
    %v229 = vld [vmem:[#allocation5 + $0x350] sm:$0xff]
    %v230 = vld [vmem:[#allocation5 + $0x358] sm:$0xff]
    %v231 = vld [vmem:[#allocation5 + $0x360] sm:$0xff]
    %v232 = vld [vmem:[#allocation5 + $0x368] sm:$0xff]
    %v233 = vld [vmem:[#allocation5 + $0x370] sm:$0xff]
    %v234 = vld [vmem:[#allocation5 + $0x378] sm:$0xff]
    %v235 = vld [vmem:[#allocation5 + $0x380] sm:$0xff]
    %v236 = vld [vmem:[#allocation5 + $0x388] sm:$0xff]
    %v237 = vld [vmem:[#allocation5 + $0x390] sm:$0xff]
    %v238 = vld [vmem:[#allocation5 + $0x398] sm:$0xff]
    %v239 = vld [vmem:[#allocation5 + $0x3a0] sm:$0xff]
    %v240 = vld [vmem:[#allocation5 + $0x3a8] sm:$0xff]
    %v241 = vld [vmem:[#allocation5 + $0x3b0] sm:$0xff]
    %v242 = vld [vmem:[#allocation5 + $0x3b8] sm:$0xff]
    %v243 = vld [vmem:[#allocation5 + $0x3c0] sm:$0xff]
    %v244 = vld [vmem:[#allocation5 + $0x3c8] sm:$0xff]
    %v245 = vld [vmem:[#allocation5 + $0x3d0] sm:$0xff]
    %v246 = vld [vmem:[#allocation5 + $0x3d8] sm:$0xff]
    %v247 = vld [vmem:[#allocation5 + $0x3e0] sm:$0xff]
    %v248 = vld [vmem:[#allocation5 + $0x3e8] sm:$0xff]
    %v249 = vld [vmem:[#allocation5 + $0x3f0] sm:$0xff]
    %v250 = vld [vmem:[#allocation5 + $0x3f8] sm:$0xff]
    %v251 = vld [vmem:[#allocation5 + $0x400] sm:$0xff]
    %v252 = vld [vmem:[#allocation5 + $0x408] sm:$0xff]
    %v253 = vld [vmem:[#allocation5 + $0x410] sm:$0xff]
    %v254 = vld [vmem:[#allocation5 + $0x418] sm:$0xff]
    %v255 = vld [vmem:[#allocation5 + $0x420] sm:$0xff]
    %v256 = vld [vmem:[#allocation5 + $0x428] sm:$0xff]
    %v257 = vld [vmem:[#allocation5 + $0x430] sm:$0xff]
    %v258 = vld [vmem:[#allocation5 + $0x438] sm:$0xff]
    %v259 = vld [vmem:[#allocation5 + $0x440] sm:$0xff]
    %v260 = vld [vmem:[#allocation5 + $0x448] sm:$0xff]
    %v261 = vld [vmem:[#allocation5 + $0x450] sm:$0xff]
    %v262 = vld [vmem:[#allocation5 + $0x458] sm:$0xff]
    %v263 = vld [vmem:[#allocation5 + $0x460] sm:$0xff]
    %v264 = vld [vmem:[#allocation5 + $0x468] sm:$0xff]
    %v265 = vld [vmem:[#allocation5 + $0x470] sm:$0xff]
    %v266 = vld [vmem:[#allocation5 + $0x478] sm:$0xff]
    %v267 = vld [vmem:[#allocation5 + $0x480] sm:$0xff]
    %v268 = vld [vmem:[#allocation5 + $0x488] sm:$0xff]
    %v269 = vld [vmem:[#allocation5 + $0x490] sm:$0xff]
    %v270 = vld [vmem:[#allocation5 + $0x498] sm:$0xff]
    %v271 = vld [vmem:[#allocation5 + $0x4a0] sm:$0xff]
    %v272 = vld [vmem:[#allocation5 + $0x4a8] sm:$0xff]
    %v273 = vld [vmem:[#allocation5 + $0x4b0] sm:$0xff]
    %v274 = vld [vmem:[#allocation5 + $0x4b8] sm:$0xff]
    %v275 = vld [vmem:[#allocation5 + $0x4c0] sm:$0xff]
    %v276 = vld [vmem:[#allocation5 + $0x4c8] sm:$0xff]
    %v277 = vld [vmem:[#allocation5 + $0x4d0] sm:$0xff]
    %v278 = vld [vmem:[#allocation5 + $0x4d8] sm:$0xff]
    %v279 = vld [vmem:[#allocation5 + $0x4e0] sm:$0xff]
    %v280 = vld [vmem:[#allocation5 + $0x4e8] sm:$0xff]
    %v281 = vld [vmem:[#allocation5 + $0x4f0] sm:$0xff]
    %v282 = vld [vmem:[#allocation5 + $0x4f8] sm:$0xff]
    %v283 = vld [vmem:[#allocation5 + $0x500] sm:$0xff]
    %v284 = vld [vmem:[#allocation5 + $0x508] sm:$0xff]
    %v285 = vld [vmem:[#allocation5 + $0x510] sm:$0xff]
    %v286 = vld [vmem:[#allocation5 + $0x518] sm:$0xff]
    %v287 = vld [vmem:[#allocation5 + $0x520] sm:$0xff]
    %v288 = vld [vmem:[#allocation5 + $0x528] sm:$0xff]
    %v289 = vld [vmem:[#allocation5 + $0x530] sm:$0xff]
    %v290 = vld [vmem:[#allocation5 + $0x538] sm:$0xff]
    %v291 = vld [vmem:[#allocation5 + $0x540] sm:$0xff]
    %v292 = vld [vmem:[#allocation5 + $0x548] sm:$0xff]
    %v293 = vld [vmem:[#allocation5 + $0x550] sm:$0xff]
    %v294 = vld [vmem:[#allocation5 + $0x558] sm:$0xff]
    %v295 = vld [vmem:[#allocation5 + $0x560] sm:$0xff]
    %v296 = vld [vmem:[#allocation5 + $0x568] sm:$0xff]
    %v297 = vld [vmem:[#allocation5 + $0x570] sm:$0xff]
    %v298 = vld [vmem:[#allocation5 + $0x578] sm:$0xff]
    %v299 = vld [vmem:[#allocation5 + $0x580] sm:$0xff]
    %v300 = vld [vmem:[#allocation5 + $0x588] sm:$0xff]
    %v301 = vld [vmem:[#allocation5 + $0x590] sm:$0xff]
    %v302 = vld [vmem:[#allocation5 + $0x598] sm:$0xff]
    %v303 = vld [vmem:[#allocation5 + $0x5a0] sm:$0xff]
    %v304 = vld [vmem:[#allocation5 + $0x5a8] sm:$0xff]
    %v305 = vld [vmem:[#allocation5 + $0x5b0] sm:$0xff]
    %v306 = vld [vmem:[#allocation5 + $0x5b8] sm:$0xff]
    %v307 = vld [vmem:[#allocation5 + $0x5c0] sm:$0xff]
    %v308 = vld [vmem:[#allocation5 + $0x5c8] sm:$0xff]
    %v309 = vld [vmem:[#allocation5 + $0x5d0] sm:$0xff]
    %v310 = vld [vmem:[#allocation5 + $0x5d8] sm:$0xff]
    %v311 = vld [vmem:[#allocation5 + $0x5e0] sm:$0xff]
    %v312 = vld [vmem:[#allocation5 + $0x5e8] sm:$0xff]
    %v313 = vld [vmem:[#allocation5 + $0x5f0] sm:$0xff]
    %v314 = vld [vmem:[#allocation5 + $0x5f8] sm:$0xff]
    %v315 = vld [vmem:[#allocation5 + $0x600] sm:$0xff]
    %v316 = vld [vmem:[#allocation5 + $0x608] sm:$0xff]
    %v317 = vld [vmem:[#allocation5 + $0x610] sm:$0xff]
    %v318 = vld [vmem:[#allocation5 + $0x618] sm:$0xff]
    %v319 = vld [vmem:[#allocation5 + $0x620] sm:$0xff]
    %v320 = vld [vmem:[#allocation5 + $0x628] sm:$0xff]
    %v321 = vld [vmem:[#allocation5 + $0x630] sm:$0xff]
    %v322 = vld [vmem:[#allocation5 + $0x638] sm:$0xff]
    %v323 = vld [vmem:[#allocation5 + $0x640] sm:$0xff]
    %v324 = vld [vmem:[#allocation5 + $0x648] sm:$0xff]
    %v325 = vld [vmem:[#allocation5 + $0x650] sm:$0xff]
    %v326 = vld [vmem:[#allocation5 + $0x658] sm:$0xff]
    %v327 = vld [vmem:[#allocation5 + $0x660] sm:$0xff]
    %v328 = vld [vmem:[#allocation5 + $0x668] sm:$0xff]
    %v329 = vld [vmem:[#allocation5 + $0x670] sm:$0xff]
    %v330 = vld [vmem:[#allocation5 + $0x678] sm:$0xff]
    %v331 = vld [vmem:[#allocation5 + $0x680] sm:$0xff]
    %v332 = vld [vmem:[#allocation5 + $0x688] sm:$0xff]
    %v333 = vld [vmem:[#allocation5 + $0x690] sm:$0xff]
    %v334 = vld [vmem:[#allocation5 + $0x698] sm:$0xff]
    %v335 = vld [vmem:[#allocation5 + $0x6a0] sm:$0xff]
    %v336 = vld [vmem:[#allocation5 + $0x6a8] sm:$0xff]
    %v337 = vld [vmem:[#allocation5 + $0x6b0] sm:$0xff]
    %v338 = vld [vmem:[#allocation5 + $0x6b8] sm:$0xff]
    %v339 = vld [vmem:[#allocation5 + $0x6c0] sm:$0xff]
    %v340 = vld [vmem:[#allocation5 + $0x6c8] sm:$0xff]
    %v341 = vld [vmem:[#allocation5 + $0x6d0] sm:$0xff]
    %v342 = vld [vmem:[#allocation5 + $0x6d8] sm:$0xff]
    %v343 = vld [vmem:[#allocation5 + $0x6e0] sm:$0xff]
    %v344 = vld [vmem:[#allocation5 + $0x6e8] sm:$0xff]
    %v345 = vld [vmem:[#allocation5 + $0x6f0] sm:$0xff]
    %v346 = vld [vmem:[#allocation5 + $0x6f8] sm:$0xff]
    %v347 = vld [vmem:[#allocation5 + $0x700] sm:$0xff]
    %v348 = vld [vmem:[#allocation5 + $0x708] sm:$0xff]
    %v349 = vld [vmem:[#allocation5 + $0x710] sm:$0xff]
    %v350 = vld [vmem:[#allocation5 + $0x718] sm:$0xff]
    %v351 = vld [vmem:[#allocation5 + $0x720] sm:$0xff]
    %v352 = vld [vmem:[#allocation5 + $0x728] sm:$0xff]
    %v353 = vld [vmem:[#allocation5 + $0x730] sm:$0xff]
    %v354 = vld [vmem:[#allocation5 + $0x738] sm:$0xff]
    %v355 = vld [vmem:[#allocation5 + $0x740] sm:$0xff]
    %v356 = vld [vmem:[#allocation5 + $0x748] sm:$0xff]
    %v357 = vld [vmem:[#allocation5 + $0x750] sm:$0xff]
    %v358 = vld [vmem:[#allocation5 + $0x758] sm:$0xff]
    %v359 = vld [vmem:[#allocation5 + $0x760] sm:$0xff]
    %v360 = vld [vmem:[#allocation5 + $0x768] sm:$0xff]
    %v361 = vld [vmem:[#allocation5 + $0x770] sm:$0xff]
    %v362 = vld [vmem:[#allocation5 + $0x778] sm:$0xff]
    %v363 = vld [vmem:[#allocation5 + $0x780] sm:$0xff]
    %v364 = vld [vmem:[#allocation5 + $0x788] sm:$0xff]
    %v365 = vld [vmem:[#allocation5 + $0x790] sm:$0xff]
    %v366 = vld [vmem:[#allocation5 + $0x798] sm:$0xff]
    %v367 = vld [vmem:[#allocation5 + $0x7a0] sm:$0xff]
    %v368 = vld [vmem:[#allocation5 + $0x7a8] sm:$0xff]
    %v369 = vld [vmem:[#allocation5 + $0x7b0] sm:$0xff]
    %v370 = vld [vmem:[#allocation5 + $0x7b8] sm:$0xff]
    %v371 = vld [vmem:[#allocation5 + $0x7c0] sm:$0xff]
    %v372 = vld [vmem:[#allocation5 + $0x7c8] sm:$0xff]
    %v373 = vld [vmem:[#allocation5 + $0x7d0] sm:$0xff]
    %v374 = vld [vmem:[#allocation5 + $0x7d8] sm:$0xff]
    %v375 = vld [vmem:[#allocation5 + $0x7e0] sm:$0xff]
    %v376 = vld [vmem:[#allocation5 + $0x7e8] sm:$0xff]
    %v377 = vld [vmem:[#allocation5 + $0x7f0] sm:$0xff]
    %v378 = vld [vmem:[#allocation5 + $0x7f8] sm:$0xff]
    %v379 = vld [vmem:[#allocation5 + $0x800] sm:$0xff]
    %v380 = vld [vmem:[#allocation5 + $0x808] sm:$0xff]
    %v381 = vld [vmem:[#allocation5 + $0x810] sm:$0xff]
    %v382 = vld [vmem:[#allocation5 + $0x818] sm:$0xff]
    %v383 = vld [vmem:[#allocation5 + $0x820] sm:$0xff]
    %v384 = vld [vmem:[#allocation5 + $0x828] sm:$0xff]
    %v385 = vld [vmem:[#allocation5 + $0x830] sm:$0xff]
    %v386 = vld [vmem:[#allocation5 + $0x838] sm:$0xff]
    %v387 = vld [vmem:[#allocation5 + $0x840] sm:$0xff]
    %v388 = vld [vmem:[#allocation5 + $0x848] sm:$0xff]
    %v389 = vld [vmem:[#allocation5 + $0x850] sm:$0xff]
    %v390 = vld [vmem:[#allocation5 + $0x858] sm:$0xff]
    %v391 = vld [vmem:[#allocation5 + $0x860] sm:$0xff]
    %v392 = vld [vmem:[#allocation5 + $0x868] sm:$0xff]
    %v393 = vld [vmem:[#allocation5 + $0x870] sm:$0xff]
    %v394 = vld [vmem:[#allocation5 + $0x878] sm:$0xff]
    %v395 = vld [vmem:[#allocation5 + $0x880] sm:$0xff]
    %v396 = vld [vmem:[#allocation5 + $0x888] sm:$0xff]
    %v397 = vld [vmem:[#allocation5 + $0x890] sm:$0xff]
    %v398 = vld [vmem:[#allocation5 + $0x898] sm:$0xff]
    %v399 = vld [vmem:[#allocation5 + $0x8a0] sm:$0xff]
    %v400 = vld [vmem:[#allocation5 + $0x8a8] sm:$0xff]
    %v401 = vld [vmem:[#allocation5 + $0x8b0] sm:$0xff]
    %v402 = vld [vmem:[#allocation5 + $0x8b8] sm:$0xff]
    %v403 = vld [vmem:[#allocation5 + $0x8c0] sm:$0xff]
    %v404 = vld [vmem:[#allocation5 + $0x8c8] sm:$0xff]
    %v405 = vld [vmem:[#allocation5 + $0x8d0] sm:$0xff]
    %v406 = vld [vmem:[#allocation5 + $0x8d8] sm:$0xff]
    %v407 = vld [vmem:[#allocation5 + $0x8e0] sm:$0xff]
    %v408 = vld [vmem:[#allocation5 + $0x8e8] sm:$0xff]
    %v409 = vld [vmem:[#allocation5 + $0x8f0] sm:$0xff]
    %v410 = vld [vmem:[#allocation5 + $0x8f8] sm:$0xff]
    %v411 = vld [vmem:[#allocation5 + $0x900] sm:$0xff]
    %v412 = vld [vmem:[#allocation5 + $0x908] sm:$0xff]
    %v413 = vld [vmem:[#allocation5 + $0x910] sm:$0xff]
    %v414 = vld [vmem:[#allocation5 + $0x918] sm:$0xff]
    %v415 = vld [vmem:[#allocation5 + $0x920] sm:$0xff]
    %v416 = vld [vmem:[#allocation5 + $0x928] sm:$0xff]
    %v417 = vld [vmem:[#allocation5 + $0x930] sm:$0xff]
    %v418 = vld [vmem:[#allocation5 + $0x938] sm:$0xff]
    %v419 = vld [vmem:[#allocation5 + $0x940] sm:$0xff]
    %v420 = vld [vmem:[#allocation5 + $0x948] sm:$0xff]
    %v421 = vld [vmem:[#allocation5 + $0x950] sm:$0xff]
    %v422 = vld [vmem:[#allocation5 + $0x958] sm:$0xff]
    %v423 = vld [vmem:[#allocation5 + $0x960] sm:$0xff]
    %v424 = vld [vmem:[#allocation5 + $0x968] sm:$0xff]
    %v425 = vld [vmem:[#allocation5 + $0x970] sm:$0xff]
    %v426 = vld [vmem:[#allocation5 + $0x978] sm:$0xff]
    %v427 = vld [vmem:[#allocation5 + $0x980] sm:$0xff]
    %v428 = vld [vmem:[#allocation5 + $0x988] sm:$0xff]
    %v429 = vld [vmem:[#allocation5 + $0x990] sm:$0xff]
    %v430 = vld [vmem:[#allocation5 + $0x998] sm:$0xff]
    %v431 = vld [vmem:[#allocation5 + $0x9a0] sm:$0xff]
    %v432 = vld [vmem:[#allocation5 + $0x9a8] sm:$0xff]
    %v433 = vld [vmem:[#allocation5 + $0x9b0] sm:$0xff]
    %v434 = vld [vmem:[#allocation5 + $0x9b8] sm:$0xff]
    %v435 = vld [vmem:[#allocation5 + $0x9c0] sm:$0xff]
    %v436 = vld [vmem:[#allocation5 + $0x9c8] sm:$0xff]
    %v437 = vld [vmem:[#allocation5 + $0x9d0] sm:$0xff]
    %v438 = vld [vmem:[#allocation5 + $0x9d8] sm:$0xff]
    %v439 = vld [vmem:[#allocation5 + $0x9e0] sm:$0xff]
    %v440 = vld [vmem:[#allocation5 + $0x9e8] sm:$0xff]
    %v441 = vld [vmem:[#allocation5 + $0x9f0] sm:$0xff]
    %v442 = vld [vmem:[#allocation5 + $0x9f8] sm:$0xff]
    %v443 = vld [vmem:[#allocation5 + $0xa00] sm:$0xff]
    %v444 = vld [vmem:[#allocation5 + $0xa08] sm:$0xff]
    %v445 = vld [vmem:[#allocation5 + $0xa10] sm:$0xff]
    %v446 = vld [vmem:[#allocation5 + $0xa18] sm:$0xff]
    %v447 = vld [vmem:[#allocation5 + $0xa20] sm:$0xff]
    %v448 = vld [vmem:[#allocation5 + $0xa28] sm:$0xff]
    %v449 = vld [vmem:[#allocation5 + $0xa30] sm:$0xff]
    %v450 = vld [vmem:[#allocation5 + $0xa38] sm:$0xff]
    %v451 = vld [vmem:[#allocation5 + $0xa40] sm:$0xff]
    %v452 = vld [vmem:[#allocation5 + $0xa48] sm:$0xff]
    %v453 = vld [vmem:[#allocation5 + $0xa50] sm:$0xff]
    %v454 = vld [vmem:[#allocation5 + $0xa58] sm:$0xff]
    %v455 = vld [vmem:[#allocation5 + $0xa60] sm:$0xff]
    %v456 = vld [vmem:[#allocation5 + $0xa68] sm:$0xff]
    %v457 = vld [vmem:[#allocation5 + $0xa70] sm:$0xff]
    %v458 = vld [vmem:[#allocation5 + $0xa78] sm:$0xff]
    %v459 = vld [vmem:[#allocation5 + $0xa80] sm:$0xff]
    %v460 = vld [vmem:[#allocation5 + $0xa88] sm:$0xff]
    %v461 = vld [vmem:[#allocation5 + $0xa90] sm:$0xff]
    %v462 = vld [vmem:[#allocation5 + $0xa98] sm:$0xff]
    %v463 = vld [vmem:[#allocation5 + $0xaa0] sm:$0xff]
    %v464 = vld [vmem:[#allocation5 + $0xaa8] sm:$0xff]
    %v465 = vld [vmem:[#allocation5 + $0xab0] sm:$0xff]
    %v466 = vld [vmem:[#allocation5 + $0xab8] sm:$0xff]
    %v467 = vld [vmem:[#allocation5 + $0xac0] sm:$0xff]
    %v468 = vld [vmem:[#allocation5 + $0xac8] sm:$0xff]
    %v469 = vld [vmem:[#allocation5 + $0xad0] sm:$0xff]
    %v470 = vld [vmem:[#allocation5 + $0xad8] sm:$0xff]
    %v471 = vld [vmem:[#allocation5 + $0xae0] sm:$0xff]
    %v472 = vld [vmem:[#allocation5 + $0xae8] sm:$0xff]
    %v473 = vld [vmem:[#allocation5 + $0xaf0] sm:$0xff]
    %v474 = vld [vmem:[#allocation5 + $0xaf8] sm:$0xff]
    %v475 = vld [vmem:[#allocation5 + $0xb00] sm:$0xff]
    %v476 = vld [vmem:[#allocation5 + $0xb08] sm:$0xff]
    %v477 = vld [vmem:[#allocation5 + $0xb10] sm:$0xff]
    %v478 = vld [vmem:[#allocation5 + $0xb18] sm:$0xff]
    %v479 = vld [vmem:[#allocation5 + $0xb20] sm:$0xff]
    %v480 = vld [vmem:[#allocation5 + $0xb28] sm:$0xff]
    %v481 = vld [vmem:[#allocation5 + $0xb30] sm:$0xff]
    %v482 = vld [vmem:[#allocation5 + $0xb38] sm:$0xff]
    %v483 = vld [vmem:[#allocation5 + $0xb40] sm:$0xff]
    %v484 = vld [vmem:[#allocation5 + $0xb48] sm:$0xff]
    %v485 = vld [vmem:[#allocation5 + $0xb50] sm:$0xff]
    %v486 = vld [vmem:[#allocation5 + $0xb58] sm:$0xff]
    %v487 = vld [vmem:[#allocation5 + $0xb60] sm:$0xff]
    %v488 = vld [vmem:[#allocation5 + $0xb68] sm:$0xff]
    %v489 = vld [vmem:[#allocation5 + $0xb70] sm:$0xff]
    %v490 = vld [vmem:[#allocation5 + $0xb78] sm:$0xff]
    %v491 = vld [vmem:[#allocation5 + $0xb80] sm:$0xff]
    %v492 = vld [vmem:[#allocation5 + $0xb88] sm:$0xff]
    %v493 = vld [vmem:[#allocation5 + $0xb90] sm:$0xff]
    %v494 = vld [vmem:[#allocation5 + $0xb98] sm:$0xff]
    %v495 = vld [vmem:[#allocation5 + $0xba0] sm:$0xff]
    %v496 = vld [vmem:[#allocation5 + $0xba8] sm:$0xff]
    %v497 = vld [vmem:[#allocation5 + $0xbb0] sm:$0xff]
    %v498 = vld [vmem:[#allocation5 + $0xbb8] sm:$0xff]
    %v499 = vld [vmem:[#allocation5 + $0xbc0] sm:$0xff]
    %v500 = vld [vmem:[#allocation5 + $0xbc8] sm:$0xff]
    %v501 = vld [vmem:[#allocation5 + $0xbd0] sm:$0xff]
    %v502 = vld [vmem:[#allocation5 + $0xbd8] sm:$0xff]
    %v503 = vld [vmem:[#allocation5 + $0xbe0] sm:$0xff]
    %v504 = vld [vmem:[#allocation5 + $0xbe8] sm:$0xff]
    %v505 = vld [vmem:[#allocation5 + $0xbf0] sm:$0xff]
    %v506 = vld [vmem:[#allocation5 + $0xbf8] sm:$0xff]
    %v507 = vld [vmem:[#allocation5 + $0xc00] sm:$0xff]
    %v508 = vld [vmem:[#allocation5 + $0xc08] sm:$0xff]
    %v509 = vld [vmem:[#allocation5 + $0xc10] sm:$0xff]
    %v510 = vld [vmem:[#allocation5 + $0xc18] sm:$0xff]
    %v511 = vld [vmem:[#allocation5 + $0xc20] sm:$0xff]
    %v512 = vld [vmem:[#allocation5 + $0xc28] sm:$0xff]
    %v513 = vld [vmem:[#allocation5 + $0xc30] sm:$0xff]
    %v514 = vld [vmem:[#allocation5 + $0xc38] sm:$0xff]
    %v515 = vld [vmem:[#allocation5 + $0xc40] sm:$0xff]
    %v516 = vld [vmem:[#allocation5 + $0xc48] sm:$0xff]
    %v517 = vld [vmem:[#allocation5 + $0xc50] sm:$0xff]
    %v518 = vld [vmem:[#allocation5 + $0xc58] sm:$0xff]
    %v519 = vld [vmem:[#allocation5 + $0xc60] sm:$0xff]
    %v520 = vld [vmem:[#allocation5 + $0xc68] sm:$0xff]
    %v521 = vld [vmem:[#allocation5 + $0xc70] sm:$0xff]
    %v522 = vld [vmem:[#allocation5 + $0xc78] sm:$0xff]
    %v523 = vld [vmem:[#allocation5 + $0xc80] sm:$0xff]
    %v524 = vld [vmem:[#allocation5 + $0xc88] sm:$0xff]
    %v525 = vld [vmem:[#allocation5 + $0xc90] sm:$0xff]
    %v526 = vld [vmem:[#allocation5 + $0xc98] sm:$0xff]
    %v527 = vld [vmem:[#allocation5 + $0xca0] sm:$0xff]
    %v528 = vld [vmem:[#allocation5 + $0xca8] sm:$0xff]
    %v529 = vld [vmem:[#allocation5 + $0xcb0] sm:$0xff]
    %v530 = vld [vmem:[#allocation5 + $0xcb8] sm:$0xff]
    %v531 = vld [vmem:[#allocation5 + $0xcc0] sm:$0xff]
    %v532 = vld [vmem:[#allocation5 + $0xcc8] sm:$0xff]
    %v533 = vld [vmem:[#allocation5 + $0xcd0] sm:$0xff]
    %v534 = vld [vmem:[#allocation5 + $0xcd8] sm:$0xff]
    %v535 = vld [vmem:[#allocation5 + $0xce0] sm:$0xff]
    %v536 = vld [vmem:[#allocation5 + $0xce8] sm:$0xff]
    %v537 = vld [vmem:[#allocation5 + $0xcf0] sm:$0xff]
    %v538 = vld [vmem:[#allocation5 + $0xcf8] sm:$0xff]
    %v539 = vld [vmem:[#allocation5 + $0xd00] sm:$0xff]
    %v540 = vld [vmem:[#allocation5 + $0xd08] sm:$0xff]
    %v541 = vld [vmem:[#allocation5 + $0xd10] sm:$0xff]
    %v542 = vld [vmem:[#allocation5 + $0xd18] sm:$0xff]
    %v543 = vld [vmem:[#allocation5 + $0xd20] sm:$0xff]
    %v544 = vld [vmem:[#allocation5 + $0xd28] sm:$0xff]
    %v545 = vld [vmem:[#allocation5 + $0xd30] sm:$0xff]
    %v546 = vld [vmem:[#allocation5 + $0xd38] sm:$0xff]
    %v547 = vld [vmem:[#allocation5 + $0xd40] sm:$0xff]
    %v548 = vld [vmem:[#allocation5 + $0xd48] sm:$0xff]
    %v549 = vld [vmem:[#allocation5 + $0xd50] sm:$0xff]
    %v550 = vld [vmem:[#allocation5 + $0xd58] sm:$0xff]
    %v551 = vld [vmem:[#allocation5 + $0xd60] sm:$0xff]
    %v552 = vld [vmem:[#allocation5 + $0xd68] sm:$0xff]
    %v553 = vld [vmem:[#allocation5 + $0xd70] sm:$0xff]
    %v554 = vld [vmem:[#allocation5 + $0xd78] sm:$0xff]
    %v555 = vld [vmem:[#allocation5 + $0xd80] sm:$0xff]
    %v556 = vld [vmem:[#allocation5 + $0xd88] sm:$0xff]
    %v557 = vld [vmem:[#allocation5 + $0xd90] sm:$0xff]
    %v558 = vld [vmem:[#allocation5 + $0xd98] sm:$0xff]
    %v559 = vld [vmem:[#allocation5 + $0xda0] sm:$0xff]
    %v560 = vld [vmem:[#allocation5 + $0xda8] sm:$0xff]
    %v561 = vld [vmem:[#allocation5 + $0xdb0] sm:$0xff]
    %v562 = vld [vmem:[#allocation5 + $0xdb8] sm:$0xff]
    %v563 = vld [vmem:[#allocation5 + $0xdc0] sm:$0xff]
    %v564 = vld [vmem:[#allocation5 + $0xdc8] sm:$0xff]
    %v565 = vld [vmem:[#allocation5 + $0xdd0] sm:$0xff]
    %v566 = vld [vmem:[#allocation5 + $0xdd8] sm:$0xff]
    %v567 = vld [vmem:[#allocation5 + $0xde0] sm:$0xff]
    %v568 = vld [vmem:[#allocation5 + $0xde8] sm:$0xff]
    %v569 = vld [vmem:[#allocation5 + $0xdf0] sm:$0xff]
    %v570 = vld [vmem:[#allocation5 + $0xdf8] sm:$0xff]
    %v571 = vld [vmem:[#allocation5 + $0xe00] sm:$0xff]
    %v572 = vld [vmem:[#allocation5 + $0xe08] sm:$0xff]
    %v573 = vld [vmem:[#allocation5 + $0xe10] sm:$0xff]
    %v574 = vld [vmem:[#allocation5 + $0xe18] sm:$0xff]
    %v575 = vld [vmem:[#allocation5 + $0xe20] sm:$0xff]
    %v576 = vld [vmem:[#allocation5 + $0xe28] sm:$0xff]
    %v577 = vld [vmem:[#allocation5 + $0xe30] sm:$0xff]
    %v578 = vld [vmem:[#allocation5 + $0xe38] sm:$0xff]
    %v579 = vld [vmem:[#allocation5 + $0xe40] sm:$0xff]
    %v580 = vld [vmem:[#allocation5 + $0xe48] sm:$0xff]
    %v581 = vld [vmem:[#allocation5 + $0xe50] sm:$0xff]
    %v582 = vld [vmem:[#allocation5 + $0xe58] sm:$0xff]
    %v583 = vld [vmem:[#allocation5 + $0xe60] sm:$0xff]
    %v584 = vld [vmem:[#allocation5 + $0xe68] sm:$0xff]
    %v585 = vld [vmem:[#allocation5 + $0xe70] sm:$0xff]
    %v586 = vld [vmem:[#allocation5 + $0xe78] sm:$0xff]
    %v587 = vld [vmem:[#allocation5 + $0xe80] sm:$0xff]
    %v588 = vld [vmem:[#allocation5 + $0xe88] sm:$0xff]
    %v589 = vld [vmem:[#allocation5 + $0xe90] sm:$0xff]
    %v590 = vld [vmem:[#allocation5 + $0xe98] sm:$0xff]
    %v591 = vld [vmem:[#allocation5 + $0xea0] sm:$0xff]
    %v592 = vld [vmem:[#allocation5 + $0xea8] sm:$0xff]
    %v593 = vld [vmem:[#allocation5 + $0xeb0] sm:$0xff]
    %v594 = vld [vmem:[#allocation5 + $0xeb8] sm:$0xff]
    %v595 = vld [vmem:[#allocation5 + $0xec0] sm:$0xff]
    %v596 = vld [vmem:[#allocation5 + $0xec8] sm:$0xff]
    %v597 = vld [vmem:[#allocation5 + $0xed0] sm:$0xff]
    %v598 = vld [vmem:[#allocation5 + $0xed8] sm:$0xff]
    %v599 = vld [vmem:[#allocation5 + $0xee0] sm:$0xff]
    %v600 = vld [vmem:[#allocation5 + $0xee8] sm:$0xff]
    %v601 = vld [vmem:[#allocation5 + $0xef0] sm:$0xff]
    %v602 = vld [vmem:[#allocation5 + $0xef8] sm:$0xff]
    %v603 = vld [vmem:[#allocation5 + $0xf00] sm:$0xff]
    %v604 = vld [vmem:[#allocation5 + $0xf08] sm:$0xff]
    %v605 = vld [vmem:[#allocation5 + $0xf10] sm:$0xff]
    %v606 = vld [vmem:[#allocation5 + $0xf18] sm:$0xff]
    %v607 = vld [vmem:[#allocation5 + $0xf20] sm:$0xff]
    %v608 = vld [vmem:[#allocation5 + $0xf28] sm:$0xff]
    %v609 = vld [vmem:[#allocation5 + $0xf30] sm:$0xff]
    %v610 = vld [vmem:[#allocation5 + $0xf38] sm:$0xff]
    %v611 = vld [vmem:[#allocation5 + $0xf40] sm:$0xff]
    %v612 = vld [vmem:[#allocation5 + $0xf48] sm:$0xff]
    %v613 = vld [vmem:[#allocation5 + $0xf50] sm:$0xff]
    %v614 = vld [vmem:[#allocation5 + $0xf58] sm:$0xff]
    %v615 = vld [vmem:[#allocation5 + $0xf60] sm:$0xff]
    %v616 = vld [vmem:[#allocation5 + $0xf68] sm:$0xff]
    %v617 = vld [vmem:[#allocation5 + $0xf70] sm:$0xff]
    %v618 = vld [vmem:[#allocation5 + $0xf78] sm:$0xff]
    %v619 = vld [vmem:[#allocation5 + $0xf80] sm:$0xff]
    %v620 = vld [vmem:[#allocation5 + $0xf88] sm:$0xff]
    %v621 = vld [vmem:[#allocation5 + $0xf90] sm:$0xff]
    %v622 = vld [vmem:[#allocation5 + $0xf98] sm:$0xff]
    %v623 = vld [vmem:[#allocation5 + $0xfa0] sm:$0xff]
    %v624 = vld [vmem:[#allocation5 + $0xfa8] sm:$0xff]
    %v625 = vld [vmem:[#allocation5 + $0xfb0] sm:$0xff]
    %v626 = vld [vmem:[#allocation5 + $0xfb8] sm:$0xff]
    %v627 = vld [vmem:[#allocation5 + $0xfc0] sm:$0xff]
    %v628 = vld [vmem:[#allocation5 + $0xfc8] sm:$0xff]
    %v629 = vld [vmem:[#allocation5 + $0xfd0] sm:$0xff]
    %v630 = vld [vmem:[#allocation5 + $0xfd8] sm:$0xff]
    %v631 = vld [vmem:[#allocation5 + $0xfe0] sm:$0xff]
    %v632 = vld [vmem:[#allocation5 + $0xfe8] sm:$0xff]
    %v633 = vld [vmem:[#allocation5 + $0xff0] sm:$0xff]
    %v634 = vld [vmem:[#allocation5 + $0xff8] sm:$0xff]
    %v635 = vld [vmem:[#allocation7] sm:$0xff]
    %v637 = vlaneseq
    %v638 = vshrl.u32 %v637, 7
    %v639 = vsub.s32 0, %v638
    %v640 = vrot.slane %v635, %v639
    %v641 = vlaneseq
    %v642 = vshrl.u32 %v641, 7
    %v643 = vsub.s32 1, %v642
    %v644 = vrot.slane %v635, %v643
    %v645 = vlaneseq
    %v646 = vshrl.u32 %v645, 7
    %v647 = vsub.s32 2, %v646
    %v648 = vrot.slane %v635, %v647
    %v649 = vlaneseq
    %v650 = vshrl.u32 %v649, 7
    %v651 = vsub.s32 3, %v650
    %v652 = vrot.slane %v635, %v651
    %v653 = vlaneseq
    %v654 = vshrl.u32 %v653, 7
    %v655 = vsub.s32 4, %v654
    %v656 = vrot.slane %v635, %v655
    %v657 = vlaneseq
    %v658 = vshrl.u32 %v657, 7
    %v659 = vsub.s32 5, %v658
    %v660 = vrot.slane %v635, %v659
    %v661 = vlaneseq
    %v662 = vshrl.u32 %v661, 7
    %v663 = vsub.s32 6, %v662
    %v664 = vrot.slane %v635, %v663
    %v665 = vlaneseq
    %v666 = vshrl.u32 %v665, 7
    %v667 = vsub.s32 7, %v666
    %v668 = vrot.slane %v635, %v667
    %v681 = vunpack.c.l.b16 %v119
    %v682 = vunpack.c.h.b16 %v119
    %v683 = vunpack.c.l.b16 %v120
    %v684 = vunpack.c.h.b16 %v120
    %v685 = vunpack.c.l.b16 %v121
    %v686 = vunpack.c.h.b16 %v121
    %v687 = vunpack.c.l.b16 %v122
    %v688 = vunpack.c.h.b16 %v122
    %v689 = vpack.c.b16 %v681, %v681
    %v690 = vpack.c.b16 %v682, %v682
    %v691 = vpack.c.b16 %v683, %v683
    %v692 = vpack.c.b16 %v684, %v684
    %v693 = vpack.c.b16 %v685, %v685
    %v694 = vpack.c.b16 %v686, %v686
    %v695 = vpack.c.b16 %v687, %v687
    %v696 = vpack.c.b16 %v688, %v688
    %v1217 = vunpack.c.l.b16 %v123
    %v1218 = vunpack.c.h.b16 %v123
    %v1219 = vunpack.c.l.b16 %v124
    %v1220 = vunpack.c.h.b16 %v124
    %v1221 = vunpack.c.l.b16 %v125
    %v1222 = vunpack.c.h.b16 %v125
    %v1223 = vunpack.c.l.b16 %v126
    %v1224 = vunpack.c.h.b16 %v126
    %v1225 = vunpack.c.l.b16 %v127
    %v1226 = vunpack.c.h.b16 %v127
    %v1227 = vunpack.c.l.b16 %v128
    %v1228 = vunpack.c.h.b16 %v128
    %v1229 = vunpack.c.l.b16 %v129
    %v1230 = vunpack.c.h.b16 %v129
    %v1231 = vunpack.c.l.b16 %v130
    %v1232 = vunpack.c.h.b16 %v130
    %v1233 = vunpack.c.l.b16 %v131
    %v1234 = vunpack.c.h.b16 %v131
    %v1235 = vunpack.c.l.b16 %v132
    %v1236 = vunpack.c.h.b16 %v132
    %v1237 = vunpack.c.l.b16 %v133
    %v1238 = vunpack.c.h.b16 %v133
    %v1239 = vunpack.c.l.b16 %v134
    %v1240 = vunpack.c.h.b16 %v134
    %v1241 = vunpack.c.l.b16 %v135
    %v1242 = vunpack.c.h.b16 %v135
    %v1243 = vunpack.c.l.b16 %v136
    %v1244 = vunpack.c.h.b16 %v136
    %v1245 = vunpack.c.l.b16 %v137
    %v1246 = vunpack.c.h.b16 %v137
    %v1247 = vunpack.c.l.b16 %v138
    %v1248 = vunpack.c.h.b16 %v138
    %v1249 = vunpack.c.l.b16 %v139
    %v1250 = vunpack.c.h.b16 %v139
    %v1251 = vunpack.c.l.b16 %v140
    %v1252 = vunpack.c.h.b16 %v140
    %v1253 = vunpack.c.l.b16 %v141
    %v1254 = vunpack.c.h.b16 %v141
    %v1255 = vunpack.c.l.b16 %v142
    %v1256 = vunpack.c.h.b16 %v142
    %v1257 = vunpack.c.l.b16 %v143
    %v1258 = vunpack.c.h.b16 %v143
    %v1259 = vunpack.c.l.b16 %v144
    %v1260 = vunpack.c.h.b16 %v144
    %v1261 = vunpack.c.l.b16 %v145
    %v1262 = vunpack.c.h.b16 %v145
    %v1263 = vunpack.c.l.b16 %v146
    %v1264 = vunpack.c.h.b16 %v146
    %v1265 = vunpack.c.l.b16 %v147
    %v1266 = vunpack.c.h.b16 %v147
    %v1267 = vunpack.c.l.b16 %v148
    %v1268 = vunpack.c.h.b16 %v148
    %v1269 = vunpack.c.l.b16 %v149
    %v1270 = vunpack.c.h.b16 %v149
    %v1271 = vunpack.c.l.b16 %v150
    %v1272 = vunpack.c.h.b16 %v150
    %v1273 = vunpack.c.l.b16 %v151
    %v1274 = vunpack.c.h.b16 %v151
    %v1275 = vunpack.c.l.b16 %v152
    %v1276 = vunpack.c.h.b16 %v152
    %v1277 = vunpack.c.l.b16 %v153
    %v1278 = vunpack.c.h.b16 %v153
    %v1279 = vunpack.c.l.b16 %v154
    %v1280 = vunpack.c.h.b16 %v154
    %v1281 = vunpack.c.l.b16 %v155
    %v1282 = vunpack.c.h.b16 %v155
    %v1283 = vunpack.c.l.b16 %v156
    %v1284 = vunpack.c.h.b16 %v156
    %v1285 = vunpack.c.l.b16 %v157
    %v1286 = vunpack.c.h.b16 %v157
    %v1287 = vunpack.c.l.b16 %v158
    %v1288 = vunpack.c.h.b16 %v158
    %v1289 = vunpack.c.l.b16 %v159
    %v1290 = vunpack.c.h.b16 %v159
    %v1291 = vunpack.c.l.b16 %v160
    %v1292 = vunpack.c.h.b16 %v160
    %v1293 = vunpack.c.l.b16 %v161
    %v1294 = vunpack.c.h.b16 %v161
    %v1295 = vunpack.c.l.b16 %v162
    %v1296 = vunpack.c.h.b16 %v162
    %v1297 = vunpack.c.l.b16 %v163
    %v1298 = vunpack.c.h.b16 %v163
    %v1299 = vunpack.c.l.b16 %v164
    %v1300 = vunpack.c.h.b16 %v164
    %v1301 = vunpack.c.l.b16 %v165
    %v1302 = vunpack.c.h.b16 %v165
    %v1303 = vunpack.c.l.b16 %v166
    %v1304 = vunpack.c.h.b16 %v166
    %v1305 = vunpack.c.l.b16 %v167
    %v1306 = vunpack.c.h.b16 %v167
    %v1307 = vunpack.c.l.b16 %v168
    %v1308 = vunpack.c.h.b16 %v168
    %v1309 = vunpack.c.l.b16 %v169
    %v1310 = vunpack.c.h.b16 %v169
    %v1311 = vunpack.c.l.b16 %v170
    %v1312 = vunpack.c.h.b16 %v170
    %v1313 = vunpack.c.l.b16 %v171
    %v1314 = vunpack.c.h.b16 %v171
    %v1315 = vunpack.c.l.b16 %v172
    %v1316 = vunpack.c.h.b16 %v172
    %v1317 = vunpack.c.l.b16 %v173
    %v1318 = vunpack.c.h.b16 %v173
    %v1319 = vunpack.c.l.b16 %v174
    %v1320 = vunpack.c.h.b16 %v174
    %v1321 = vunpack.c.l.b16 %v175
    %v1322 = vunpack.c.h.b16 %v175
    %v1323 = vunpack.c.l.b16 %v176
    %v1324 = vunpack.c.h.b16 %v176
    %v1325 = vunpack.c.l.b16 %v177
    %v1326 = vunpack.c.h.b16 %v177
    %v1327 = vunpack.c.l.b16 %v178
    %v1328 = vunpack.c.h.b16 %v178
    %v1329 = vunpack.c.l.b16 %v179
    %v1330 = vunpack.c.h.b16 %v179
    %v1331 = vunpack.c.l.b16 %v180
    %v1332 = vunpack.c.h.b16 %v180
    %v1333 = vunpack.c.l.b16 %v181
    %v1334 = vunpack.c.h.b16 %v181
    %v1335 = vunpack.c.l.b16 %v182
    %v1336 = vunpack.c.h.b16 %v182
    %v1337 = vunpack.c.l.b16 %v183
    %v1338 = vunpack.c.h.b16 %v183
    %v1339 = vunpack.c.l.b16 %v184
    %v1340 = vunpack.c.h.b16 %v184
    %v1341 = vunpack.c.l.b16 %v185
    %v1342 = vunpack.c.h.b16 %v185
    %v1343 = vunpack.c.l.b16 %v186
    %v1344 = vunpack.c.h.b16 %v186
    %v1345 = vunpack.c.l.b16 %v187
    %v1346 = vunpack.c.h.b16 %v187
    %v1347 = vunpack.c.l.b16 %v188
    %v1348 = vunpack.c.h.b16 %v188
    %v1349 = vunpack.c.l.b16 %v189
    %v1350 = vunpack.c.h.b16 %v189
    %v1351 = vunpack.c.l.b16 %v190
    %v1352 = vunpack.c.h.b16 %v190
    %v1353 = vunpack.c.l.b16 %v191
    %v1354 = vunpack.c.h.b16 %v191
    %v1355 = vunpack.c.l.b16 %v192
    %v1356 = vunpack.c.h.b16 %v192
    %v1357 = vunpack.c.l.b16 %v193
    %v1358 = vunpack.c.h.b16 %v193
    %v1359 = vunpack.c.l.b16 %v194
    %v1360 = vunpack.c.h.b16 %v194
    %v1361 = vunpack.c.l.b16 %v195
    %v1362 = vunpack.c.h.b16 %v195
    %v1363 = vunpack.c.l.b16 %v196
    %v1364 = vunpack.c.h.b16 %v196
    %v1365 = vunpack.c.l.b16 %v197
    %v1366 = vunpack.c.h.b16 %v197
    %v1367 = vunpack.c.l.b16 %v198
    %v1368 = vunpack.c.h.b16 %v198
    %v1369 = vunpack.c.l.b16 %v199
    %v1370 = vunpack.c.h.b16 %v199
    %v1371 = vunpack.c.l.b16 %v200
    %v1372 = vunpack.c.h.b16 %v200
    %v1373 = vunpack.c.l.b16 %v201
    %v1374 = vunpack.c.h.b16 %v201
    %v1375 = vunpack.c.l.b16 %v202
    %v1376 = vunpack.c.h.b16 %v202
    %v1377 = vunpack.c.l.b16 %v203
    %v1378 = vunpack.c.h.b16 %v203
    %v1379 = vunpack.c.l.b16 %v204
    %v1380 = vunpack.c.h.b16 %v204
    %v1381 = vunpack.c.l.b16 %v205
    %v1382 = vunpack.c.h.b16 %v205
    %v1383 = vunpack.c.l.b16 %v206
    %v1384 = vunpack.c.h.b16 %v206
    %v1385 = vunpack.c.l.b16 %v207
    %v1386 = vunpack.c.h.b16 %v207
    %v1387 = vunpack.c.l.b16 %v208
    %v1388 = vunpack.c.h.b16 %v208
    %v1389 = vunpack.c.l.b16 %v209
    %v1390 = vunpack.c.h.b16 %v209
    %v1391 = vunpack.c.l.b16 %v210
    %v1392 = vunpack.c.h.b16 %v210
    %v1393 = vunpack.c.l.b16 %v211
    %v1394 = vunpack.c.h.b16 %v211
    %v1395 = vunpack.c.l.b16 %v212
    %v1396 = vunpack.c.h.b16 %v212
    %v1397 = vunpack.c.l.b16 %v213
    %v1398 = vunpack.c.h.b16 %v213
    %v1399 = vunpack.c.l.b16 %v214
    %v1400 = vunpack.c.h.b16 %v214
    %v1401 = vunpack.c.l.b16 %v215
    %v1402 = vunpack.c.h.b16 %v215
    %v1403 = vunpack.c.l.b16 %v216
    %v1404 = vunpack.c.h.b16 %v216
    %v1405 = vunpack.c.l.b16 %v217
    %v1406 = vunpack.c.h.b16 %v217
    %v1407 = vunpack.c.l.b16 %v218
    %v1408 = vunpack.c.h.b16 %v218
    %v1409 = vunpack.c.l.b16 %v219
    %v1410 = vunpack.c.h.b16 %v219
    %v1411 = vunpack.c.l.b16 %v220
    %v1412 = vunpack.c.h.b16 %v220
    %v1413 = vunpack.c.l.b16 %v221
    %v1414 = vunpack.c.h.b16 %v221
    %v1415 = vunpack.c.l.b16 %v222
    %v1416 = vunpack.c.h.b16 %v222
    %v1417 = vunpack.c.l.b16 %v223
    %v1418 = vunpack.c.h.b16 %v223
    %v1419 = vunpack.c.l.b16 %v224
    %v1420 = vunpack.c.h.b16 %v224
    %v1421 = vunpack.c.l.b16 %v225
    %v1422 = vunpack.c.h.b16 %v225
    %v1423 = vunpack.c.l.b16 %v226
    %v1424 = vunpack.c.h.b16 %v226
    %v1425 = vunpack.c.l.b16 %v227
    %v1426 = vunpack.c.h.b16 %v227
    %v1427 = vunpack.c.l.b16 %v228
    %v1428 = vunpack.c.h.b16 %v228
    %v1429 = vunpack.c.l.b16 %v229
    %v1430 = vunpack.c.h.b16 %v229
    %v1431 = vunpack.c.l.b16 %v230
    %v1432 = vunpack.c.h.b16 %v230
    %v1433 = vunpack.c.l.b16 %v231
    %v1434 = vunpack.c.h.b16 %v231
    %v1435 = vunpack.c.l.b16 %v232
    %v1436 = vunpack.c.h.b16 %v232
    %v1437 = vunpack.c.l.b16 %v233
    %v1438 = vunpack.c.h.b16 %v233
    %v1439 = vunpack.c.l.b16 %v234
    %v1440 = vunpack.c.h.b16 %v234
    %v1441 = vunpack.c.l.b16 %v235
    %v1442 = vunpack.c.h.b16 %v235
    %v1443 = vunpack.c.l.b16 %v236
    %v1444 = vunpack.c.h.b16 %v236
    %v1445 = vunpack.c.l.b16 %v237
    %v1446 = vunpack.c.h.b16 %v237
    %v1447 = vunpack.c.l.b16 %v238
    %v1448 = vunpack.c.h.b16 %v238
    %v1449 = vunpack.c.l.b16 %v239
    %v1450 = vunpack.c.h.b16 %v239
    %v1451 = vunpack.c.l.b16 %v240
    %v1452 = vunpack.c.h.b16 %v240
    %v1453 = vunpack.c.l.b16 %v241
    %v1454 = vunpack.c.h.b16 %v241
    %v1455 = vunpack.c.l.b16 %v242
    %v1456 = vunpack.c.h.b16 %v242
    %v1457 = vunpack.c.l.b16 %v243
    %v1458 = vunpack.c.h.b16 %v243
    %v1459 = vunpack.c.l.b16 %v244
    %v1460 = vunpack.c.h.b16 %v244
    %v1461 = vunpack.c.l.b16 %v245
    %v1462 = vunpack.c.h.b16 %v245
    %v1463 = vunpack.c.l.b16 %v246
    %v1464 = vunpack.c.h.b16 %v246
    %v1465 = vunpack.c.l.b16 %v247
    %v1466 = vunpack.c.h.b16 %v247
    %v1467 = vunpack.c.l.b16 %v248
    %v1468 = vunpack.c.h.b16 %v248
    %v1469 = vunpack.c.l.b16 %v249
    %v1470 = vunpack.c.h.b16 %v249
    %v1471 = vunpack.c.l.b16 %v250
    %v1472 = vunpack.c.h.b16 %v250
    %v1473 = vunpack.c.l.b16 %v251
    %v1474 = vunpack.c.h.b16 %v251
    %v1475 = vunpack.c.l.b16 %v252
    %v1476 = vunpack.c.h.b16 %v252
    %v1477 = vunpack.c.l.b16 %v253
    %v1478 = vunpack.c.h.b16 %v253
    %v1479 = vunpack.c.l.b16 %v254
    %v1480 = vunpack.c.h.b16 %v254
    %v1481 = vunpack.c.l.b16 %v255
    %v1482 = vunpack.c.h.b16 %v255
    %v1483 = vunpack.c.l.b16 %v256
    %v1484 = vunpack.c.h.b16 %v256
    %v1485 = vunpack.c.l.b16 %v257
    %v1486 = vunpack.c.h.b16 %v257
    %v1487 = vunpack.c.l.b16 %v258
    %v1488 = vunpack.c.h.b16 %v258
    %v1489 = vunpack.c.l.b16 %v259
    %v1490 = vunpack.c.h.b16 %v259
    %v1491 = vunpack.c.l.b16 %v260
    %v1492 = vunpack.c.h.b16 %v260
    %v1493 = vunpack.c.l.b16 %v261
    %v1494 = vunpack.c.h.b16 %v261
    %v1495 = vunpack.c.l.b16 %v262
    %v1496 = vunpack.c.h.b16 %v262
    %v1497 = vunpack.c.l.b16 %v263
    %v1498 = vunpack.c.h.b16 %v263
    %v1499 = vunpack.c.l.b16 %v264
    %v1500 = vunpack.c.h.b16 %v264
    %v1501 = vunpack.c.l.b16 %v265
    %v1502 = vunpack.c.h.b16 %v265
    %v1503 = vunpack.c.l.b16 %v266
    %v1504 = vunpack.c.h.b16 %v266
    %v1505 = vunpack.c.l.b16 %v267
    %v1506 = vunpack.c.h.b16 %v267
    %v1507 = vunpack.c.l.b16 %v268
    %v1508 = vunpack.c.h.b16 %v268
    %v1509 = vunpack.c.l.b16 %v269
    %v1510 = vunpack.c.h.b16 %v269
    %v1511 = vunpack.c.l.b16 %v270
    %v1512 = vunpack.c.h.b16 %v270
    %v1513 = vunpack.c.l.b16 %v271
    %v1514 = vunpack.c.h.b16 %v271
    %v1515 = vunpack.c.l.b16 %v272
    %v1516 = vunpack.c.h.b16 %v272
    %v1517 = vunpack.c.l.b16 %v273
    %v1518 = vunpack.c.h.b16 %v273
    %v1519 = vunpack.c.l.b16 %v274
    %v1520 = vunpack.c.h.b16 %v274
    %v1521 = vunpack.c.l.b16 %v275
    %v1522 = vunpack.c.h.b16 %v275
    %v1523 = vunpack.c.l.b16 %v276
    %v1524 = vunpack.c.h.b16 %v276
    %v1525 = vunpack.c.l.b16 %v277
    %v1526 = vunpack.c.h.b16 %v277
    %v1527 = vunpack.c.l.b16 %v278
    %v1528 = vunpack.c.h.b16 %v278
    %v1529 = vunpack.c.l.b16 %v279
    %v1530 = vunpack.c.h.b16 %v279
    %v1531 = vunpack.c.l.b16 %v280
    %v1532 = vunpack.c.h.b16 %v280
    %v1533 = vunpack.c.l.b16 %v281
    %v1534 = vunpack.c.h.b16 %v281
    %v1535 = vunpack.c.l.b16 %v282
    %v1536 = vunpack.c.h.b16 %v282
    %v1537 = vunpack.c.l.b16 %v283
    %v1538 = vunpack.c.h.b16 %v283
    %v1539 = vunpack.c.l.b16 %v284
    %v1540 = vunpack.c.h.b16 %v284
    %v1541 = vunpack.c.l.b16 %v285
    %v1542 = vunpack.c.h.b16 %v285
    %v1543 = vunpack.c.l.b16 %v286
    %v1544 = vunpack.c.h.b16 %v286
    %v1545 = vunpack.c.l.b16 %v287
    %v1546 = vunpack.c.h.b16 %v287
    %v1547 = vunpack.c.l.b16 %v288
    %v1548 = vunpack.c.h.b16 %v288
    %v1549 = vunpack.c.l.b16 %v289
    %v1550 = vunpack.c.h.b16 %v289
    %v1551 = vunpack.c.l.b16 %v290
    %v1552 = vunpack.c.h.b16 %v290
    %v1553 = vunpack.c.l.b16 %v291
    %v1554 = vunpack.c.h.b16 %v291
    %v1555 = vunpack.c.l.b16 %v292
    %v1556 = vunpack.c.h.b16 %v292
    %v1557 = vunpack.c.l.b16 %v293
    %v1558 = vunpack.c.h.b16 %v293
    %v1559 = vunpack.c.l.b16 %v294
    %v1560 = vunpack.c.h.b16 %v294
    %v1561 = vunpack.c.l.b16 %v295
    %v1562 = vunpack.c.h.b16 %v295
    %v1563 = vunpack.c.l.b16 %v296
    %v1564 = vunpack.c.h.b16 %v296
    %v1565 = vunpack.c.l.b16 %v297
    %v1566 = vunpack.c.h.b16 %v297
    %v1567 = vunpack.c.l.b16 %v298
    %v1568 = vunpack.c.h.b16 %v298
    %v1569 = vunpack.c.l.b16 %v299
    %v1570 = vunpack.c.h.b16 %v299
    %v1571 = vunpack.c.l.b16 %v300
    %v1572 = vunpack.c.h.b16 %v300
    %v1573 = vunpack.c.l.b16 %v301
    %v1574 = vunpack.c.h.b16 %v301
    %v1575 = vunpack.c.l.b16 %v302
    %v1576 = vunpack.c.h.b16 %v302
    %v1577 = vunpack.c.l.b16 %v303
    %v1578 = vunpack.c.h.b16 %v303
    %v1579 = vunpack.c.l.b16 %v304
    %v1580 = vunpack.c.h.b16 %v304
    %v1581 = vunpack.c.l.b16 %v305
    %v1582 = vunpack.c.h.b16 %v305
    %v1583 = vunpack.c.l.b16 %v306
    %v1584 = vunpack.c.h.b16 %v306
    %v1585 = vunpack.c.l.b16 %v307
    %v1586 = vunpack.c.h.b16 %v307
    %v1587 = vunpack.c.l.b16 %v308
    %v1588 = vunpack.c.h.b16 %v308
    %v1589 = vunpack.c.l.b16 %v309
    %v1590 = vunpack.c.h.b16 %v309
    %v1591 = vunpack.c.l.b16 %v310
    %v1592 = vunpack.c.h.b16 %v310
    %v1593 = vunpack.c.l.b16 %v311
    %v1594 = vunpack.c.h.b16 %v311
    %v1595 = vunpack.c.l.b16 %v312
    %v1596 = vunpack.c.h.b16 %v312
    %v1597 = vunpack.c.l.b16 %v313
    %v1598 = vunpack.c.h.b16 %v313
    %v1599 = vunpack.c.l.b16 %v314
    %v1600 = vunpack.c.h.b16 %v314
    %v1601 = vunpack.c.l.b16 %v315
    %v1602 = vunpack.c.h.b16 %v315
    %v1603 = vunpack.c.l.b16 %v316
    %v1604 = vunpack.c.h.b16 %v316
    %v1605 = vunpack.c.l.b16 %v317
    %v1606 = vunpack.c.h.b16 %v317
    %v1607 = vunpack.c.l.b16 %v318
    %v1608 = vunpack.c.h.b16 %v318
    %v1609 = vunpack.c.l.b16 %v319
    %v1610 = vunpack.c.h.b16 %v319
    %v1611 = vunpack.c.l.b16 %v320
    %v1612 = vunpack.c.h.b16 %v320
    %v1613 = vunpack.c.l.b16 %v321
    %v1614 = vunpack.c.h.b16 %v321
    %v1615 = vunpack.c.l.b16 %v322
    %v1616 = vunpack.c.h.b16 %v322
    %v1617 = vunpack.c.l.b16 %v323
    %v1618 = vunpack.c.h.b16 %v323
    %v1619 = vunpack.c.l.b16 %v324
    %v1620 = vunpack.c.h.b16 %v324
    %v1621 = vunpack.c.l.b16 %v325
    %v1622 = vunpack.c.h.b16 %v325
    %v1623 = vunpack.c.l.b16 %v326
    %v1624 = vunpack.c.h.b16 %v326
    %v1625 = vunpack.c.l.b16 %v327
    %v1626 = vunpack.c.h.b16 %v327
    %v1627 = vunpack.c.l.b16 %v328
    %v1628 = vunpack.c.h.b16 %v328
    %v1629 = vunpack.c.l.b16 %v329
    %v1630 = vunpack.c.h.b16 %v329
    %v1631 = vunpack.c.l.b16 %v330
    %v1632 = vunpack.c.h.b16 %v330
    %v1633 = vunpack.c.l.b16 %v331
    %v1634 = vunpack.c.h.b16 %v331
    %v1635 = vunpack.c.l.b16 %v332
    %v1636 = vunpack.c.h.b16 %v332
    %v1637 = vunpack.c.l.b16 %v333
    %v1638 = vunpack.c.h.b16 %v333
    %v1639 = vunpack.c.l.b16 %v334
    %v1640 = vunpack.c.h.b16 %v334
    %v1641 = vunpack.c.l.b16 %v335
    %v1642 = vunpack.c.h.b16 %v335
    %v1643 = vunpack.c.l.b16 %v336
    %v1644 = vunpack.c.h.b16 %v336
    %v1645 = vunpack.c.l.b16 %v337
    %v1646 = vunpack.c.h.b16 %v337
    %v1647 = vunpack.c.l.b16 %v338
    %v1648 = vunpack.c.h.b16 %v338
    %v1649 = vunpack.c.l.b16 %v339
    %v1650 = vunpack.c.h.b16 %v339
    %v1651 = vunpack.c.l.b16 %v340
    %v1652 = vunpack.c.h.b16 %v340
    %v1653 = vunpack.c.l.b16 %v341
    %v1654 = vunpack.c.h.b16 %v341
    %v1655 = vunpack.c.l.b16 %v342
    %v1656 = vunpack.c.h.b16 %v342
    %v1657 = vunpack.c.l.b16 %v343
    %v1658 = vunpack.c.h.b16 %v343
    %v1659 = vunpack.c.l.b16 %v344
    %v1660 = vunpack.c.h.b16 %v344
    %v1661 = vunpack.c.l.b16 %v345
    %v1662 = vunpack.c.h.b16 %v345
    %v1663 = vunpack.c.l.b16 %v346
    %v1664 = vunpack.c.h.b16 %v346
    %v1665 = vunpack.c.l.b16 %v347
    %v1666 = vunpack.c.h.b16 %v347
    %v1667 = vunpack.c.l.b16 %v348
    %v1668 = vunpack.c.h.b16 %v348
    %v1669 = vunpack.c.l.b16 %v349
    %v1670 = vunpack.c.h.b16 %v349
    %v1671 = vunpack.c.l.b16 %v350
    %v1672 = vunpack.c.h.b16 %v350
    %v1673 = vunpack.c.l.b16 %v351
    %v1674 = vunpack.c.h.b16 %v351
    %v1675 = vunpack.c.l.b16 %v352
    %v1676 = vunpack.c.h.b16 %v352
    %v1677 = vunpack.c.l.b16 %v353
    %v1678 = vunpack.c.h.b16 %v353
    %v1679 = vunpack.c.l.b16 %v354
    %v1680 = vunpack.c.h.b16 %v354
    %v1681 = vunpack.c.l.b16 %v355
    %v1682 = vunpack.c.h.b16 %v355
    %v1683 = vunpack.c.l.b16 %v356
    %v1684 = vunpack.c.h.b16 %v356
    %v1685 = vunpack.c.l.b16 %v357
    %v1686 = vunpack.c.h.b16 %v357
    %v1687 = vunpack.c.l.b16 %v358
    %v1688 = vunpack.c.h.b16 %v358
    %v1689 = vunpack.c.l.b16 %v359
    %v1690 = vunpack.c.h.b16 %v359
    %v1691 = vunpack.c.l.b16 %v360
    %v1692 = vunpack.c.h.b16 %v360
    %v1693 = vunpack.c.l.b16 %v361
    %v1694 = vunpack.c.h.b16 %v361
    %v1695 = vunpack.c.l.b16 %v362
    %v1696 = vunpack.c.h.b16 %v362
    %v1697 = vunpack.c.l.b16 %v363
    %v1698 = vunpack.c.h.b16 %v363
    %v1699 = vunpack.c.l.b16 %v364
    %v1700 = vunpack.c.h.b16 %v364
    %v1701 = vunpack.c.l.b16 %v365
    %v1702 = vunpack.c.h.b16 %v365
    %v1703 = vunpack.c.l.b16 %v366
    %v1704 = vunpack.c.h.b16 %v366
    %v1705 = vunpack.c.l.b16 %v367
    %v1706 = vunpack.c.h.b16 %v367
    %v1707 = vunpack.c.l.b16 %v368
    %v1708 = vunpack.c.h.b16 %v368
    %v1709 = vunpack.c.l.b16 %v369
    %v1710 = vunpack.c.h.b16 %v369
    %v1711 = vunpack.c.l.b16 %v370
    %v1712 = vunpack.c.h.b16 %v370
    %v1713 = vunpack.c.l.b16 %v371
    %v1714 = vunpack.c.h.b16 %v371
    %v1715 = vunpack.c.l.b16 %v372
    %v1716 = vunpack.c.h.b16 %v372
    %v1717 = vunpack.c.l.b16 %v373
    %v1718 = vunpack.c.h.b16 %v373
    %v1719 = vunpack.c.l.b16 %v374
    %v1720 = vunpack.c.h.b16 %v374
    %v1721 = vunpack.c.l.b16 %v375
    %v1722 = vunpack.c.h.b16 %v375
    %v1723 = vunpack.c.l.b16 %v376
    %v1724 = vunpack.c.h.b16 %v376
    %v1725 = vunpack.c.l.b16 %v377
    %v1726 = vunpack.c.h.b16 %v377
    %v1727 = vunpack.c.l.b16 %v378
    %v1728 = vunpack.c.h.b16 %v378
    %v1729 = vunpack.c.l.b16 %v379
    %v1730 = vunpack.c.h.b16 %v379
    %v1731 = vunpack.c.l.b16 %v380
    %v1732 = vunpack.c.h.b16 %v380
    %v1733 = vunpack.c.l.b16 %v381
    %v1734 = vunpack.c.h.b16 %v381
    %v1735 = vunpack.c.l.b16 %v382
    %v1736 = vunpack.c.h.b16 %v382
    %v1737 = vunpack.c.l.b16 %v383
    %v1738 = vunpack.c.h.b16 %v383
    %v1739 = vunpack.c.l.b16 %v384
    %v1740 = vunpack.c.h.b16 %v384
    %v1741 = vunpack.c.l.b16 %v385
    %v1742 = vunpack.c.h.b16 %v385
    %v1743 = vunpack.c.l.b16 %v386
    %v1744 = vunpack.c.h.b16 %v386
    %v1745 = vunpack.c.l.b16 %v387
    %v1746 = vunpack.c.h.b16 %v387
    %v1747 = vunpack.c.l.b16 %v388
    %v1748 = vunpack.c.h.b16 %v388
    %v1749 = vunpack.c.l.b16 %v389
    %v1750 = vunpack.c.h.b16 %v389
    %v1751 = vunpack.c.l.b16 %v390
    %v1752 = vunpack.c.h.b16 %v390
    %v1753 = vunpack.c.l.b16 %v391
    %v1754 = vunpack.c.h.b16 %v391
    %v1755 = vunpack.c.l.b16 %v392
    %v1756 = vunpack.c.h.b16 %v392
    %v1757 = vunpack.c.l.b16 %v393
    %v1758 = vunpack.c.h.b16 %v393
    %v1759 = vunpack.c.l.b16 %v394
    %v1760 = vunpack.c.h.b16 %v394
    %v1761 = vunpack.c.l.b16 %v395
    %v1762 = vunpack.c.h.b16 %v395
    %v1763 = vunpack.c.l.b16 %v396
    %v1764 = vunpack.c.h.b16 %v396
    %v1765 = vunpack.c.l.b16 %v397
    %v1766 = vunpack.c.h.b16 %v397
    %v1767 = vunpack.c.l.b16 %v398
    %v1768 = vunpack.c.h.b16 %v398
    %v1769 = vunpack.c.l.b16 %v399
    %v1770 = vunpack.c.h.b16 %v399
    %v1771 = vunpack.c.l.b16 %v400
    %v1772 = vunpack.c.h.b16 %v400
    %v1773 = vunpack.c.l.b16 %v401
    %v1774 = vunpack.c.h.b16 %v401
    %v1775 = vunpack.c.l.b16 %v402
    %v1776 = vunpack.c.h.b16 %v402
    %v1777 = vunpack.c.l.b16 %v403
    %v1778 = vunpack.c.h.b16 %v403
    %v1779 = vunpack.c.l.b16 %v404
    %v1780 = vunpack.c.h.b16 %v404
    %v1781 = vunpack.c.l.b16 %v405
    %v1782 = vunpack.c.h.b16 %v405
    %v1783 = vunpack.c.l.b16 %v406
    %v1784 = vunpack.c.h.b16 %v406
    %v1785 = vunpack.c.l.b16 %v407
    %v1786 = vunpack.c.h.b16 %v407
    %v1787 = vunpack.c.l.b16 %v408
    %v1788 = vunpack.c.h.b16 %v408
    %v1789 = vunpack.c.l.b16 %v409
    %v1790 = vunpack.c.h.b16 %v409
    %v1791 = vunpack.c.l.b16 %v410
    %v1792 = vunpack.c.h.b16 %v410
    %v1793 = vunpack.c.l.b16 %v411
    %v1794 = vunpack.c.h.b16 %v411
    %v1795 = vunpack.c.l.b16 %v412
    %v1796 = vunpack.c.h.b16 %v412
    %v1797 = vunpack.c.l.b16 %v413
    %v1798 = vunpack.c.h.b16 %v413
    %v1799 = vunpack.c.l.b16 %v414
    %v1800 = vunpack.c.h.b16 %v414
    %v1801 = vunpack.c.l.b16 %v415
    %v1802 = vunpack.c.h.b16 %v415
    %v1803 = vunpack.c.l.b16 %v416
    %v1804 = vunpack.c.h.b16 %v416
    %v1805 = vunpack.c.l.b16 %v417
    %v1806 = vunpack.c.h.b16 %v417
    %v1807 = vunpack.c.l.b16 %v418
    %v1808 = vunpack.c.h.b16 %v418
    %v1809 = vunpack.c.l.b16 %v419
    %v1810 = vunpack.c.h.b16 %v419
    %v1811 = vunpack.c.l.b16 %v420
    %v1812 = vunpack.c.h.b16 %v420
    %v1813 = vunpack.c.l.b16 %v421
    %v1814 = vunpack.c.h.b16 %v421
    %v1815 = vunpack.c.l.b16 %v422
    %v1816 = vunpack.c.h.b16 %v422
    %v1817 = vunpack.c.l.b16 %v423
    %v1818 = vunpack.c.h.b16 %v423
    %v1819 = vunpack.c.l.b16 %v424
    %v1820 = vunpack.c.h.b16 %v424
    %v1821 = vunpack.c.l.b16 %v425
    %v1822 = vunpack.c.h.b16 %v425
    %v1823 = vunpack.c.l.b16 %v426
    %v1824 = vunpack.c.h.b16 %v426
    %v1825 = vunpack.c.l.b16 %v427
    %v1826 = vunpack.c.h.b16 %v427
    %v1827 = vunpack.c.l.b16 %v428
    %v1828 = vunpack.c.h.b16 %v428
    %v1829 = vunpack.c.l.b16 %v429
    %v1830 = vunpack.c.h.b16 %v429
    %v1831 = vunpack.c.l.b16 %v430
    %v1832 = vunpack.c.h.b16 %v430
    %v1833 = vunpack.c.l.b16 %v431
    %v1834 = vunpack.c.h.b16 %v431
    %v1835 = vunpack.c.l.b16 %v432
    %v1836 = vunpack.c.h.b16 %v432
    %v1837 = vunpack.c.l.b16 %v433
    %v1838 = vunpack.c.h.b16 %v433
    %v1839 = vunpack.c.l.b16 %v434
    %v1840 = vunpack.c.h.b16 %v434
    %v1841 = vunpack.c.l.b16 %v435
    %v1842 = vunpack.c.h.b16 %v435
    %v1843 = vunpack.c.l.b16 %v436
    %v1844 = vunpack.c.h.b16 %v436
    %v1845 = vunpack.c.l.b16 %v437
    %v1846 = vunpack.c.h.b16 %v437
    %v1847 = vunpack.c.l.b16 %v438
    %v1848 = vunpack.c.h.b16 %v438
    %v1849 = vunpack.c.l.b16 %v439
    %v1850 = vunpack.c.h.b16 %v439
    %v1851 = vunpack.c.l.b16 %v440
    %v1852 = vunpack.c.h.b16 %v440
    %v1853 = vunpack.c.l.b16 %v441
    %v1854 = vunpack.c.h.b16 %v441
    %v1855 = vunpack.c.l.b16 %v442
    %v1856 = vunpack.c.h.b16 %v442
    %v1857 = vunpack.c.l.b16 %v443
    %v1858 = vunpack.c.h.b16 %v443
    %v1859 = vunpack.c.l.b16 %v444
    %v1860 = vunpack.c.h.b16 %v444
    %v1861 = vunpack.c.l.b16 %v445
    %v1862 = vunpack.c.h.b16 %v445
    %v1863 = vunpack.c.l.b16 %v446
    %v1864 = vunpack.c.h.b16 %v446
    %v1865 = vunpack.c.l.b16 %v447
    %v1866 = vunpack.c.h.b16 %v447
    %v1867 = vunpack.c.l.b16 %v448
    %v1868 = vunpack.c.h.b16 %v448
    %v1869 = vunpack.c.l.b16 %v449
    %v1870 = vunpack.c.h.b16 %v449
    %v1871 = vunpack.c.l.b16 %v450
    %v1872 = vunpack.c.h.b16 %v450
    %v1873 = vunpack.c.l.b16 %v451
    %v1874 = vunpack.c.h.b16 %v451
    %v1875 = vunpack.c.l.b16 %v452
    %v1876 = vunpack.c.h.b16 %v452
    %v1877 = vunpack.c.l.b16 %v453
    %v1878 = vunpack.c.h.b16 %v453
    %v1879 = vunpack.c.l.b16 %v454
    %v1880 = vunpack.c.h.b16 %v454
    %v1881 = vunpack.c.l.b16 %v455
    %v1882 = vunpack.c.h.b16 %v455
    %v1883 = vunpack.c.l.b16 %v456
    %v1884 = vunpack.c.h.b16 %v456
    %v1885 = vunpack.c.l.b16 %v457
    %v1886 = vunpack.c.h.b16 %v457
    %v1887 = vunpack.c.l.b16 %v458
    %v1888 = vunpack.c.h.b16 %v458
    %v1889 = vunpack.c.l.b16 %v459
    %v1890 = vunpack.c.h.b16 %v459
    %v1891 = vunpack.c.l.b16 %v460
    %v1892 = vunpack.c.h.b16 %v460
    %v1893 = vunpack.c.l.b16 %v461
    %v1894 = vunpack.c.h.b16 %v461
    %v1895 = vunpack.c.l.b16 %v462
    %v1896 = vunpack.c.h.b16 %v462
    %v1897 = vunpack.c.l.b16 %v463
    %v1898 = vunpack.c.h.b16 %v463
    %v1899 = vunpack.c.l.b16 %v464
    %v1900 = vunpack.c.h.b16 %v464
    %v1901 = vunpack.c.l.b16 %v465
    %v1902 = vunpack.c.h.b16 %v465
    %v1903 = vunpack.c.l.b16 %v466
    %v1904 = vunpack.c.h.b16 %v466
    %v1905 = vunpack.c.l.b16 %v467
    %v1906 = vunpack.c.h.b16 %v467
    %v1907 = vunpack.c.l.b16 %v468
    %v1908 = vunpack.c.h.b16 %v468
    %v1909 = vunpack.c.l.b16 %v469
    %v1910 = vunpack.c.h.b16 %v469
    %v1911 = vunpack.c.l.b16 %v470
    %v1912 = vunpack.c.h.b16 %v470
    %v1913 = vunpack.c.l.b16 %v471
    %v1914 = vunpack.c.h.b16 %v471
    %v1915 = vunpack.c.l.b16 %v472
    %v1916 = vunpack.c.h.b16 %v472
    %v1917 = vunpack.c.l.b16 %v473
    %v1918 = vunpack.c.h.b16 %v473
    %v1919 = vunpack.c.l.b16 %v474
    %v1920 = vunpack.c.h.b16 %v474
    %v1921 = vunpack.c.l.b16 %v475
    %v1922 = vunpack.c.h.b16 %v475
    %v1923 = vunpack.c.l.b16 %v476
    %v1924 = vunpack.c.h.b16 %v476
    %v1925 = vunpack.c.l.b16 %v477
    %v1926 = vunpack.c.h.b16 %v477
    %v1927 = vunpack.c.l.b16 %v478
    %v1928 = vunpack.c.h.b16 %v478
    %v1929 = vunpack.c.l.b16 %v479
    %v1930 = vunpack.c.h.b16 %v479
    %v1931 = vunpack.c.l.b16 %v480
    %v1932 = vunpack.c.h.b16 %v480
    %v1933 = vunpack.c.l.b16 %v481
    %v1934 = vunpack.c.h.b16 %v481
    %v1935 = vunpack.c.l.b16 %v482
    %v1936 = vunpack.c.h.b16 %v482
    %v1937 = vunpack.c.l.b16 %v483
    %v1938 = vunpack.c.h.b16 %v483
    %v1939 = vunpack.c.l.b16 %v484
    %v1940 = vunpack.c.h.b16 %v484
    %v1941 = vunpack.c.l.b16 %v485
    %v1942 = vunpack.c.h.b16 %v485
    %v1943 = vunpack.c.l.b16 %v486
    %v1944 = vunpack.c.h.b16 %v486
    %v1945 = vunpack.c.l.b16 %v487
    %v1946 = vunpack.c.h.b16 %v487
    %v1947 = vunpack.c.l.b16 %v488
    %v1948 = vunpack.c.h.b16 %v488
    %v1949 = vunpack.c.l.b16 %v489
    %v1950 = vunpack.c.h.b16 %v489
    %v1951 = vunpack.c.l.b16 %v490
    %v1952 = vunpack.c.h.b16 %v490
    %v1953 = vunpack.c.l.b16 %v491
    %v1954 = vunpack.c.h.b16 %v491
    %v1955 = vunpack.c.l.b16 %v492
    %v1956 = vunpack.c.h.b16 %v492
    %v1957 = vunpack.c.l.b16 %v493
    %v1958 = vunpack.c.h.b16 %v493
    %v1959 = vunpack.c.l.b16 %v494
    %v1960 = vunpack.c.h.b16 %v494
    %v1961 = vunpack.c.l.b16 %v495
    %v1962 = vunpack.c.h.b16 %v495
    %v1963 = vunpack.c.l.b16 %v496
    %v1964 = vunpack.c.h.b16 %v496
    %v1965 = vunpack.c.l.b16 %v497
    %v1966 = vunpack.c.h.b16 %v497
    %v1967 = vunpack.c.l.b16 %v498
    %v1968 = vunpack.c.h.b16 %v498
    %v1969 = vunpack.c.l.b16 %v499
    %v1970 = vunpack.c.h.b16 %v499
    %v1971 = vunpack.c.l.b16 %v500
    %v1972 = vunpack.c.h.b16 %v500
    %v1973 = vunpack.c.l.b16 %v501
    %v1974 = vunpack.c.h.b16 %v501
    %v1975 = vunpack.c.l.b16 %v502
    %v1976 = vunpack.c.h.b16 %v502
    %v1977 = vunpack.c.l.b16 %v503
    %v1978 = vunpack.c.h.b16 %v503
    %v1979 = vunpack.c.l.b16 %v504
    %v1980 = vunpack.c.h.b16 %v504
    %v1981 = vunpack.c.l.b16 %v505
    %v1982 = vunpack.c.h.b16 %v505
    %v1983 = vunpack.c.l.b16 %v506
    %v1984 = vunpack.c.h.b16 %v506
    %v1985 = vunpack.c.l.b16 %v507
    %v1986 = vunpack.c.h.b16 %v507
    %v1987 = vunpack.c.l.b16 %v508
    %v1988 = vunpack.c.h.b16 %v508
    %v1989 = vunpack.c.l.b16 %v509
    %v1990 = vunpack.c.h.b16 %v509
    %v1991 = vunpack.c.l.b16 %v510
    %v1992 = vunpack.c.h.b16 %v510
    %v1993 = vunpack.c.l.b16 %v511
    %v1994 = vunpack.c.h.b16 %v511
    %v1995 = vunpack.c.l.b16 %v512
    %v1996 = vunpack.c.h.b16 %v512
    %v1997 = vunpack.c.l.b16 %v513
    %v1998 = vunpack.c.h.b16 %v513
    %v1999 = vunpack.c.l.b16 %v514
    %v2000 = vunpack.c.h.b16 %v514
    %v2001 = vunpack.c.l.b16 %v515
    %v2002 = vunpack.c.h.b16 %v515
    %v2003 = vunpack.c.l.b16 %v516
    %v2004 = vunpack.c.h.b16 %v516
    %v2005 = vunpack.c.l.b16 %v517
    %v2006 = vunpack.c.h.b16 %v517
    %v2007 = vunpack.c.l.b16 %v518
    %v2008 = vunpack.c.h.b16 %v518
    %v2009 = vunpack.c.l.b16 %v519
    %v2010 = vunpack.c.h.b16 %v519
    %v2011 = vunpack.c.l.b16 %v520
    %v2012 = vunpack.c.h.b16 %v520
    %v2013 = vunpack.c.l.b16 %v521
    %v2014 = vunpack.c.h.b16 %v521
    %v2015 = vunpack.c.l.b16 %v522
    %v2016 = vunpack.c.h.b16 %v522
    %v2017 = vunpack.c.l.b16 %v523
    %v2018 = vunpack.c.h.b16 %v523
    %v2019 = vunpack.c.l.b16 %v524
    %v2020 = vunpack.c.h.b16 %v524
    %v2021 = vunpack.c.l.b16 %v525
    %v2022 = vunpack.c.h.b16 %v525
    %v2023 = vunpack.c.l.b16 %v526
    %v2024 = vunpack.c.h.b16 %v526
    %v2025 = vunpack.c.l.b16 %v527
    %v2026 = vunpack.c.h.b16 %v527
    %v2027 = vunpack.c.l.b16 %v528
    %v2028 = vunpack.c.h.b16 %v528
    %v2029 = vunpack.c.l.b16 %v529
    %v2030 = vunpack.c.h.b16 %v529
    %v2031 = vunpack.c.l.b16 %v530
    %v2032 = vunpack.c.h.b16 %v530
    %v2033 = vunpack.c.l.b16 %v531
    %v2034 = vunpack.c.h.b16 %v531
    %v2035 = vunpack.c.l.b16 %v532
    %v2036 = vunpack.c.h.b16 %v532
    %v2037 = vunpack.c.l.b16 %v533
    %v2038 = vunpack.c.h.b16 %v533
    %v2039 = vunpack.c.l.b16 %v534
    %v2040 = vunpack.c.h.b16 %v534
    %v2041 = vunpack.c.l.b16 %v535
    %v2042 = vunpack.c.h.b16 %v535
    %v2043 = vunpack.c.l.b16 %v536
    %v2044 = vunpack.c.h.b16 %v536
    %v2045 = vunpack.c.l.b16 %v537
    %v2046 = vunpack.c.h.b16 %v537
    %v2047 = vunpack.c.l.b16 %v538
    %v2048 = vunpack.c.h.b16 %v538
    %v2049 = vunpack.c.l.b16 %v539
    %v2050 = vunpack.c.h.b16 %v539
    %v2051 = vunpack.c.l.b16 %v540
    %v2052 = vunpack.c.h.b16 %v540
    %v2053 = vunpack.c.l.b16 %v541
    %v2054 = vunpack.c.h.b16 %v541
    %v2055 = vunpack.c.l.b16 %v542
    %v2056 = vunpack.c.h.b16 %v542
    %v2057 = vunpack.c.l.b16 %v543
    %v2058 = vunpack.c.h.b16 %v543
    %v2059 = vunpack.c.l.b16 %v544
    %v2060 = vunpack.c.h.b16 %v544
    %v2061 = vunpack.c.l.b16 %v545
    %v2062 = vunpack.c.h.b16 %v545
    %v2063 = vunpack.c.l.b16 %v546
    %v2064 = vunpack.c.h.b16 %v546
    %v2065 = vunpack.c.l.b16 %v547
    %v2066 = vunpack.c.h.b16 %v547
    %v2067 = vunpack.c.l.b16 %v548
    %v2068 = vunpack.c.h.b16 %v548
    %v2069 = vunpack.c.l.b16 %v549
    %v2070 = vunpack.c.h.b16 %v549
    %v2071 = vunpack.c.l.b16 %v550
    %v2072 = vunpack.c.h.b16 %v550
    %v2073 = vunpack.c.l.b16 %v551
    %v2074 = vunpack.c.h.b16 %v551
    %v2075 = vunpack.c.l.b16 %v552
    %v2076 = vunpack.c.h.b16 %v552
    %v2077 = vunpack.c.l.b16 %v553
    %v2078 = vunpack.c.h.b16 %v553
    %v2079 = vunpack.c.l.b16 %v554
    %v2080 = vunpack.c.h.b16 %v554
    %v2081 = vunpack.c.l.b16 %v555
    %v2082 = vunpack.c.h.b16 %v555
    %v2083 = vunpack.c.l.b16 %v556
    %v2084 = vunpack.c.h.b16 %v556
    %v2085 = vunpack.c.l.b16 %v557
    %v2086 = vunpack.c.h.b16 %v557
    %v2087 = vunpack.c.l.b16 %v558
    %v2088 = vunpack.c.h.b16 %v558
    %v2089 = vunpack.c.l.b16 %v559
    %v2090 = vunpack.c.h.b16 %v559
    %v2091 = vunpack.c.l.b16 %v560
    %v2092 = vunpack.c.h.b16 %v560
    %v2093 = vunpack.c.l.b16 %v561
    %v2094 = vunpack.c.h.b16 %v561
    %v2095 = vunpack.c.l.b16 %v562
    %v2096 = vunpack.c.h.b16 %v562
    %v2097 = vunpack.c.l.b16 %v563
    %v2098 = vunpack.c.h.b16 %v563
    %v2099 = vunpack.c.l.b16 %v564
    %v2100 = vunpack.c.h.b16 %v564
    %v2101 = vunpack.c.l.b16 %v565
    %v2102 = vunpack.c.h.b16 %v565
    %v2103 = vunpack.c.l.b16 %v566
    %v2104 = vunpack.c.h.b16 %v566
    %v2105 = vunpack.c.l.b16 %v567
    %v2106 = vunpack.c.h.b16 %v567
    %v2107 = vunpack.c.l.b16 %v568
    %v2108 = vunpack.c.h.b16 %v568
    %v2109 = vunpack.c.l.b16 %v569
    %v2110 = vunpack.c.h.b16 %v569
    %v2111 = vunpack.c.l.b16 %v570
    %v2112 = vunpack.c.h.b16 %v570
    %v2113 = vunpack.c.l.b16 %v571
    %v2114 = vunpack.c.h.b16 %v571
    %v2115 = vunpack.c.l.b16 %v572
    %v2116 = vunpack.c.h.b16 %v572
    %v2117 = vunpack.c.l.b16 %v573
    %v2118 = vunpack.c.h.b16 %v573
    %v2119 = vunpack.c.l.b16 %v574
    %v2120 = vunpack.c.h.b16 %v574
    %v2121 = vunpack.c.l.b16 %v575
    %v2122 = vunpack.c.h.b16 %v575
    %v2123 = vunpack.c.l.b16 %v576
    %v2124 = vunpack.c.h.b16 %v576
    %v2125 = vunpack.c.l.b16 %v577
    %v2126 = vunpack.c.h.b16 %v577
    %v2127 = vunpack.c.l.b16 %v578
    %v2128 = vunpack.c.h.b16 %v578
    %v2129 = vunpack.c.l.b16 %v579
    %v2130 = vunpack.c.h.b16 %v579
    %v2131 = vunpack.c.l.b16 %v580
    %v2132 = vunpack.c.h.b16 %v580
    %v2133 = vunpack.c.l.b16 %v581
    %v2134 = vunpack.c.h.b16 %v581
    %v2135 = vunpack.c.l.b16 %v582
    %v2136 = vunpack.c.h.b16 %v582
    %v2137 = vunpack.c.l.b16 %v583
    %v2138 = vunpack.c.h.b16 %v583
    %v2139 = vunpack.c.l.b16 %v584
    %v2140 = vunpack.c.h.b16 %v584
    %v2141 = vunpack.c.l.b16 %v585
    %v2142 = vunpack.c.h.b16 %v585
    %v2143 = vunpack.c.l.b16 %v586
    %v2144 = vunpack.c.h.b16 %v586
    %v2145 = vunpack.c.l.b16 %v587
    %v2146 = vunpack.c.h.b16 %v587
    %v2147 = vunpack.c.l.b16 %v588
    %v2148 = vunpack.c.h.b16 %v588
    %v2149 = vunpack.c.l.b16 %v589
    %v2150 = vunpack.c.h.b16 %v589
    %v2151 = vunpack.c.l.b16 %v590
    %v2152 = vunpack.c.h.b16 %v590
    %v2153 = vunpack.c.l.b16 %v591
    %v2154 = vunpack.c.h.b16 %v591
    %v2155 = vunpack.c.l.b16 %v592
    %v2156 = vunpack.c.h.b16 %v592
    %v2157 = vunpack.c.l.b16 %v593
    %v2158 = vunpack.c.h.b16 %v593
    %v2159 = vunpack.c.l.b16 %v594
    %v2160 = vunpack.c.h.b16 %v594
    %v2161 = vunpack.c.l.b16 %v595
    %v2162 = vunpack.c.h.b16 %v595
    %v2163 = vunpack.c.l.b16 %v596
    %v2164 = vunpack.c.h.b16 %v596
    %v2165 = vunpack.c.l.b16 %v597
    %v2166 = vunpack.c.h.b16 %v597
    %v2167 = vunpack.c.l.b16 %v598
    %v2168 = vunpack.c.h.b16 %v598
    %v2169 = vunpack.c.l.b16 %v599
    %v2170 = vunpack.c.h.b16 %v599
    %v2171 = vunpack.c.l.b16 %v600
    %v2172 = vunpack.c.h.b16 %v600
    %v2173 = vunpack.c.l.b16 %v601
    %v2174 = vunpack.c.h.b16 %v601
    %v2175 = vunpack.c.l.b16 %v602
    %v2176 = vunpack.c.h.b16 %v602
    %v2177 = vunpack.c.l.b16 %v603
    %v2178 = vunpack.c.h.b16 %v603
    %v2179 = vunpack.c.l.b16 %v604
    %v2180 = vunpack.c.h.b16 %v604
    %v2181 = vunpack.c.l.b16 %v605
    %v2182 = vunpack.c.h.b16 %v605
    %v2183 = vunpack.c.l.b16 %v606
    %v2184 = vunpack.c.h.b16 %v606
    %v2185 = vunpack.c.l.b16 %v607
    %v2186 = vunpack.c.h.b16 %v607
    %v2187 = vunpack.c.l.b16 %v608
    %v2188 = vunpack.c.h.b16 %v608
    %v2189 = vunpack.c.l.b16 %v609
    %v2190 = vunpack.c.h.b16 %v609
    %v2191 = vunpack.c.l.b16 %v610
    %v2192 = vunpack.c.h.b16 %v610
    %v2193 = vunpack.c.l.b16 %v611
    %v2194 = vunpack.c.h.b16 %v611
    %v2195 = vunpack.c.l.b16 %v612
    %v2196 = vunpack.c.h.b16 %v612
    %v2197 = vunpack.c.l.b16 %v613
    %v2198 = vunpack.c.h.b16 %v613
    %v2199 = vunpack.c.l.b16 %v614
    %v2200 = vunpack.c.h.b16 %v614
    %v2201 = vunpack.c.l.b16 %v615
    %v2202 = vunpack.c.h.b16 %v615
    %v2203 = vunpack.c.l.b16 %v616
    %v2204 = vunpack.c.h.b16 %v616
    %v2205 = vunpack.c.l.b16 %v617
    %v2206 = vunpack.c.h.b16 %v617
    %v2207 = vunpack.c.l.b16 %v618
    %v2208 = vunpack.c.h.b16 %v618
    %v2209 = vunpack.c.l.b16 %v619
    %v2210 = vunpack.c.h.b16 %v619
    %v2211 = vunpack.c.l.b16 %v620
    %v2212 = vunpack.c.h.b16 %v620
    %v2213 = vunpack.c.l.b16 %v621
    %v2214 = vunpack.c.h.b16 %v621
    %v2215 = vunpack.c.l.b16 %v622
    %v2216 = vunpack.c.h.b16 %v622
    %v2217 = vunpack.c.l.b16 %v623
    %v2218 = vunpack.c.h.b16 %v623
    %v2219 = vunpack.c.l.b16 %v624
    %v2220 = vunpack.c.h.b16 %v624
    %v2221 = vunpack.c.l.b16 %v625
    %v2222 = vunpack.c.h.b16 %v625
    %v2223 = vunpack.c.l.b16 %v626
    %v2224 = vunpack.c.h.b16 %v626
    %v2225 = vunpack.c.l.b16 %v627
    %v2226 = vunpack.c.h.b16 %v627
    %v2227 = vunpack.c.l.b16 %v628
    %v2228 = vunpack.c.h.b16 %v628
    %v2229 = vunpack.c.l.b16 %v629
    %v2230 = vunpack.c.h.b16 %v629
    %v2231 = vunpack.c.l.b16 %v630
    %v2232 = vunpack.c.h.b16 %v630
    %v2233 = vunpack.c.l.b16 %v631
    %v2234 = vunpack.c.h.b16 %v631
    %v2235 = vunpack.c.l.b16 %v632
    %v2236 = vunpack.c.h.b16 %v632
    %v2237 = vunpack.c.l.b16 %v633
    %v2238 = vunpack.c.h.b16 %v633
    %v2239 = vunpack.c.l.b16 %v634
    %v2240 = vunpack.c.h.b16 %v634
    %v2241 = vpack.c.b16 %v1225, %v1217
    %v2242 = vpack.c.b16 %v1226, %v1218
    %v2243 = vpack.c.b16 %v1227, %v1219
    %v2244 = vpack.c.b16 %v1228, %v1220
    %v2245 = vpack.c.b16 %v1229, %v1221
    %v2246 = vpack.c.b16 %v1230, %v1222
    %v2247 = vpack.c.b16 %v1231, %v1223
    %v2248 = vpack.c.b16 %v1232, %v1224
    %v2249 = vpack.c.b16 %v1241, %v1233
    %v2250 = vpack.c.b16 %v1242, %v1234
    %v2251 = vpack.c.b16 %v1243, %v1235
    %v2252 = vpack.c.b16 %v1244, %v1236
    %v2253 = vpack.c.b16 %v1245, %v1237
    %v2254 = vpack.c.b16 %v1246, %v1238
    %v2255 = vpack.c.b16 %v1247, %v1239
    %v2256 = vpack.c.b16 %v1248, %v1240
    %v2257 = vpack.c.b16 %v1257, %v1249
    %v2258 = vpack.c.b16 %v1258, %v1250
    %v2259 = vpack.c.b16 %v1259, %v1251
    %v2260 = vpack.c.b16 %v1260, %v1252
    %v2261 = vpack.c.b16 %v1261, %v1253
    %v2262 = vpack.c.b16 %v1262, %v1254
    %v2263 = vpack.c.b16 %v1263, %v1255
    %v2264 = vpack.c.b16 %v1264, %v1256
    %v2265 = vpack.c.b16 %v1273, %v1265
    %v2266 = vpack.c.b16 %v1274, %v1266
    %v2267 = vpack.c.b16 %v1275, %v1267
    %v2268 = vpack.c.b16 %v1276, %v1268
    %v2269 = vpack.c.b16 %v1277, %v1269
    %v2270 = vpack.c.b16 %v1278, %v1270
    %v2271 = vpack.c.b16 %v1279, %v1271
    %v2272 = vpack.c.b16 %v1280, %v1272
    %v2273 = vpack.c.b16 %v1289, %v1281
    %v2274 = vpack.c.b16 %v1290, %v1282
    %v2275 = vpack.c.b16 %v1291, %v1283
    %v2276 = vpack.c.b16 %v1292, %v1284
    %v2277 = vpack.c.b16 %v1293, %v1285
    %v2278 = vpack.c.b16 %v1294, %v1286
    %v2279 = vpack.c.b16 %v1295, %v1287
    %v2280 = vpack.c.b16 %v1296, %v1288
    %v2281 = vpack.c.b16 %v1305, %v1297
    %v2282 = vpack.c.b16 %v1306, %v1298
    %v2283 = vpack.c.b16 %v1307, %v1299
    %v2284 = vpack.c.b16 %v1308, %v1300
    %v2285 = vpack.c.b16 %v1309, %v1301
    %v2286 = vpack.c.b16 %v1310, %v1302
    %v2287 = vpack.c.b16 %v1311, %v1303
    %v2288 = vpack.c.b16 %v1312, %v1304
    %v2289 = vpack.c.b16 %v1321, %v1313
    %v2290 = vpack.c.b16 %v1322, %v1314
    %v2291 = vpack.c.b16 %v1323, %v1315
    %v2292 = vpack.c.b16 %v1324, %v1316
    %v2293 = vpack.c.b16 %v1325, %v1317
    %v2294 = vpack.c.b16 %v1326, %v1318
    %v2295 = vpack.c.b16 %v1327, %v1319
    %v2296 = vpack.c.b16 %v1328, %v1320
    %v2297 = vpack.c.b16 %v1337, %v1329
    %v2298 = vpack.c.b16 %v1338, %v1330
    %v2299 = vpack.c.b16 %v1339, %v1331
    %v2300 = vpack.c.b16 %v1340, %v1332
    %v2301 = vpack.c.b16 %v1341, %v1333
    %v2302 = vpack.c.b16 %v1342, %v1334
    %v2303 = vpack.c.b16 %v1343, %v1335
    %v2304 = vpack.c.b16 %v1344, %v1336
    %v2305 = vpack.c.b16 %v1353, %v1345
    %v2306 = vpack.c.b16 %v1354, %v1346
    %v2307 = vpack.c.b16 %v1355, %v1347
    %v2308 = vpack.c.b16 %v1356, %v1348
    %v2309 = vpack.c.b16 %v1357, %v1349
    %v2310 = vpack.c.b16 %v1358, %v1350
    %v2311 = vpack.c.b16 %v1359, %v1351
    %v2312 = vpack.c.b16 %v1360, %v1352
    %v2313 = vpack.c.b16 %v1369, %v1361
    %v2314 = vpack.c.b16 %v1370, %v1362
    %v2315 = vpack.c.b16 %v1371, %v1363
    %v2316 = vpack.c.b16 %v1372, %v1364
    %v2317 = vpack.c.b16 %v1373, %v1365
    %v2318 = vpack.c.b16 %v1374, %v1366
    %v2319 = vpack.c.b16 %v1375, %v1367
    %v2320 = vpack.c.b16 %v1376, %v1368
    %v2321 = vpack.c.b16 %v1385, %v1377
    %v2322 = vpack.c.b16 %v1386, %v1378
    %v2323 = vpack.c.b16 %v1387, %v1379
    %v2324 = vpack.c.b16 %v1388, %v1380
    %v2325 = vpack.c.b16 %v1389, %v1381
    %v2326 = vpack.c.b16 %v1390, %v1382
    %v2327 = vpack.c.b16 %v1391, %v1383
    %v2328 = vpack.c.b16 %v1392, %v1384
    %v2329 = vpack.c.b16 %v1401, %v1393
    %v2330 = vpack.c.b16 %v1402, %v1394
    %v2331 = vpack.c.b16 %v1403, %v1395
    %v2332 = vpack.c.b16 %v1404, %v1396
    %v2333 = vpack.c.b16 %v1405, %v1397
    %v2334 = vpack.c.b16 %v1406, %v1398
    %v2335 = vpack.c.b16 %v1407, %v1399
    %v2336 = vpack.c.b16 %v1408, %v1400
    %v2337 = vpack.c.b16 %v1417, %v1409
    %v2338 = vpack.c.b16 %v1418, %v1410
    %v2339 = vpack.c.b16 %v1419, %v1411
    %v2340 = vpack.c.b16 %v1420, %v1412
    %v2341 = vpack.c.b16 %v1421, %v1413
    %v2342 = vpack.c.b16 %v1422, %v1414
    %v2343 = vpack.c.b16 %v1423, %v1415
    %v2344 = vpack.c.b16 %v1424, %v1416
    %v2345 = vpack.c.b16 %v1433, %v1425
    %v2346 = vpack.c.b16 %v1434, %v1426
    %v2347 = vpack.c.b16 %v1435, %v1427
    %v2348 = vpack.c.b16 %v1436, %v1428
    %v2349 = vpack.c.b16 %v1437, %v1429
    %v2350 = vpack.c.b16 %v1438, %v1430
    %v2351 = vpack.c.b16 %v1439, %v1431
    %v2352 = vpack.c.b16 %v1440, %v1432
    %v2353 = vpack.c.b16 %v1449, %v1441
    %v2354 = vpack.c.b16 %v1450, %v1442
    %v2355 = vpack.c.b16 %v1451, %v1443
    %v2356 = vpack.c.b16 %v1452, %v1444
    %v2357 = vpack.c.b16 %v1453, %v1445
    %v2358 = vpack.c.b16 %v1454, %v1446
    %v2359 = vpack.c.b16 %v1455, %v1447
    %v2360 = vpack.c.b16 %v1456, %v1448
    %v2361 = vpack.c.b16 %v1465, %v1457
    %v2362 = vpack.c.b16 %v1466, %v1458
    %v2363 = vpack.c.b16 %v1467, %v1459
    %v2364 = vpack.c.b16 %v1468, %v1460
    %v2365 = vpack.c.b16 %v1469, %v1461
    %v2366 = vpack.c.b16 %v1470, %v1462
    %v2367 = vpack.c.b16 %v1471, %v1463
    %v2368 = vpack.c.b16 %v1472, %v1464
    %v2369 = vpack.c.b16 %v1481, %v1473
    %v2370 = vpack.c.b16 %v1482, %v1474
    %v2371 = vpack.c.b16 %v1483, %v1475
    %v2372 = vpack.c.b16 %v1484, %v1476
    %v2373 = vpack.c.b16 %v1485, %v1477
    %v2374 = vpack.c.b16 %v1486, %v1478
    %v2375 = vpack.c.b16 %v1487, %v1479
    %v2376 = vpack.c.b16 %v1488, %v1480
    %v2377 = vpack.c.b16 %v1497, %v1489
    %v2378 = vpack.c.b16 %v1498, %v1490
    %v2379 = vpack.c.b16 %v1499, %v1491
    %v2380 = vpack.c.b16 %v1500, %v1492
    %v2381 = vpack.c.b16 %v1501, %v1493
    %v2382 = vpack.c.b16 %v1502, %v1494
    %v2383 = vpack.c.b16 %v1503, %v1495
    %v2384 = vpack.c.b16 %v1504, %v1496
    %v2385 = vpack.c.b16 %v1513, %v1505
    %v2386 = vpack.c.b16 %v1514, %v1506
    %v2387 = vpack.c.b16 %v1515, %v1507
    %v2388 = vpack.c.b16 %v1516, %v1508
    %v2389 = vpack.c.b16 %v1517, %v1509
    %v2390 = vpack.c.b16 %v1518, %v1510
    %v2391 = vpack.c.b16 %v1519, %v1511
    %v2392 = vpack.c.b16 %v1520, %v1512
    %v2393 = vpack.c.b16 %v1529, %v1521
    %v2394 = vpack.c.b16 %v1530, %v1522
    %v2395 = vpack.c.b16 %v1531, %v1523
    %v2396 = vpack.c.b16 %v1532, %v1524
    %v2397 = vpack.c.b16 %v1533, %v1525
    %v2398 = vpack.c.b16 %v1534, %v1526
    %v2399 = vpack.c.b16 %v1535, %v1527
    %v2400 = vpack.c.b16 %v1536, %v1528
    %v2401 = vpack.c.b16 %v1545, %v1537
    %v2402 = vpack.c.b16 %v1546, %v1538
    %v2403 = vpack.c.b16 %v1547, %v1539
    %v2404 = vpack.c.b16 %v1548, %v1540
    %v2405 = vpack.c.b16 %v1549, %v1541
    %v2406 = vpack.c.b16 %v1550, %v1542
    %v2407 = vpack.c.b16 %v1551, %v1543
    %v2408 = vpack.c.b16 %v1552, %v1544
    %v2409 = vpack.c.b16 %v1561, %v1553
    %v2410 = vpack.c.b16 %v1562, %v1554
    %v2411 = vpack.c.b16 %v1563, %v1555
    %v2412 = vpack.c.b16 %v1564, %v1556
    %v2413 = vpack.c.b16 %v1565, %v1557
    %v2414 = vpack.c.b16 %v1566, %v1558
    %v2415 = vpack.c.b16 %v1567, %v1559
    %v2416 = vpack.c.b16 %v1568, %v1560
    %v2417 = vpack.c.b16 %v1577, %v1569
    %v2418 = vpack.c.b16 %v1578, %v1570
    %v2419 = vpack.c.b16 %v1579, %v1571
    %v2420 = vpack.c.b16 %v1580, %v1572
    %v2421 = vpack.c.b16 %v1581, %v1573
    %v2422 = vpack.c.b16 %v1582, %v1574
    %v2423 = vpack.c.b16 %v1583, %v1575
    %v2424 = vpack.c.b16 %v1584, %v1576
    %v2425 = vpack.c.b16 %v1593, %v1585
    %v2426 = vpack.c.b16 %v1594, %v1586
    %v2427 = vpack.c.b16 %v1595, %v1587
    %v2428 = vpack.c.b16 %v1596, %v1588
    %v2429 = vpack.c.b16 %v1597, %v1589
    %v2430 = vpack.c.b16 %v1598, %v1590
    %v2431 = vpack.c.b16 %v1599, %v1591
    %v2432 = vpack.c.b16 %v1600, %v1592
    %v2433 = vpack.c.b16 %v1609, %v1601
    %v2434 = vpack.c.b16 %v1610, %v1602
    %v2435 = vpack.c.b16 %v1611, %v1603
    %v2436 = vpack.c.b16 %v1612, %v1604
    %v2437 = vpack.c.b16 %v1613, %v1605
    %v2438 = vpack.c.b16 %v1614, %v1606
    %v2439 = vpack.c.b16 %v1615, %v1607
    %v2440 = vpack.c.b16 %v1616, %v1608
    %v2441 = vpack.c.b16 %v1625, %v1617
    %v2442 = vpack.c.b16 %v1626, %v1618
    %v2443 = vpack.c.b16 %v1627, %v1619
    %v2444 = vpack.c.b16 %v1628, %v1620
    %v2445 = vpack.c.b16 %v1629, %v1621
    %v2446 = vpack.c.b16 %v1630, %v1622
    %v2447 = vpack.c.b16 %v1631, %v1623
    %v2448 = vpack.c.b16 %v1632, %v1624
    %v2449 = vpack.c.b16 %v1641, %v1633
    %v2450 = vpack.c.b16 %v1642, %v1634
    %v2451 = vpack.c.b16 %v1643, %v1635
    %v2452 = vpack.c.b16 %v1644, %v1636
    %v2453 = vpack.c.b16 %v1645, %v1637
    %v2454 = vpack.c.b16 %v1646, %v1638
    %v2455 = vpack.c.b16 %v1647, %v1639
    %v2456 = vpack.c.b16 %v1648, %v1640
    %v2457 = vpack.c.b16 %v1657, %v1649
    %v2458 = vpack.c.b16 %v1658, %v1650
    %v2459 = vpack.c.b16 %v1659, %v1651
    %v2460 = vpack.c.b16 %v1660, %v1652
    %v2461 = vpack.c.b16 %v1661, %v1653
    %v2462 = vpack.c.b16 %v1662, %v1654
    %v2463 = vpack.c.b16 %v1663, %v1655
    %v2464 = vpack.c.b16 %v1664, %v1656
    %v2465 = vpack.c.b16 %v1673, %v1665
    %v2466 = vpack.c.b16 %v1674, %v1666
    %v2467 = vpack.c.b16 %v1675, %v1667
    %v2468 = vpack.c.b16 %v1676, %v1668
    %v2469 = vpack.c.b16 %v1677, %v1669
    %v2470 = vpack.c.b16 %v1678, %v1670
    %v2471 = vpack.c.b16 %v1679, %v1671
    %v2472 = vpack.c.b16 %v1680, %v1672
    %v2473 = vpack.c.b16 %v1689, %v1681
    %v2474 = vpack.c.b16 %v1690, %v1682
    %v2475 = vpack.c.b16 %v1691, %v1683
    %v2476 = vpack.c.b16 %v1692, %v1684
    %v2477 = vpack.c.b16 %v1693, %v1685
    %v2478 = vpack.c.b16 %v1694, %v1686
    %v2479 = vpack.c.b16 %v1695, %v1687
    %v2480 = vpack.c.b16 %v1696, %v1688
    %v2481 = vpack.c.b16 %v1705, %v1697
    %v2482 = vpack.c.b16 %v1706, %v1698
    %v2483 = vpack.c.b16 %v1707, %v1699
    %v2484 = vpack.c.b16 %v1708, %v1700
    %v2485 = vpack.c.b16 %v1709, %v1701
    %v2486 = vpack.c.b16 %v1710, %v1702
    %v2487 = vpack.c.b16 %v1711, %v1703
    %v2488 = vpack.c.b16 %v1712, %v1704
    %v2489 = vpack.c.b16 %v1721, %v1713
    %v2490 = vpack.c.b16 %v1722, %v1714
    %v2491 = vpack.c.b16 %v1723, %v1715
    %v2492 = vpack.c.b16 %v1724, %v1716
    %v2493 = vpack.c.b16 %v1725, %v1717
    %v2494 = vpack.c.b16 %v1726, %v1718
    %v2495 = vpack.c.b16 %v1727, %v1719
    %v2496 = vpack.c.b16 %v1728, %v1720
    %v2497 = vpack.c.b16 %v1737, %v1729
    %v2498 = vpack.c.b16 %v1738, %v1730
    %v2499 = vpack.c.b16 %v1739, %v1731
    %v2500 = vpack.c.b16 %v1740, %v1732
    %v2501 = vpack.c.b16 %v1741, %v1733
    %v2502 = vpack.c.b16 %v1742, %v1734
    %v2503 = vpack.c.b16 %v1743, %v1735
    %v2504 = vpack.c.b16 %v1744, %v1736
    %v2505 = vpack.c.b16 %v1753, %v1745
    %v2506 = vpack.c.b16 %v1754, %v1746
    %v2507 = vpack.c.b16 %v1755, %v1747
    %v2508 = vpack.c.b16 %v1756, %v1748
    %v2509 = vpack.c.b16 %v1757, %v1749
    %v2510 = vpack.c.b16 %v1758, %v1750
    %v2511 = vpack.c.b16 %v1759, %v1751
    %v2512 = vpack.c.b16 %v1760, %v1752
    %v2513 = vpack.c.b16 %v1769, %v1761
    %v2514 = vpack.c.b16 %v1770, %v1762
    %v2515 = vpack.c.b16 %v1771, %v1763
    %v2516 = vpack.c.b16 %v1772, %v1764
    %v2517 = vpack.c.b16 %v1773, %v1765
    %v2518 = vpack.c.b16 %v1774, %v1766
    %v2519 = vpack.c.b16 %v1775, %v1767
    %v2520 = vpack.c.b16 %v1776, %v1768
    %v2521 = vpack.c.b16 %v1785, %v1777
    %v2522 = vpack.c.b16 %v1786, %v1778
    %v2523 = vpack.c.b16 %v1787, %v1779
    %v2524 = vpack.c.b16 %v1788, %v1780
    %v2525 = vpack.c.b16 %v1789, %v1781
    %v2526 = vpack.c.b16 %v1790, %v1782
    %v2527 = vpack.c.b16 %v1791, %v1783
    %v2528 = vpack.c.b16 %v1792, %v1784
    %v2529 = vpack.c.b16 %v1801, %v1793
    %v2530 = vpack.c.b16 %v1802, %v1794
    %v2531 = vpack.c.b16 %v1803, %v1795
    %v2532 = vpack.c.b16 %v1804, %v1796
    %v2533 = vpack.c.b16 %v1805, %v1797
    %v2534 = vpack.c.b16 %v1806, %v1798
    %v2535 = vpack.c.b16 %v1807, %v1799
    %v2536 = vpack.c.b16 %v1808, %v1800
    %v2537 = vpack.c.b16 %v1817, %v1809
    %v2538 = vpack.c.b16 %v1818, %v1810
    %v2539 = vpack.c.b16 %v1819, %v1811
    %v2540 = vpack.c.b16 %v1820, %v1812
    %v2541 = vpack.c.b16 %v1821, %v1813
    %v2542 = vpack.c.b16 %v1822, %v1814
    %v2543 = vpack.c.b16 %v1823, %v1815
    %v2544 = vpack.c.b16 %v1824, %v1816
    %v2545 = vpack.c.b16 %v1833, %v1825
    %v2546 = vpack.c.b16 %v1834, %v1826
    %v2547 = vpack.c.b16 %v1835, %v1827
    %v2548 = vpack.c.b16 %v1836, %v1828
    %v2549 = vpack.c.b16 %v1837, %v1829
    %v2550 = vpack.c.b16 %v1838, %v1830
    %v2551 = vpack.c.b16 %v1839, %v1831
    %v2552 = vpack.c.b16 %v1840, %v1832
    %v2553 = vpack.c.b16 %v1849, %v1841
    %v2554 = vpack.c.b16 %v1850, %v1842
    %v2555 = vpack.c.b16 %v1851, %v1843
    %v2556 = vpack.c.b16 %v1852, %v1844
    %v2557 = vpack.c.b16 %v1853, %v1845
    %v2558 = vpack.c.b16 %v1854, %v1846
    %v2559 = vpack.c.b16 %v1855, %v1847
    %v2560 = vpack.c.b16 %v1856, %v1848
    %v2561 = vpack.c.b16 %v1865, %v1857
    %v2562 = vpack.c.b16 %v1866, %v1858
    %v2563 = vpack.c.b16 %v1867, %v1859
    %v2564 = vpack.c.b16 %v1868, %v1860
    %v2565 = vpack.c.b16 %v1869, %v1861
    %v2566 = vpack.c.b16 %v1870, %v1862
    %v2567 = vpack.c.b16 %v1871, %v1863
    %v2568 = vpack.c.b16 %v1872, %v1864
    %v2569 = vpack.c.b16 %v1881, %v1873
    %v2570 = vpack.c.b16 %v1882, %v1874
    %v2571 = vpack.c.b16 %v1883, %v1875
    %v2572 = vpack.c.b16 %v1884, %v1876
    %v2573 = vpack.c.b16 %v1885, %v1877
    %v2574 = vpack.c.b16 %v1886, %v1878
    %v2575 = vpack.c.b16 %v1887, %v1879
    %v2576 = vpack.c.b16 %v1888, %v1880
    %v2577 = vpack.c.b16 %v1897, %v1889
    %v2578 = vpack.c.b16 %v1898, %v1890
    %v2579 = vpack.c.b16 %v1899, %v1891
    %v2580 = vpack.c.b16 %v1900, %v1892
    %v2581 = vpack.c.b16 %v1901, %v1893
    %v2582 = vpack.c.b16 %v1902, %v1894
    %v2583 = vpack.c.b16 %v1903, %v1895
    %v2584 = vpack.c.b16 %v1904, %v1896
    %v2585 = vpack.c.b16 %v1913, %v1905
    %v2586 = vpack.c.b16 %v1914, %v1906
    %v2587 = vpack.c.b16 %v1915, %v1907
    %v2588 = vpack.c.b16 %v1916, %v1908
    %v2589 = vpack.c.b16 %v1917, %v1909
    %v2590 = vpack.c.b16 %v1918, %v1910
    %v2591 = vpack.c.b16 %v1919, %v1911
    %v2592 = vpack.c.b16 %v1920, %v1912
    %v2593 = vpack.c.b16 %v1929, %v1921
    %v2594 = vpack.c.b16 %v1930, %v1922
    %v2595 = vpack.c.b16 %v1931, %v1923
    %v2596 = vpack.c.b16 %v1932, %v1924
    %v2597 = vpack.c.b16 %v1933, %v1925
    %v2598 = vpack.c.b16 %v1934, %v1926
    %v2599 = vpack.c.b16 %v1935, %v1927
    %v2600 = vpack.c.b16 %v1936, %v1928
    %v2601 = vpack.c.b16 %v1945, %v1937
    %v2602 = vpack.c.b16 %v1946, %v1938
    %v2603 = vpack.c.b16 %v1947, %v1939
    %v2604 = vpack.c.b16 %v1948, %v1940
    %v2605 = vpack.c.b16 %v1949, %v1941
    %v2606 = vpack.c.b16 %v1950, %v1942
    %v2607 = vpack.c.b16 %v1951, %v1943
    %v2608 = vpack.c.b16 %v1952, %v1944
    %v2609 = vpack.c.b16 %v1961, %v1953
    %v2610 = vpack.c.b16 %v1962, %v1954
    %v2611 = vpack.c.b16 %v1963, %v1955
    %v2612 = vpack.c.b16 %v1964, %v1956
    %v2613 = vpack.c.b16 %v1965, %v1957
    %v2614 = vpack.c.b16 %v1966, %v1958
    %v2615 = vpack.c.b16 %v1967, %v1959
    %v2616 = vpack.c.b16 %v1968, %v1960
    %v2617 = vpack.c.b16 %v1977, %v1969
    %v2618 = vpack.c.b16 %v1978, %v1970
    %v2619 = vpack.c.b16 %v1979, %v1971
    %v2620 = vpack.c.b16 %v1980, %v1972
    %v2621 = vpack.c.b16 %v1981, %v1973
    %v2622 = vpack.c.b16 %v1982, %v1974
    %v2623 = vpack.c.b16 %v1983, %v1975
    %v2624 = vpack.c.b16 %v1984, %v1976
    %v2625 = vpack.c.b16 %v1993, %v1985
    %v2626 = vpack.c.b16 %v1994, %v1986
    %v2627 = vpack.c.b16 %v1995, %v1987
    %v2628 = vpack.c.b16 %v1996, %v1988
    %v2629 = vpack.c.b16 %v1997, %v1989
    %v2630 = vpack.c.b16 %v1998, %v1990
    %v2631 = vpack.c.b16 %v1999, %v1991
    %v2632 = vpack.c.b16 %v2000, %v1992
    %v2633 = vpack.c.b16 %v2009, %v2001
    %v2634 = vpack.c.b16 %v2010, %v2002
    %v2635 = vpack.c.b16 %v2011, %v2003
    %v2636 = vpack.c.b16 %v2012, %v2004
    %v2637 = vpack.c.b16 %v2013, %v2005
    %v2638 = vpack.c.b16 %v2014, %v2006
    %v2639 = vpack.c.b16 %v2015, %v2007
    %v2640 = vpack.c.b16 %v2016, %v2008
    %v2641 = vpack.c.b16 %v2025, %v2017
    %v2642 = vpack.c.b16 %v2026, %v2018
    %v2643 = vpack.c.b16 %v2027, %v2019
    %v2644 = vpack.c.b16 %v2028, %v2020
    %v2645 = vpack.c.b16 %v2029, %v2021
    %v2646 = vpack.c.b16 %v2030, %v2022
    %v2647 = vpack.c.b16 %v2031, %v2023
    %v2648 = vpack.c.b16 %v2032, %v2024
    %v2649 = vpack.c.b16 %v2041, %v2033
    %v2650 = vpack.c.b16 %v2042, %v2034
    %v2651 = vpack.c.b16 %v2043, %v2035
    %v2652 = vpack.c.b16 %v2044, %v2036
    %v2653 = vpack.c.b16 %v2045, %v2037
    %v2654 = vpack.c.b16 %v2046, %v2038
    %v2655 = vpack.c.b16 %v2047, %v2039
    %v2656 = vpack.c.b16 %v2048, %v2040
    %v2657 = vpack.c.b16 %v2057, %v2049
    %v2658 = vpack.c.b16 %v2058, %v2050
    %v2659 = vpack.c.b16 %v2059, %v2051
    %v2660 = vpack.c.b16 %v2060, %v2052
    %v2661 = vpack.c.b16 %v2061, %v2053
    %v2662 = vpack.c.b16 %v2062, %v2054
    %v2663 = vpack.c.b16 %v2063, %v2055
    %v2664 = vpack.c.b16 %v2064, %v2056
    %v2665 = vpack.c.b16 %v2073, %v2065
    %v2666 = vpack.c.b16 %v2074, %v2066
    %v2667 = vpack.c.b16 %v2075, %v2067
    %v2668 = vpack.c.b16 %v2076, %v2068
    %v2669 = vpack.c.b16 %v2077, %v2069
    %v2670 = vpack.c.b16 %v2078, %v2070
    %v2671 = vpack.c.b16 %v2079, %v2071
    %v2672 = vpack.c.b16 %v2080, %v2072
    %v2673 = vpack.c.b16 %v2089, %v2081
    %v2674 = vpack.c.b16 %v2090, %v2082
    %v2675 = vpack.c.b16 %v2091, %v2083
    %v2676 = vpack.c.b16 %v2092, %v2084
    %v2677 = vpack.c.b16 %v2093, %v2085
    %v2678 = vpack.c.b16 %v2094, %v2086
    %v2679 = vpack.c.b16 %v2095, %v2087
    %v2680 = vpack.c.b16 %v2096, %v2088
    %v2681 = vpack.c.b16 %v2105, %v2097
    %v2682 = vpack.c.b16 %v2106, %v2098
    %v2683 = vpack.c.b16 %v2107, %v2099
    %v2684 = vpack.c.b16 %v2108, %v2100
    %v2685 = vpack.c.b16 %v2109, %v2101
    %v2686 = vpack.c.b16 %v2110, %v2102
    %v2687 = vpack.c.b16 %v2111, %v2103
    %v2688 = vpack.c.b16 %v2112, %v2104
    %v2689 = vpack.c.b16 %v2121, %v2113
    %v2690 = vpack.c.b16 %v2122, %v2114
    %v2691 = vpack.c.b16 %v2123, %v2115
    %v2692 = vpack.c.b16 %v2124, %v2116
    %v2693 = vpack.c.b16 %v2125, %v2117
    %v2694 = vpack.c.b16 %v2126, %v2118
    %v2695 = vpack.c.b16 %v2127, %v2119
    %v2696 = vpack.c.b16 %v2128, %v2120
    %v2697 = vpack.c.b16 %v2137, %v2129
    %v2698 = vpack.c.b16 %v2138, %v2130
    %v2699 = vpack.c.b16 %v2139, %v2131
    %v2700 = vpack.c.b16 %v2140, %v2132
    %v2701 = vpack.c.b16 %v2141, %v2133
    %v2702 = vpack.c.b16 %v2142, %v2134
    %v2703 = vpack.c.b16 %v2143, %v2135
    %v2704 = vpack.c.b16 %v2144, %v2136
    %v2705 = vpack.c.b16 %v2153, %v2145
    %v2706 = vpack.c.b16 %v2154, %v2146
    %v2707 = vpack.c.b16 %v2155, %v2147
    %v2708 = vpack.c.b16 %v2156, %v2148
    %v2709 = vpack.c.b16 %v2157, %v2149
    %v2710 = vpack.c.b16 %v2158, %v2150
    %v2711 = vpack.c.b16 %v2159, %v2151
    %v2712 = vpack.c.b16 %v2160, %v2152
    %v2713 = vpack.c.b16 %v2169, %v2161
    %v2714 = vpack.c.b16 %v2170, %v2162
    %v2715 = vpack.c.b16 %v2171, %v2163
    %v2716 = vpack.c.b16 %v2172, %v2164
    %v2717 = vpack.c.b16 %v2173, %v2165
    %v2718 = vpack.c.b16 %v2174, %v2166
    %v2719 = vpack.c.b16 %v2175, %v2167
    %v2720 = vpack.c.b16 %v2176, %v2168
    %v2721 = vpack.c.b16 %v2185, %v2177
    %v2722 = vpack.c.b16 %v2186, %v2178
    %v2723 = vpack.c.b16 %v2187, %v2179
    %v2724 = vpack.c.b16 %v2188, %v2180
    %v2725 = vpack.c.b16 %v2189, %v2181
    %v2726 = vpack.c.b16 %v2190, %v2182
    %v2727 = vpack.c.b16 %v2191, %v2183
    %v2728 = vpack.c.b16 %v2192, %v2184
    %v2729 = vpack.c.b16 %v2201, %v2193
    %v2730 = vpack.c.b16 %v2202, %v2194
    %v2731 = vpack.c.b16 %v2203, %v2195
    %v2732 = vpack.c.b16 %v2204, %v2196
    %v2733 = vpack.c.b16 %v2205, %v2197
    %v2734 = vpack.c.b16 %v2206, %v2198
    %v2735 = vpack.c.b16 %v2207, %v2199
    %v2736 = vpack.c.b16 %v2208, %v2200
    %v2737 = vpack.c.b16 %v2217, %v2209
    %v2738 = vpack.c.b16 %v2218, %v2210
    %v2739 = vpack.c.b16 %v2219, %v2211
    %v2740 = vpack.c.b16 %v2220, %v2212
    %v2741 = vpack.c.b16 %v2221, %v2213
    %v2742 = vpack.c.b16 %v2222, %v2214
    %v2743 = vpack.c.b16 %v2223, %v2215
    %v2744 = vpack.c.b16 %v2224, %v2216
    %v2745 = vpack.c.b16 %v2233, %v2225
    %v2746 = vpack.c.b16 %v2234, %v2226
    %v2747 = vpack.c.b16 %v2235, %v2227
    %v2748 = vpack.c.b16 %v2236, %v2228
    %v2749 = vpack.c.b16 %v2237, %v2229
    %v2750 = vpack.c.b16 %v2238, %v2230
    %v2751 = vpack.c.b16 %v2239, %v2231
    %v2752 = vpack.c.b16 %v2240, %v2232
    %3265 = vmatprep.subr.bf16.mxu0 %v2298
    %3266 = vmatpush1.bf16.msra.mxu0 %v2297
    %3267 = vmatprep.subr.bf16.mxu0 %v2290
    %3268 = vmatpush1.bf16.msra.mxu0 %v2289
    %3269 = vmatprep.subr.bf16.mxu0 %v2282
    %3270 = vmatpush1.bf16.msra.mxu0 %v2281
    %3271 = vmatprep.subr.bf16.mxu0 %v2274
    %3272 = vmatpush1.bf16.msra.mxu0 %v2273
    %3273 = vmatprep.subr.bf16.mxu0 %v2266
    %3274 = vmatpush1.bf16.msra.mxu0 %v2265
    %3275 = vmatprep.subr.bf16.mxu0 %v2258
    %3276 = vmatpush1.bf16.msra.mxu0 %v2257
    %3277 = vmatprep.subr.bf16.mxu0 %v2250
    %3278 = vmatpush1.bf16.msra.mxu0 %v2249
    %3279 = vmatprep.subr.bf16.mxu0 %v2242
    %3280 = vmatpush1.bf16.msra.mxu0 %v2241
    %3281 = vmatprep.subr.bf16.mxu0 %v2362
    %3282 = vmatpush2.bf16.msra.mxu0 %v2361
    %3283 = vmatprep.subr.bf16.mxu0 %v2354
    %3284 = vmatpush2.bf16.msra.mxu0 %v2353
    %3285 = vmatprep.subr.bf16.mxu0 %v2346
    %3286 = vmatpush2.bf16.msra.mxu0 %v2345
    %3287 = vmatprep.subr.bf16.mxu0 %v2338
    %3288 = vmatpush2.bf16.msra.mxu0 %v2337
    %3289 = vmatprep.subr.bf16.mxu0 %v2330
    %3290 = vmatpush2.bf16.msra.mxu0 %v2329
    %3291 = vmatprep.subr.bf16.mxu0 %v2322
    %3292 = vmatpush2.bf16.msra.mxu0 %v2321
    %3293 = vmatprep.subr.bf16.mxu0 %v2314
    %3294 = vmatpush2.bf16.msra.mxu0 %v2313
    %3295 = vmatprep.subr.bf16.mxu0 %v2306
    %3296 = vmatpush2.bf16.msra.mxu0 %v2305
    %3297 = vmatprep.mubr.bf16.mxu0 %v690
    %3298 = vmatmul.mubr.bf16.gmra.mxu0 %v689
    %v3299 = vpop.f32.mrf.mxu0
    %v3300 = vadd.f32 %v640, %v3299
    %v3301 = vpop.f32.mrf.mxu0
    %v3302 = vadd.f32 %v644, %v3301
    %v3303 = vpop.f32.mrf.mxu0
    %v3304 = vpop.f32.mrf.mxu0
    %3305 = vdwg.mxu0
    %3306 = vmatprep.subr.bf16.mxu0 %v2426
    %3307 = vmatpush1.bf16.msra.mxu0 %v2425
    %3308 = vmatprep.subr.bf16.mxu0 %v2418
    %3309 = vmatpush1.bf16.msra.mxu0 %v2417
    %3310 = vmatprep.subr.bf16.mxu0 %v2410
    %3311 = vmatpush1.bf16.msra.mxu0 %v2409
    %3312 = vmatprep.subr.bf16.mxu0 %v2402
    %3313 = vmatpush1.bf16.msra.mxu0 %v2401
    %3314 = vmatprep.subr.bf16.mxu0 %v2394
    %3315 = vmatpush1.bf16.msra.mxu0 %v2393
    %3316 = vmatprep.subr.bf16.mxu0 %v2386
    %3317 = vmatpush1.bf16.msra.mxu0 %v2385
    %3318 = vmatprep.subr.bf16.mxu0 %v2378
    %3319 = vmatpush1.bf16.msra.mxu0 %v2377
    %3320 = vmatprep.subr.bf16.mxu0 %v2370
    %3321 = vmatpush1.bf16.msra.mxu0 %v2369
    %3322 = vmatprep.subr.bf16.mxu0 %v2490
    %3323 = vmatpush2.bf16.msra.mxu0 %v2489
    %3324 = vmatprep.subr.bf16.mxu0 %v2482
    %3325 = vmatpush2.bf16.msra.mxu0 %v2481
    %3326 = vmatprep.subr.bf16.mxu0 %v2474
    %3327 = vmatpush2.bf16.msra.mxu0 %v2473
    %3328 = vmatprep.subr.bf16.mxu0 %v2466
    %3329 = vmatpush2.bf16.msra.mxu0 %v2465
    %3330 = vmatprep.subr.bf16.mxu0 %v2458
    %3331 = vmatpush2.bf16.msra.mxu0 %v2457
    %3332 = vmatprep.subr.bf16.mxu0 %v2450
    %3333 = vmatpush2.bf16.msra.mxu0 %v2449
    %3334 = vmatprep.subr.bf16.mxu0 %v2442
    %3335 = vmatpush2.bf16.msra.mxu0 %v2441
    %3336 = vmatprep.subr.bf16.mxu0 %v2434
    %3337 = vmatpush2.bf16.msra.mxu0 %v2433
    %3338 = vmatprep.mubr.bf16.mxu0 %v692
    %3339 = vmatmul.mubr.bf16.gmra.mxu0 %v691
    %v3340 = vpop.f32.mrf.mxu0
    %v3341 = vadd.f32 %v3300, %v3340
    %v3342 = vpop.f32.mrf.mxu0
    %v3343 = vadd.f32 %v3302, %v3342
    %v3344 = vpop.f32.mrf.mxu0
    %v3345 = vpop.f32.mrf.mxu0
    %3346 = vdwg.mxu0
    %3347 = vmatprep.subr.bf16.mxu0 %v2554
    %3348 = vmatpush1.bf16.msra.mxu0 %v2553
    %3349 = vmatprep.subr.bf16.mxu0 %v2546
    %3350 = vmatpush1.bf16.msra.mxu0 %v2545
    %3351 = vmatprep.subr.bf16.mxu0 %v2538
    %3352 = vmatpush1.bf16.msra.mxu0 %v2537
    %3353 = vmatprep.subr.bf16.mxu0 %v2530
    %3354 = vmatpush1.bf16.msra.mxu0 %v2529
    %3355 = vmatprep.subr.bf16.mxu0 %v2522
    %3356 = vmatpush1.bf16.msra.mxu0 %v2521
    %3357 = vmatprep.subr.bf16.mxu0 %v2514
    %3358 = vmatpush1.bf16.msra.mxu0 %v2513
    %3359 = vmatprep.subr.bf16.mxu0 %v2506
    %3360 = vmatpush1.bf16.msra.mxu0 %v2505
    %3361 = vmatprep.subr.bf16.mxu0 %v2498
    %3362 = vmatpush1.bf16.msra.mxu0 %v2497
    %3363 = vmatprep.subr.bf16.mxu0 %v2618
    %3364 = vmatpush2.bf16.msra.mxu0 %v2617
    %3365 = vmatprep.subr.bf16.mxu0 %v2610
    %3366 = vmatpush2.bf16.msra.mxu0 %v2609
    %3367 = vmatprep.subr.bf16.mxu0 %v2602
    %3368 = vmatpush2.bf16.msra.mxu0 %v2601
    %3369 = vmatprep.subr.bf16.mxu0 %v2594
    %3370 = vmatpush2.bf16.msra.mxu0 %v2593
    %3371 = vmatprep.subr.bf16.mxu0 %v2586
    %3372 = vmatpush2.bf16.msra.mxu0 %v2585
    %3373 = vmatprep.subr.bf16.mxu0 %v2578
    %3374 = vmatpush2.bf16.msra.mxu0 %v2577
    %3375 = vmatprep.subr.bf16.mxu0 %v2570
    %3376 = vmatpush2.bf16.msra.mxu0 %v2569
    %3377 = vmatprep.subr.bf16.mxu0 %v2562
    %3378 = vmatpush2.bf16.msra.mxu0 %v2561
    %3379 = vmatprep.mubr.bf16.mxu0 %v694
    %3380 = vmatmul.mubr.bf16.gmra.mxu0 %v693
    %v3381 = vpop.f32.mrf.mxu0
    %v3382 = vadd.f32 %v3341, %v3381
    %v3383 = vpop.f32.mrf.mxu0
    %v3384 = vadd.f32 %v3343, %v3383
    %v3385 = vpop.f32.mrf.mxu0
    %v3386 = vpop.f32.mrf.mxu0
    %3387 = vdwg.mxu0
    %3388 = vmatprep.subr.bf16.mxu0 %v2682
    %3389 = vmatpush1.bf16.msra.mxu0 %v2681
    %3390 = vmatprep.subr.bf16.mxu0 %v2674
    %3391 = vmatpush1.bf16.msra.mxu0 %v2673
    %3392 = vmatprep.subr.bf16.mxu0 %v2666
    %3393 = vmatpush1.bf16.msra.mxu0 %v2665
    %3394 = vmatprep.subr.bf16.mxu0 %v2658
    %3395 = vmatpush1.bf16.msra.mxu0 %v2657
    %3396 = vmatprep.subr.bf16.mxu0 %v2650
    %3397 = vmatpush1.bf16.msra.mxu0 %v2649
    %3398 = vmatprep.subr.bf16.mxu0 %v2642
    %3399 = vmatpush1.bf16.msra.mxu0 %v2641
    %3400 = vmatprep.subr.bf16.mxu0 %v2634
    %3401 = vmatpush1.bf16.msra.mxu0 %v2633
    %3402 = vmatprep.subr.bf16.mxu0 %v2626
    %3403 = vmatpush1.bf16.msra.mxu0 %v2625
    %3404 = vmatprep.subr.bf16.mxu0 %v2746
    %3405 = vmatpush2.bf16.msra.mxu0 %v2745
    %3406 = vmatprep.subr.bf16.mxu0 %v2738
    %3407 = vmatpush2.bf16.msra.mxu0 %v2737
    %3408 = vmatprep.subr.bf16.mxu0 %v2730
    %3409 = vmatpush2.bf16.msra.mxu0 %v2729
    %3410 = vmatprep.subr.bf16.mxu0 %v2722
    %3411 = vmatpush2.bf16.msra.mxu0 %v2721
    %3412 = vmatprep.subr.bf16.mxu0 %v2714
    %3413 = vmatpush2.bf16.msra.mxu0 %v2713
    %3414 = vmatprep.subr.bf16.mxu0 %v2706
    %3415 = vmatpush2.bf16.msra.mxu0 %v2705
    %3416 = vmatprep.subr.bf16.mxu0 %v2698
    %3417 = vmatpush2.bf16.msra.mxu0 %v2697
    %3418 = vmatprep.subr.bf16.mxu0 %v2690
    %3419 = vmatpush2.bf16.msra.mxu0 %v2689
    %3420 = vmatprep.mubr.bf16.mxu0 %v696
    %3421 = vmatmul.mubr.bf16.gmra.mxu0 %v695
    %v3422 = vpop.f32.mrf.mxu0
    %v3423 = vadd.f32 %v3382, %v3422
    %v3424 = vpop.f32.mrf.mxu0
    %v3425 = vadd.f32 %v3384, %v3424
    %v3426 = vpop.f32.mrf.mxu0
    %v3427 = vpop.f32.mrf.mxu0
    %3428 = vdwg.mxu0
    %3429 = vmatprep.subr.bf16.mxu0 %v2300
    %3430 = vmatpush1.bf16.msra.mxu0 %v2299
    %3431 = vmatprep.subr.bf16.mxu0 %v2292
    %3432 = vmatpush1.bf16.msra.mxu0 %v2291
    %3433 = vmatprep.subr.bf16.mxu0 %v2284
    %3434 = vmatpush1.bf16.msra.mxu0 %v2283
    %3435 = vmatprep.subr.bf16.mxu0 %v2276
    %3436 = vmatpush1.bf16.msra.mxu0 %v2275
    %3437 = vmatprep.subr.bf16.mxu0 %v2268
    %3438 = vmatpush1.bf16.msra.mxu0 %v2267
    %3439 = vmatprep.subr.bf16.mxu0 %v2260
    %3440 = vmatpush1.bf16.msra.mxu0 %v2259
    %3441 = vmatprep.subr.bf16.mxu0 %v2252
    %3442 = vmatpush1.bf16.msra.mxu0 %v2251
    %3443 = vmatprep.subr.bf16.mxu0 %v2244
    %3444 = vmatpush1.bf16.msra.mxu0 %v2243
    %3445 = vmatprep.subr.bf16.mxu0 %v2364
    %3446 = vmatpush2.bf16.msra.mxu0 %v2363
    %3447 = vmatprep.subr.bf16.mxu0 %v2356
    %3448 = vmatpush2.bf16.msra.mxu0 %v2355
    %3449 = vmatprep.subr.bf16.mxu0 %v2348
    %3450 = vmatpush2.bf16.msra.mxu0 %v2347
    %3451 = vmatprep.subr.bf16.mxu0 %v2340
    %3452 = vmatpush2.bf16.msra.mxu0 %v2339
    %3453 = vmatprep.subr.bf16.mxu0 %v2332
    %3454 = vmatpush2.bf16.msra.mxu0 %v2331
    %3455 = vmatprep.subr.bf16.mxu0 %v2324
    %3456 = vmatpush2.bf16.msra.mxu0 %v2323
    %3457 = vmatprep.subr.bf16.mxu0 %v2316
    %3458 = vmatpush2.bf16.msra.mxu0 %v2315
    %3459 = vmatprep.subr.bf16.mxu0 %v2308
    %3460 = vmatpush2.bf16.msra.mxu0 %v2307
    %3461 = vmatprep.mubr.bf16.mxu0 %v690
    %3462 = vmatmul.mubr.bf16.gmra.mxu0 %v689
    %v3463 = vpop.f32.mrf.mxu0
    %v3464 = vadd.f32 %v648, %v3463
    %v3465 = vpop.f32.mrf.mxu0
    %v3466 = vadd.f32 %v652, %v3465
    %v3467 = vpop.f32.mrf.mxu0
    %v3468 = vpop.f32.mrf.mxu0
    %3469 = vdwg.mxu0
    %3470 = vmatprep.subr.bf16.mxu0 %v2428
    %3471 = vmatpush1.bf16.msra.mxu0 %v2427
    %3472 = vmatprep.subr.bf16.mxu0 %v2420
    %3473 = vmatpush1.bf16.msra.mxu0 %v2419
    %3474 = vmatprep.subr.bf16.mxu0 %v2412
    %3475 = vmatpush1.bf16.msra.mxu0 %v2411
    %3476 = vmatprep.subr.bf16.mxu0 %v2404
    %3477 = vmatpush1.bf16.msra.mxu0 %v2403
    %3478 = vmatprep.subr.bf16.mxu0 %v2396
    %3479 = vmatpush1.bf16.msra.mxu0 %v2395
    %3480 = vmatprep.subr.bf16.mxu0 %v2388
    %3481 = vmatpush1.bf16.msra.mxu0 %v2387
    %3482 = vmatprep.subr.bf16.mxu0 %v2380
    %3483 = vmatpush1.bf16.msra.mxu0 %v2379
    %3484 = vmatprep.subr.bf16.mxu0 %v2372
    %3485 = vmatpush1.bf16.msra.mxu0 %v2371
    %3486 = vmatprep.subr.bf16.mxu0 %v2492
    %3487 = vmatpush2.bf16.msra.mxu0 %v2491
    %3488 = vmatprep.subr.bf16.mxu0 %v2484
    %3489 = vmatpush2.bf16.msra.mxu0 %v2483
    %3490 = vmatprep.subr.bf16.mxu0 %v2476
    %3491 = vmatpush2.bf16.msra.mxu0 %v2475
    %3492 = vmatprep.subr.bf16.mxu0 %v2468
    %3493 = vmatpush2.bf16.msra.mxu0 %v2467
    %3494 = vmatprep.subr.bf16.mxu0 %v2460
    %3495 = vmatpush2.bf16.msra.mxu0 %v2459
    %3496 = vmatprep.subr.bf16.mxu0 %v2452
    %3497 = vmatpush2.bf16.msra.mxu0 %v2451
    %3498 = vmatprep.subr.bf16.mxu0 %v2444
    %3499 = vmatpush2.bf16.msra.mxu0 %v2443
    %3500 = vmatprep.subr.bf16.mxu0 %v2436
    %3501 = vmatpush2.bf16.msra.mxu0 %v2435
    %3502 = vmatprep.mubr.bf16.mxu0 %v692
    %3503 = vmatmul.mubr.bf16.gmra.mxu0 %v691
    %v3504 = vpop.f32.mrf.mxu0
    %v3505 = vadd.f32 %v3464, %v3504
    %v3506 = vpop.f32.mrf.mxu0
    %v3507 = vadd.f32 %v3466, %v3506
    %v3508 = vpop.f32.mrf.mxu0
    %v3509 = vpop.f32.mrf.mxu0
    %3510 = vdwg.mxu0
    %3511 = vmatprep.subr.bf16.mxu0 %v2556
    %3512 = vmatpush1.bf16.msra.mxu0 %v2555
    %3513 = vmatprep.subr.bf16.mxu0 %v2548
    %3514 = vmatpush1.bf16.msra.mxu0 %v2547
    %3515 = vmatprep.subr.bf16.mxu0 %v2540
    %3516 = vmatpush1.bf16.msra.mxu0 %v2539
    %3517 = vmatprep.subr.bf16.mxu0 %v2532
    %3518 = vmatpush1.bf16.msra.mxu0 %v2531
    %3519 = vmatprep.subr.bf16.mxu0 %v2524
    %3520 = vmatpush1.bf16.msra.mxu0 %v2523
    %3521 = vmatprep.subr.bf16.mxu0 %v2516
    %3522 = vmatpush1.bf16.msra.mxu0 %v2515
    %3523 = vmatprep.subr.bf16.mxu0 %v2508
    %3524 = vmatpush1.bf16.msra.mxu0 %v2507
    %3525 = vmatprep.subr.bf16.mxu0 %v2500
    %3526 = vmatpush1.bf16.msra.mxu0 %v2499
    %3527 = vmatprep.subr.bf16.mxu0 %v2620
    %3528 = vmatpush2.bf16.msra.mxu0 %v2619
    %3529 = vmatprep.subr.bf16.mxu0 %v2612
    %3530 = vmatpush2.bf16.msra.mxu0 %v2611
    %3531 = vmatprep.subr.bf16.mxu0 %v2604
    %3532 = vmatpush2.bf16.msra.mxu0 %v2603
    %3533 = vmatprep.subr.bf16.mxu0 %v2596
    %3534 = vmatpush2.bf16.msra.mxu0 %v2595
    %3535 = vmatprep.subr.bf16.mxu0 %v2588
    %3536 = vmatpush2.bf16.msra.mxu0 %v2587
    %3537 = vmatprep.subr.bf16.mxu0 %v2580
    %3538 = vmatpush2.bf16.msra.mxu0 %v2579
    %3539 = vmatprep.subr.bf16.mxu0 %v2572
    %3540 = vmatpush2.bf16.msra.mxu0 %v2571
    %3541 = vmatprep.subr.bf16.mxu0 %v2564
    %3542 = vmatpush2.bf16.msra.mxu0 %v2563
    %3543 = vmatprep.mubr.bf16.mxu0 %v694
    %3544 = vmatmul.mubr.bf16.gmra.mxu0 %v693
    %v3545 = vpop.f32.mrf.mxu0
    %v3546 = vadd.f32 %v3505, %v3545
    %v3547 = vpop.f32.mrf.mxu0
    %v3548 = vadd.f32 %v3507, %v3547
    %v3549 = vpop.f32.mrf.mxu0
    %v3550 = vpop.f32.mrf.mxu0
    %3551 = vdwg.mxu0
    %3552 = vmatprep.subr.bf16.mxu0 %v2684
    %3553 = vmatpush1.bf16.msra.mxu0 %v2683
    %3554 = vmatprep.subr.bf16.mxu0 %v2676
    %3555 = vmatpush1.bf16.msra.mxu0 %v2675
    %3556 = vmatprep.subr.bf16.mxu0 %v2668
    %3557 = vmatpush1.bf16.msra.mxu0 %v2667
    %3558 = vmatprep.subr.bf16.mxu0 %v2660
    %3559 = vmatpush1.bf16.msra.mxu0 %v2659
    %3560 = vmatprep.subr.bf16.mxu0 %v2652
    %3561 = vmatpush1.bf16.msra.mxu0 %v2651
    %3562 = vmatprep.subr.bf16.mxu0 %v2644
    %3563 = vmatpush1.bf16.msra.mxu0 %v2643
    %3564 = vmatprep.subr.bf16.mxu0 %v2636
    %3565 = vmatpush1.bf16.msra.mxu0 %v2635
    %3566 = vmatprep.subr.bf16.mxu0 %v2628
    %3567 = vmatpush1.bf16.msra.mxu0 %v2627
    %3568 = vmatprep.subr.bf16.mxu0 %v2748
    %3569 = vmatpush2.bf16.msra.mxu0 %v2747
    %3570 = vmatprep.subr.bf16.mxu0 %v2740
    %3571 = vmatpush2.bf16.msra.mxu0 %v2739
    %3572 = vmatprep.subr.bf16.mxu0 %v2732
    %3573 = vmatpush2.bf16.msra.mxu0 %v2731
    %3574 = vmatprep.subr.bf16.mxu0 %v2724
    %3575 = vmatpush2.bf16.msra.mxu0 %v2723
    %3576 = vmatprep.subr.bf16.mxu0 %v2716
    %3577 = vmatpush2.bf16.msra.mxu0 %v2715
    %3578 = vmatprep.subr.bf16.mxu0 %v2708
    %3579 = vmatpush2.bf16.msra.mxu0 %v2707
    %3580 = vmatprep.subr.bf16.mxu0 %v2700
    %3581 = vmatpush2.bf16.msra.mxu0 %v2699
    %3582 = vmatprep.subr.bf16.mxu0 %v2692
    %3583 = vmatpush2.bf16.msra.mxu0 %v2691
    %3584 = vmatprep.mubr.bf16.mxu0 %v696
    %3585 = vmatmul.mubr.bf16.gmra.mxu0 %v695
    %v3586 = vpop.f32.mrf.mxu0
    %v3587 = vadd.f32 %v3546, %v3586
    %v3588 = vpop.f32.mrf.mxu0
    %v3589 = vadd.f32 %v3548, %v3588
    %v3590 = vpop.f32.mrf.mxu0
    %v3591 = vpop.f32.mrf.mxu0
    %3592 = vdwg.mxu0
    %3593 = vmatprep.subr.bf16.mxu0 %v2302
    %3594 = vmatpush1.bf16.msra.mxu0 %v2301
    %3595 = vmatprep.subr.bf16.mxu0 %v2294
    %3596 = vmatpush1.bf16.msra.mxu0 %v2293
    %3597 = vmatprep.subr.bf16.mxu0 %v2286
    %3598 = vmatpush1.bf16.msra.mxu0 %v2285
    %3599 = vmatprep.subr.bf16.mxu0 %v2278
    %3600 = vmatpush1.bf16.msra.mxu0 %v2277
    %3601 = vmatprep.subr.bf16.mxu0 %v2270
    %3602 = vmatpush1.bf16.msra.mxu0 %v2269
    %3603 = vmatprep.subr.bf16.mxu0 %v2262
    %3604 = vmatpush1.bf16.msra.mxu0 %v2261
    %3605 = vmatprep.subr.bf16.mxu0 %v2254
    %3606 = vmatpush1.bf16.msra.mxu0 %v2253
    %3607 = vmatprep.subr.bf16.mxu0 %v2246
    %3608 = vmatpush1.bf16.msra.mxu0 %v2245
    %3609 = vmatprep.subr.bf16.mxu0 %v2366
    %3610 = vmatpush2.bf16.msra.mxu0 %v2365
    %3611 = vmatprep.subr.bf16.mxu0 %v2358
    %3612 = vmatpush2.bf16.msra.mxu0 %v2357
    %3613 = vmatprep.subr.bf16.mxu0 %v2350
    %3614 = vmatpush2.bf16.msra.mxu0 %v2349
    %3615 = vmatprep.subr.bf16.mxu0 %v2342
    %3616 = vmatpush2.bf16.msra.mxu0 %v2341
    %3617 = vmatprep.subr.bf16.mxu0 %v2334
    %3618 = vmatpush2.bf16.msra.mxu0 %v2333
    %3619 = vmatprep.subr.bf16.mxu0 %v2326
    %3620 = vmatpush2.bf16.msra.mxu0 %v2325
    %3621 = vmatprep.subr.bf16.mxu0 %v2318
    %3622 = vmatpush2.bf16.msra.mxu0 %v2317
    %3623 = vmatprep.subr.bf16.mxu0 %v2310
    %3624 = vmatpush2.bf16.msra.mxu0 %v2309
    %3625 = vmatprep.mubr.bf16.mxu0 %v690
    %3626 = vmatmul.mubr.bf16.gmra.mxu0 %v689
    %v3627 = vpop.f32.mrf.mxu0
    %v3628 = vadd.f32 %v656, %v3627
    %v3629 = vpop.f32.mrf.mxu0
    %v3630 = vadd.f32 %v660, %v3629
    %v3631 = vpop.f32.mrf.mxu0
    %v3632 = vpop.f32.mrf.mxu0
    %3633 = vdwg.mxu0
    %3634 = vmatprep.subr.bf16.mxu0 %v2430
    %3635 = vmatpush1.bf16.msra.mxu0 %v2429
    %3636 = vmatprep.subr.bf16.mxu0 %v2422
    %3637 = vmatpush1.bf16.msra.mxu0 %v2421
    %3638 = vmatprep.subr.bf16.mxu0 %v2414
    %3639 = vmatpush1.bf16.msra.mxu0 %v2413
    %3640 = vmatprep.subr.bf16.mxu0 %v2406
    %3641 = vmatpush1.bf16.msra.mxu0 %v2405
    %3642 = vmatprep.subr.bf16.mxu0 %v2398
    %3643 = vmatpush1.bf16.msra.mxu0 %v2397
    %3644 = vmatprep.subr.bf16.mxu0 %v2390
    %3645 = vmatpush1.bf16.msra.mxu0 %v2389
    %3646 = vmatprep.subr.bf16.mxu0 %v2382
    %3647 = vmatpush1.bf16.msra.mxu0 %v2381
    %3648 = vmatprep.subr.bf16.mxu0 %v2374
    %3649 = vmatpush1.bf16.msra.mxu0 %v2373
    %3650 = vmatprep.subr.bf16.mxu0 %v2494
    %3651 = vmatpush2.bf16.msra.mxu0 %v2493
    %3652 = vmatprep.subr.bf16.mxu0 %v2486
    %3653 = vmatpush2.bf16.msra.mxu0 %v2485
    %3654 = vmatprep.subr.bf16.mxu0 %v2478
    %3655 = vmatpush2.bf16.msra.mxu0 %v2477
    %3656 = vmatprep.subr.bf16.mxu0 %v2470
    %3657 = vmatpush2.bf16.msra.mxu0 %v2469
    %3658 = vmatprep.subr.bf16.mxu0 %v2462
    %3659 = vmatpush2.bf16.msra.mxu0 %v2461
    %3660 = vmatprep.subr.bf16.mxu0 %v2454
    %3661 = vmatpush2.bf16.msra.mxu0 %v2453
    %3662 = vmatprep.subr.bf16.mxu0 %v2446
    %3663 = vmatpush2.bf16.msra.mxu0 %v2445
    %3664 = vmatprep.subr.bf16.mxu0 %v2438
    %3665 = vmatpush2.bf16.msra.mxu0 %v2437
    %3666 = vmatprep.mubr.bf16.mxu0 %v692
    %3667 = vmatmul.mubr.bf16.gmra.mxu0 %v691
    %v3668 = vpop.f32.mrf.mxu0
    %v3669 = vadd.f32 %v3628, %v3668
    %v3670 = vpop.f32.mrf.mxu0
    %v3671 = vadd.f32 %v3630, %v3670
    %v3672 = vpop.f32.mrf.mxu0
    %v3673 = vpop.f32.mrf.mxu0
    %3674 = vdwg.mxu0
    %3675 = vmatprep.subr.bf16.mxu0 %v2558
    %3676 = vmatpush1.bf16.msra.mxu0 %v2557
    %3677 = vmatprep.subr.bf16.mxu0 %v2550
    %3678 = vmatpush1.bf16.msra.mxu0 %v2549
    %3679 = vmatprep.subr.bf16.mxu0 %v2542
    %3680 = vmatpush1.bf16.msra.mxu0 %v2541
    %3681 = vmatprep.subr.bf16.mxu0 %v2534
    %3682 = vmatpush1.bf16.msra.mxu0 %v2533
    %3683 = vmatprep.subr.bf16.mxu0 %v2526
    %3684 = vmatpush1.bf16.msra.mxu0 %v2525
    %3685 = vmatprep.subr.bf16.mxu0 %v2518
    %3686 = vmatpush1.bf16.msra.mxu0 %v2517
    %3687 = vmatprep.subr.bf16.mxu0 %v2510
    %3688 = vmatpush1.bf16.msra.mxu0 %v2509
    %3689 = vmatprep.subr.bf16.mxu0 %v2502
    %3690 = vmatpush1.bf16.msra.mxu0 %v2501
    %3691 = vmatprep.subr.bf16.mxu0 %v2622
    %3692 = vmatpush2.bf16.msra.mxu0 %v2621
    %3693 = vmatprep.subr.bf16.mxu0 %v2614
    %3694 = vmatpush2.bf16.msra.mxu0 %v2613
    %3695 = vmatprep.subr.bf16.mxu0 %v2606
    %3696 = vmatpush2.bf16.msra.mxu0 %v2605
    %3697 = vmatprep.subr.bf16.mxu0 %v2598
    %3698 = vmatpush2.bf16.msra.mxu0 %v2597
    %3699 = vmatprep.subr.bf16.mxu0 %v2590
    %3700 = vmatpush2.bf16.msra.mxu0 %v2589
    %3701 = vmatprep.subr.bf16.mxu0 %v2582
    %3702 = vmatpush2.bf16.msra.mxu0 %v2581
    %3703 = vmatprep.subr.bf16.mxu0 %v2574
    %3704 = vmatpush2.bf16.msra.mxu0 %v2573
    %3705 = vmatprep.subr.bf16.mxu0 %v2566
    %3706 = vmatpush2.bf16.msra.mxu0 %v2565
    %3707 = vmatprep.mubr.bf16.mxu0 %v694
    %3708 = vmatmul.mubr.bf16.gmra.mxu0 %v693
    %v3709 = vpop.f32.mrf.mxu0
    %v3710 = vadd.f32 %v3669, %v3709
    %v3711 = vpop.f32.mrf.mxu0
    %v3712 = vadd.f32 %v3671, %v3711
    %v3713 = vpop.f32.mrf.mxu0
    %v3714 = vpop.f32.mrf.mxu0
    %3715 = vdwg.mxu0
    %3716 = vmatprep.subr.bf16.mxu0 %v2686
    %3717 = vmatpush1.bf16.msra.mxu0 %v2685
    %3718 = vmatprep.subr.bf16.mxu0 %v2678
    %3719 = vmatpush1.bf16.msra.mxu0 %v2677
    %3720 = vmatprep.subr.bf16.mxu0 %v2670
    %3721 = vmatpush1.bf16.msra.mxu0 %v2669
    %3722 = vmatprep.subr.bf16.mxu0 %v2662
    %3723 = vmatpush1.bf16.msra.mxu0 %v2661
    %3724 = vmatprep.subr.bf16.mxu0 %v2654
    %3725 = vmatpush1.bf16.msra.mxu0 %v2653
    %3726 = vmatprep.subr.bf16.mxu0 %v2646
    %3727 = vmatpush1.bf16.msra.mxu0 %v2645
    %3728 = vmatprep.subr.bf16.mxu0 %v2638
    %3729 = vmatpush1.bf16.msra.mxu0 %v2637
    %3730 = vmatprep.subr.bf16.mxu0 %v2630
    %3731 = vmatpush1.bf16.msra.mxu0 %v2629
    %3732 = vmatprep.subr.bf16.mxu0 %v2750
    %3733 = vmatpush2.bf16.msra.mxu0 %v2749
    %3734 = vmatprep.subr.bf16.mxu0 %v2742
    %3735 = vmatpush2.bf16.msra.mxu0 %v2741
    %3736 = vmatprep.subr.bf16.mxu0 %v2734
    %3737 = vmatpush2.bf16.msra.mxu0 %v2733
    %3738 = vmatprep.subr.bf16.mxu0 %v2726
    %3739 = vmatpush2.bf16.msra.mxu0 %v2725
    %3740 = vmatprep.subr.bf16.mxu0 %v2718
    %3741 = vmatpush2.bf16.msra.mxu0 %v2717
    %3742 = vmatprep.subr.bf16.mxu0 %v2710
    %3743 = vmatpush2.bf16.msra.mxu0 %v2709
    %3744 = vmatprep.subr.bf16.mxu0 %v2702
    %3745 = vmatpush2.bf16.msra.mxu0 %v2701
    %3746 = vmatprep.subr.bf16.mxu0 %v2694
    %3747 = vmatpush2.bf16.msra.mxu0 %v2693
    %3748 = vmatprep.mubr.bf16.mxu0 %v696
    %3749 = vmatmul.mubr.bf16.gmra.mxu0 %v695
    %v3750 = vpop.f32.mrf.mxu0
    %v3751 = vadd.f32 %v3710, %v3750
    %v3752 = vpop.f32.mrf.mxu0
    %v3753 = vadd.f32 %v3712, %v3752
    %v3754 = vpop.f32.mrf.mxu0
    %v3755 = vpop.f32.mrf.mxu0
    %3756 = vdwg.mxu0
    %3757 = vmatprep.subr.bf16.mxu0 %v2304
    %3758 = vmatpush1.bf16.msra.mxu0 %v2303
    %3759 = vmatprep.subr.bf16.mxu0 %v2296
    %3760 = vmatpush1.bf16.msra.mxu0 %v2295
    %3761 = vmatprep.subr.bf16.mxu0 %v2288
    %3762 = vmatpush1.bf16.msra.mxu0 %v2287
    %3763 = vmatprep.subr.bf16.mxu0 %v2280
    %3764 = vmatpush1.bf16.msra.mxu0 %v2279
    %3765 = vmatprep.subr.bf16.mxu0 %v2272
    %3766 = vmatpush1.bf16.msra.mxu0 %v2271
    %3767 = vmatprep.subr.bf16.mxu0 %v2264
    %3768 = vmatpush1.bf16.msra.mxu0 %v2263
    %3769 = vmatprep.subr.bf16.mxu0 %v2256
    %3770 = vmatpush1.bf16.msra.mxu0 %v2255
    %3771 = vmatprep.subr.bf16.mxu0 %v2248
    %3772 = vmatpush1.bf16.msra.mxu0 %v2247
    %3773 = vmatprep.subr.bf16.mxu0 %v2368
    %3774 = vmatpush2.bf16.msra.mxu0 %v2367
    %3775 = vmatprep.subr.bf16.mxu0 %v2360
    %3776 = vmatpush2.bf16.msra.mxu0 %v2359
    %3777 = vmatprep.subr.bf16.mxu0 %v2352
    %3778 = vmatpush2.bf16.msra.mxu0 %v2351
    %3779 = vmatprep.subr.bf16.mxu0 %v2344
    %3780 = vmatpush2.bf16.msra.mxu0 %v2343
    %3781 = vmatprep.subr.bf16.mxu0 %v2336
    %3782 = vmatpush2.bf16.msra.mxu0 %v2335
    %3783 = vmatprep.subr.bf16.mxu0 %v2328
    %3784 = vmatpush2.bf16.msra.mxu0 %v2327
    %3785 = vmatprep.subr.bf16.mxu0 %v2320
    %3786 = vmatpush2.bf16.msra.mxu0 %v2319
    %3787 = vmatprep.subr.bf16.mxu0 %v2312
    %3788 = vmatpush2.bf16.msra.mxu0 %v2311
    %3789 = vmatprep.mubr.bf16.mxu0 %v690
    %3790 = vmatmul.mubr.bf16.gmra.mxu0 %v689
    %v3791 = vpop.f32.mrf.mxu0
    %v3792 = vadd.f32 %v664, %v3791
    %v3793 = vpop.f32.mrf.mxu0
    %v3794 = vadd.f32 %v668, %v3793
    %v3795 = vpop.f32.mrf.mxu0
    %v3796 = vpop.f32.mrf.mxu0
    %3797 = vdwg.mxu0
    %3798 = vmatprep.subr.bf16.mxu0 %v2432
    %3799 = vmatpush1.bf16.msra.mxu0 %v2431
    %3800 = vmatprep.subr.bf16.mxu0 %v2424
    %3801 = vmatpush1.bf16.msra.mxu0 %v2423
    %3802 = vmatprep.subr.bf16.mxu0 %v2416
    %3803 = vmatpush1.bf16.msra.mxu0 %v2415
    %3804 = vmatprep.subr.bf16.mxu0 %v2408
    %3805 = vmatpush1.bf16.msra.mxu0 %v2407
    %3806 = vmatprep.subr.bf16.mxu0 %v2400
    %3807 = vmatpush1.bf16.msra.mxu0 %v2399
    %3808 = vmatprep.subr.bf16.mxu0 %v2392
    %3809 = vmatpush1.bf16.msra.mxu0 %v2391
    %3810 = vmatprep.subr.bf16.mxu0 %v2384
    %3811 = vmatpush1.bf16.msra.mxu0 %v2383
    %3812 = vmatprep.subr.bf16.mxu0 %v2376
    %3813 = vmatpush1.bf16.msra.mxu0 %v2375
    %3814 = vmatprep.subr.bf16.mxu0 %v2496
    %3815 = vmatpush2.bf16.msra.mxu0 %v2495
    %3816 = vmatprep.subr.bf16.mxu0 %v2488
    %3817 = vmatpush2.bf16.msra.mxu0 %v2487
    %3818 = vmatprep.subr.bf16.mxu0 %v2480
    %3819 = vmatpush2.bf16.msra.mxu0 %v2479
    %3820 = vmatprep.subr.bf16.mxu0 %v2472
    %3821 = vmatpush2.bf16.msra.mxu0 %v2471
    %3822 = vmatprep.subr.bf16.mxu0 %v2464
    %3823 = vmatpush2.bf16.msra.mxu0 %v2463
    %3824 = vmatprep.subr.bf16.mxu0 %v2456
    %3825 = vmatpush2.bf16.msra.mxu0 %v2455
    %3826 = vmatprep.subr.bf16.mxu0 %v2448
    %3827 = vmatpush2.bf16.msra.mxu0 %v2447
    %3828 = vmatprep.subr.bf16.mxu0 %v2440
    %3829 = vmatpush2.bf16.msra.mxu0 %v2439
    %3830 = vmatprep.mubr.bf16.mxu0 %v692
    %3831 = vmatmul.mubr.bf16.gmra.mxu0 %v691
    %v3832 = vpop.f32.mrf.mxu0
    %v3833 = vadd.f32 %v3792, %v3832
    %v3834 = vpop.f32.mrf.mxu0
    %v3835 = vadd.f32 %v3794, %v3834
    %v3836 = vpop.f32.mrf.mxu0
    %v3837 = vpop.f32.mrf.mxu0
    %3838 = vdwg.mxu0
    %3839 = vmatprep.subr.bf16.mxu0 %v2560
    %3840 = vmatpush1.bf16.msra.mxu0 %v2559
    %3841 = vmatprep.subr.bf16.mxu0 %v2552
    %3842 = vmatpush1.bf16.msra.mxu0 %v2551
    %3843 = vmatprep.subr.bf16.mxu0 %v2544
    %3844 = vmatpush1.bf16.msra.mxu0 %v2543
    %3845 = vmatprep.subr.bf16.mxu0 %v2536
    %3846 = vmatpush1.bf16.msra.mxu0 %v2535
    %3847 = vmatprep.subr.bf16.mxu0 %v2528
    %3848 = vmatpush1.bf16.msra.mxu0 %v2527
    %3849 = vmatprep.subr.bf16.mxu0 %v2520
    %3850 = vmatpush1.bf16.msra.mxu0 %v2519
    %3851 = vmatprep.subr.bf16.mxu0 %v2512
    %3852 = vmatpush1.bf16.msra.mxu0 %v2511
    %3853 = vmatprep.subr.bf16.mxu0 %v2504
    %3854 = vmatpush1.bf16.msra.mxu0 %v2503
    %3855 = vmatprep.subr.bf16.mxu0 %v2624
    %3856 = vmatpush2.bf16.msra.mxu0 %v2623
    %3857 = vmatprep.subr.bf16.mxu0 %v2616
    %3858 = vmatpush2.bf16.msra.mxu0 %v2615
    %3859 = vmatprep.subr.bf16.mxu0 %v2608
    %3860 = vmatpush2.bf16.msra.mxu0 %v2607
    %3861 = vmatprep.subr.bf16.mxu0 %v2600
    %3862 = vmatpush2.bf16.msra.mxu0 %v2599
    %3863 = vmatprep.subr.bf16.mxu0 %v2592
    %3864 = vmatpush2.bf16.msra.mxu0 %v2591
    %3865 = vmatprep.subr.bf16.mxu0 %v2584
    %3866 = vmatpush2.bf16.msra.mxu0 %v2583
    %3867 = vmatprep.subr.bf16.mxu0 %v2576
    %3868 = vmatpush2.bf16.msra.mxu0 %v2575
    %3869 = vmatprep.subr.bf16.mxu0 %v2568
    %3870 = vmatpush2.bf16.msra.mxu0 %v2567
    %3871 = vmatprep.mubr.bf16.mxu0 %v694
    %3872 = vmatmul.mubr.bf16.gmra.mxu0 %v693
    %v3873 = vpop.f32.mrf.mxu0
    %v3874 = vadd.f32 %v3833, %v3873
    %v3875 = vpop.f32.mrf.mxu0
    %v3876 = vadd.f32 %v3835, %v3875
    %v3877 = vpop.f32.mrf.mxu0
    %v3878 = vpop.f32.mrf.mxu0
    %3879 = vdwg.mxu0
    %3880 = vmatprep.subr.bf16.mxu0 %v2688
    %3881 = vmatpush1.bf16.msra.mxu0 %v2687
    %3882 = vmatprep.subr.bf16.mxu0 %v2680
    %3883 = vmatpush1.bf16.msra.mxu0 %v2679
    %3884 = vmatprep.subr.bf16.mxu0 %v2672
    %3885 = vmatpush1.bf16.msra.mxu0 %v2671
    %3886 = vmatprep.subr.bf16.mxu0 %v2664
    %3887 = vmatpush1.bf16.msra.mxu0 %v2663
    %3888 = vmatprep.subr.bf16.mxu0 %v2656
    %3889 = vmatpush1.bf16.msra.mxu0 %v2655
    %3890 = vmatprep.subr.bf16.mxu0 %v2648
    %3891 = vmatpush1.bf16.msra.mxu0 %v2647
    %3892 = vmatprep.subr.bf16.mxu0 %v2640
    %3893 = vmatpush1.bf16.msra.mxu0 %v2639
    %3894 = vmatprep.subr.bf16.mxu0 %v2632
    %3895 = vmatpush1.bf16.msra.mxu0 %v2631
    %3896 = vmatprep.subr.bf16.mxu0 %v2752
    %3897 = vmatpush2.bf16.msra.mxu0 %v2751
    %3898 = vmatprep.subr.bf16.mxu0 %v2744
    %3899 = vmatpush2.bf16.msra.mxu0 %v2743
    %3900 = vmatprep.subr.bf16.mxu0 %v2736
    %3901 = vmatpush2.bf16.msra.mxu0 %v2735
    %3902 = vmatprep.subr.bf16.mxu0 %v2728
    %3903 = vmatpush2.bf16.msra.mxu0 %v2727
    %3904 = vmatprep.subr.bf16.mxu0 %v2720
    %3905 = vmatpush2.bf16.msra.mxu0 %v2719
    %3906 = vmatprep.subr.bf16.mxu0 %v2712
    %3907 = vmatpush2.bf16.msra.mxu0 %v2711
    %3908 = vmatprep.subr.bf16.mxu0 %v2704
    %3909 = vmatpush2.bf16.msra.mxu0 %v2703
    %3910 = vmatprep.subr.bf16.mxu0 %v2696
    %3911 = vmatpush2.bf16.msra.mxu0 %v2695
    %3912 = vmatprep.mubr.bf16.mxu0 %v696
    %3913 = vmatmul.mubr.bf16.gmra.mxu0 %v695
    %v3914 = vpop.f32.mrf.mxu0
    %v3915 = vadd.f32 %v3874, %v3914
    %v3916 = vpop.f32.mrf.mxu0
    %v3917 = vadd.f32 %v3876, %v3916
    %v3918 = vpop.f32.mrf.mxu0
    %v3919 = vpop.f32.mrf.mxu0
    %3920 = vdwg.mxu0
    %v3921 = vmax.f32 %v3423, 0.0
    %v3922 = vmax.f32 %v3425, 0.0
    %v3923 = vmax.f32 %v3587, 0.0
    %v3924 = vmax.f32 %v3589, 0.0
    %v3925 = vmax.f32 %v3751, 0.0
    %v3926 = vmax.f32 %v3753, 0.0
    %v3927 = vmax.f32 %v3915, 0.0
    %v3928 = vmax.f32 %v3917, 0.0
    %v3929 = vpack.c.bf16 %v3921, %v3921
    %v3930 = vpack.c.bf16 %v3922, %v3922
    %v3931 = vpack.c.bf16 %v3923, %v3923
    %v3932 = vpack.c.bf16 %v3924, %v3924
    %v3933 = vld [vmem:[#allocation8] sm:$0xff]
    %v3934 = vld [vmem:[#allocation8 + $0x8] sm:$0xff]
    %v3935 = vld [vmem:[#allocation8 + $0x10] sm:$0xff]
    %v3936 = vld [vmem:[#allocation8 + $0x18] sm:$0xff]
    %v3937 = vld [vmem:[#allocation8 + $0x20] sm:$0xff]
    %v3938 = vld [vmem:[#allocation8 + $0x28] sm:$0xff]
    %v3939 = vld [vmem:[#allocation8 + $0x30] sm:$0xff]
    %v3940 = vld [vmem:[#allocation8 + $0x38] sm:$0xff]
    %v3941 = vld [vmem:[#allocation8 + $0x40] sm:$0xff]
    %v3942 = vld [vmem:[#allocation8 + $0x48] sm:$0xff]
    %v3943 = vld [vmem:[#allocation8 + $0x50] sm:$0xff]
    %v3944 = vld [vmem:[#allocation8 + $0x58] sm:$0xff]
    %v3945 = vld [vmem:[#allocation8 + $0x60] sm:$0xff]
    %v3946 = vld [vmem:[#allocation8 + $0x68] sm:$0xff]
    %v3947 = vld [vmem:[#allocation8 + $0x70] sm:$0xff]
    %v3948 = vld [vmem:[#allocation8 + $0x78] sm:$0xff]
    %v3949 = vld [vmem:[#allocation8 + $0x80] sm:$0xff]
    %v3950 = vld [vmem:[#allocation8 + $0x88] sm:$0xff]
    %v3951 = vld [vmem:[#allocation8 + $0x90] sm:$0xff]
    %v3952 = vld [vmem:[#allocation8 + $0x98] sm:$0xff]
    %v3953 = vld [vmem:[#allocation8 + $0xa0] sm:$0xff]
    %v3954 = vld [vmem:[#allocation8 + $0xa8] sm:$0xff]
    %v3955 = vld [vmem:[#allocation8 + $0xb0] sm:$0xff]
    %v3956 = vld [vmem:[#allocation8 + $0xb8] sm:$0xff]
    %v3957 = vld [vmem:[#allocation8 + $0xc0] sm:$0xff]
    %v3958 = vld [vmem:[#allocation8 + $0xc8] sm:$0xff]
    %v3959 = vld [vmem:[#allocation8 + $0xd0] sm:$0xff]
    %v3960 = vld [vmem:[#allocation8 + $0xd8] sm:$0xff]
    %v3961 = vld [vmem:[#allocation8 + $0xe0] sm:$0xff]
    %v3962 = vld [vmem:[#allocation8 + $0xe8] sm:$0xff]
    %v3963 = vld [vmem:[#allocation8 + $0xf0] sm:$0xff]
    %v3964 = vld [vmem:[#allocation8 + $0xf8] sm:$0xff]
    %v3965 = vld [vmem:[#allocation8 + $0x100] sm:$0xff]
    %v3966 = vld [vmem:[#allocation8 + $0x108] sm:$0xff]
    %v3967 = vld [vmem:[#allocation8 + $0x110] sm:$0xff]
    %v3968 = vld [vmem:[#allocation8 + $0x118] sm:$0xff]
    %v3969 = vld [vmem:[#allocation8 + $0x120] sm:$0xff]
    %v3970 = vld [vmem:[#allocation8 + $0x128] sm:$0xff]
    %v3971 = vld [vmem:[#allocation8 + $0x130] sm:$0xff]
    %v3972 = vld [vmem:[#allocation8 + $0x138] sm:$0xff]
    %v3973 = vld [vmem:[#allocation8 + $0x140] sm:$0xff]
    %v3974 = vld [vmem:[#allocation8 + $0x148] sm:$0xff]
    %v3975 = vld [vmem:[#allocation8 + $0x150] sm:$0xff]
    %v3976 = vld [vmem:[#allocation8 + $0x158] sm:$0xff]
    %v3977 = vld [vmem:[#allocation8 + $0x160] sm:$0xff]
    %v3978 = vld [vmem:[#allocation8 + $0x168] sm:$0xff]
    %v3979 = vld [vmem:[#allocation8 + $0x170] sm:$0xff]
    %v3980 = vld [vmem:[#allocation8 + $0x178] sm:$0xff]
    %v3981 = vld [vmem:[#allocation8 + $0x180] sm:$0xff]
    %v3982 = vld [vmem:[#allocation8 + $0x188] sm:$0xff]
    %v3983 = vld [vmem:[#allocation8 + $0x190] sm:$0xff]
    %v3984 = vld [vmem:[#allocation8 + $0x198] sm:$0xff]
    %v3985 = vld [vmem:[#allocation8 + $0x1a0] sm:$0xff]
    %v3986 = vld [vmem:[#allocation8 + $0x1a8] sm:$0xff]
    %v3987 = vld [vmem:[#allocation8 + $0x1b0] sm:$0xff]
    %v3988 = vld [vmem:[#allocation8 + $0x1b8] sm:$0xff]
    %v3989 = vld [vmem:[#allocation8 + $0x1c0] sm:$0xff]
    %v3990 = vld [vmem:[#allocation8 + $0x1c8] sm:$0xff]
    %v3991 = vld [vmem:[#allocation8 + $0x1d0] sm:$0xff]
    %v3992 = vld [vmem:[#allocation8 + $0x1d8] sm:$0xff]
    %v3993 = vld [vmem:[#allocation8 + $0x1e0] sm:$0xff]
    %v3994 = vld [vmem:[#allocation8 + $0x1e8] sm:$0xff]
    %v3995 = vld [vmem:[#allocation8 + $0x1f0] sm:$0xff]
    %v3996 = vld [vmem:[#allocation8 + $0x1f8] sm:$0xff]
    %v3997 = vld [vmem:[#allocation10] sm:$0x3]
    %v3999 = vlaneseq
    %v4000 = vshrl.u32 %v3999, 7
    %v4001 = vsub.s32 0, %v4000
    %v4002 = vrot.slane %v3997, %v4001
    %v4003 = vlaneseq
    %v4004 = vshrl.u32 %v4003, 7
    %v4005 = vsub.s32 1, %v4004
    %v4006 = vrot.slane %v3997, %v4005
    %v4073 = vunpack.c.l.b16 %v3933
    %v4074 = vunpack.c.h.b16 %v3933
    %v4075 = vunpack.c.l.b16 %v3934
    %v4076 = vunpack.c.h.b16 %v3934
    %v4077 = vunpack.c.l.b16 %v3935
    %v4078 = vunpack.c.h.b16 %v3935
    %v4079 = vunpack.c.l.b16 %v3936
    %v4080 = vunpack.c.h.b16 %v3936
    %v4081 = vunpack.c.l.b16 %v3937
    %v4082 = vunpack.c.h.b16 %v3937
    %v4083 = vunpack.c.l.b16 %v3938
    %v4084 = vunpack.c.h.b16 %v3938
    %v4085 = vunpack.c.l.b16 %v3939
    %v4086 = vunpack.c.h.b16 %v3939
    %v4087 = vunpack.c.l.b16 %v3940
    %v4088 = vunpack.c.h.b16 %v3940
    %v4089 = vunpack.c.l.b16 %v3941
    %v4090 = vunpack.c.h.b16 %v3941
    %v4091 = vunpack.c.l.b16 %v3942
    %v4092 = vunpack.c.h.b16 %v3942
    %v4093 = vunpack.c.l.b16 %v3943
    %v4094 = vunpack.c.h.b16 %v3943
    %v4095 = vunpack.c.l.b16 %v3944
    %v4096 = vunpack.c.h.b16 %v3944
    %v4097 = vunpack.c.l.b16 %v3945
    %v4098 = vunpack.c.h.b16 %v3945
    %v4099 = vunpack.c.l.b16 %v3946
    %v4100 = vunpack.c.h.b16 %v3946
    %v4101 = vunpack.c.l.b16 %v3947
    %v4102 = vunpack.c.h.b16 %v3947
    %v4103 = vunpack.c.l.b16 %v3948
    %v4104 = vunpack.c.h.b16 %v3948
    %v4105 = vunpack.c.l.b16 %v3949
    %v4106 = vunpack.c.h.b16 %v3949
    %v4107 = vunpack.c.l.b16 %v3950
    %v4108 = vunpack.c.h.b16 %v3950
    %v4109 = vunpack.c.l.b16 %v3951
    %v4110 = vunpack.c.h.b16 %v3951
    %v4111 = vunpack.c.l.b16 %v3952
    %v4112 = vunpack.c.h.b16 %v3952
    %v4113 = vunpack.c.l.b16 %v3953
    %v4114 = vunpack.c.h.b16 %v3953
    %v4115 = vunpack.c.l.b16 %v3954
    %v4116 = vunpack.c.h.b16 %v3954
    %v4117 = vunpack.c.l.b16 %v3955
    %v4118 = vunpack.c.h.b16 %v3955
    %v4119 = vunpack.c.l.b16 %v3956
    %v4120 = vunpack.c.h.b16 %v3956
    %v4121 = vunpack.c.l.b16 %v3957
    %v4122 = vunpack.c.h.b16 %v3957
    %v4123 = vunpack.c.l.b16 %v3958
    %v4124 = vunpack.c.h.b16 %v3958
    %v4125 = vunpack.c.l.b16 %v3959
    %v4126 = vunpack.c.h.b16 %v3959
    %v4127 = vunpack.c.l.b16 %v3960
    %v4128 = vunpack.c.h.b16 %v3960
    %v4129 = vunpack.c.l.b16 %v3961
    %v4130 = vunpack.c.h.b16 %v3961
    %v4131 = vunpack.c.l.b16 %v3962
    %v4132 = vunpack.c.h.b16 %v3962
    %v4133 = vunpack.c.l.b16 %v3963
    %v4134 = vunpack.c.h.b16 %v3963
    %v4135 = vunpack.c.l.b16 %v3964
    %v4136 = vunpack.c.h.b16 %v3964
    %v4137 = vunpack.c.l.b16 %v3965
    %v4138 = vunpack.c.h.b16 %v3965
    %v4139 = vunpack.c.l.b16 %v3966
    %v4140 = vunpack.c.h.b16 %v3966
    %v4141 = vunpack.c.l.b16 %v3967
    %v4142 = vunpack.c.h.b16 %v3967
    %v4143 = vunpack.c.l.b16 %v3968
    %v4144 = vunpack.c.h.b16 %v3968
    %v4145 = vunpack.c.l.b16 %v3969
    %v4146 = vunpack.c.h.b16 %v3969
    %v4147 = vunpack.c.l.b16 %v3970
    %v4148 = vunpack.c.h.b16 %v3970
    %v4149 = vunpack.c.l.b16 %v3971
    %v4150 = vunpack.c.h.b16 %v3971
    %v4151 = vunpack.c.l.b16 %v3972
    %v4152 = vunpack.c.h.b16 %v3972
    %v4153 = vunpack.c.l.b16 %v3973
    %v4154 = vunpack.c.h.b16 %v3973
    %v4155 = vunpack.c.l.b16 %v3974
    %v4156 = vunpack.c.h.b16 %v3974
    %v4157 = vunpack.c.l.b16 %v3975
    %v4158 = vunpack.c.h.b16 %v3975
    %v4159 = vunpack.c.l.b16 %v3976
    %v4160 = vunpack.c.h.b16 %v3976
    %v4161 = vunpack.c.l.b16 %v3977
    %v4162 = vunpack.c.h.b16 %v3977
    %v4163 = vunpack.c.l.b16 %v3978
    %v4164 = vunpack.c.h.b16 %v3978
    %v4165 = vunpack.c.l.b16 %v3979
    %v4166 = vunpack.c.h.b16 %v3979
    %v4167 = vunpack.c.l.b16 %v3980
    %v4168 = vunpack.c.h.b16 %v3980
    %v4169 = vunpack.c.l.b16 %v3981
    %v4170 = vunpack.c.h.b16 %v3981
    %v4171 = vunpack.c.l.b16 %v3982
    %v4172 = vunpack.c.h.b16 %v3982
    %v4173 = vunpack.c.l.b16 %v3983
    %v4174 = vunpack.c.h.b16 %v3983
    %v4175 = vunpack.c.l.b16 %v3984
    %v4176 = vunpack.c.h.b16 %v3984
    %v4177 = vunpack.c.l.b16 %v3985
    %v4178 = vunpack.c.h.b16 %v3985
    %v4179 = vunpack.c.l.b16 %v3986
    %v4180 = vunpack.c.h.b16 %v3986
    %v4181 = vunpack.c.l.b16 %v3987
    %v4182 = vunpack.c.h.b16 %v3987
    %v4183 = vunpack.c.l.b16 %v3988
    %v4184 = vunpack.c.h.b16 %v3988
    %v4185 = vunpack.c.l.b16 %v3989
    %v4186 = vunpack.c.h.b16 %v3989
    %v4187 = vunpack.c.l.b16 %v3990
    %v4188 = vunpack.c.h.b16 %v3990
    %v4189 = vunpack.c.l.b16 %v3991
    %v4190 = vunpack.c.h.b16 %v3991
    %v4191 = vunpack.c.l.b16 %v3992
    %v4192 = vunpack.c.h.b16 %v3992
    %v4193 = vunpack.c.l.b16 %v3993
    %v4194 = vunpack.c.h.b16 %v3993
    %v4195 = vunpack.c.l.b16 %v3994
    %v4196 = vunpack.c.h.b16 %v3994
    %v4197 = vunpack.c.l.b16 %v3995
    %v4198 = vunpack.c.h.b16 %v3995
    %v4199 = vunpack.c.l.b16 %v3996
    %v4200 = vunpack.c.h.b16 %v3996
    %v4201 = vpack.c.b16 %v4075, %v4073
    %v4202 = vpack.c.b16 %v4076, %v4074
    %v4203 = vpack.c.b16 %v4079, %v4077
    %v4204 = vpack.c.b16 %v4080, %v4078
    %v4205 = vpack.c.b16 %v4083, %v4081
    %v4206 = vpack.c.b16 %v4084, %v4082
    %v4207 = vpack.c.b16 %v4087, %v4085
    %v4208 = vpack.c.b16 %v4088, %v4086
    %v4209 = vpack.c.b16 %v4091, %v4089
    %v4210 = vpack.c.b16 %v4092, %v4090
    %v4211 = vpack.c.b16 %v4095, %v4093
    %v4212 = vpack.c.b16 %v4096, %v4094
    %v4213 = vpack.c.b16 %v4099, %v4097
    %v4214 = vpack.c.b16 %v4100, %v4098
    %v4215 = vpack.c.b16 %v4103, %v4101
    %v4216 = vpack.c.b16 %v4104, %v4102
    %v4217 = vpack.c.b16 %v4107, %v4105
    %v4218 = vpack.c.b16 %v4108, %v4106
    %v4219 = vpack.c.b16 %v4111, %v4109
    %v4220 = vpack.c.b16 %v4112, %v4110
    %v4221 = vpack.c.b16 %v4115, %v4113
    %v4222 = vpack.c.b16 %v4116, %v4114
    %v4223 = vpack.c.b16 %v4119, %v4117
    %v4224 = vpack.c.b16 %v4120, %v4118
    %v4225 = vpack.c.b16 %v4123, %v4121
    %v4226 = vpack.c.b16 %v4124, %v4122
    %v4227 = vpack.c.b16 %v4127, %v4125
    %v4228 = vpack.c.b16 %v4128, %v4126
    %v4229 = vpack.c.b16 %v4131, %v4129
    %v4230 = vpack.c.b16 %v4132, %v4130
    %v4231 = vpack.c.b16 %v4135, %v4133
    %v4232 = vpack.c.b16 %v4136, %v4134
    %v4233 = vpack.c.b16 %v4139, %v4137
    %v4234 = vpack.c.b16 %v4140, %v4138
    %v4235 = vpack.c.b16 %v4143, %v4141
    %v4236 = vpack.c.b16 %v4144, %v4142
    %v4237 = vpack.c.b16 %v4147, %v4145
    %v4238 = vpack.c.b16 %v4148, %v4146
    %v4239 = vpack.c.b16 %v4151, %v4149
    %v4240 = vpack.c.b16 %v4152, %v4150
    %v4241 = vpack.c.b16 %v4155, %v4153
    %v4242 = vpack.c.b16 %v4156, %v4154
    %v4243 = vpack.c.b16 %v4159, %v4157
    %v4244 = vpack.c.b16 %v4160, %v4158
    %v4245 = vpack.c.b16 %v4163, %v4161
    %v4246 = vpack.c.b16 %v4164, %v4162
    %v4247 = vpack.c.b16 %v4167, %v4165
    %v4248 = vpack.c.b16 %v4168, %v4166
    %v4249 = vpack.c.b16 %v4171, %v4169
    %v4250 = vpack.c.b16 %v4172, %v4170
    %v4251 = vpack.c.b16 %v4175, %v4173
    %v4252 = vpack.c.b16 %v4176, %v4174
    %v4253 = vpack.c.b16 %v4179, %v4177
    %v4254 = vpack.c.b16 %v4180, %v4178
    %v4255 = vpack.c.b16 %v4183, %v4181
    %v4256 = vpack.c.b16 %v4184, %v4182
    %v4257 = vpack.c.b16 %v4187, %v4185
    %v4258 = vpack.c.b16 %v4188, %v4186
    %v4259 = vpack.c.b16 %v4191, %v4189
    %v4260 = vpack.c.b16 %v4192, %v4190
    %v4261 = vpack.c.b16 %v4195, %v4193
    %v4262 = vpack.c.b16 %v4196, %v4194
    %v4263 = vpack.c.b16 %v4199, %v4197
    %v4264 = vpack.c.b16 %v4200, %v4198
    %4329 = vmatprep.subr.bf16.mxu0 %v4216
    %4330 = vmatpush1.bf16.msra.mxu0 %v4215
    %4331 = vmatprep.subr.bf16.mxu0 %v4214
    %4332 = vmatpush1.bf16.msra.mxu0 %v4213
    %4333 = vmatprep.subr.bf16.mxu0 %v4212
    %4334 = vmatpush1.bf16.msra.mxu0 %v4211
    %4335 = vmatprep.subr.bf16.mxu0 %v4210
    %4336 = vmatpush1.bf16.msra.mxu0 %v4209
    %4337 = vmatprep.subr.bf16.mxu0 %v4208
    %4338 = vmatpush1.bf16.msra.mxu0 %v4207
    %4339 = vmatprep.subr.bf16.mxu0 %v4206
    %4340 = vmatpush1.bf16.msra.mxu0 %v4205
    %4341 = vmatprep.subr.bf16.mxu0 %v4204
    %4342 = vmatpush1.bf16.msra.mxu0 %v4203
    %4343 = vmatprep.subr.bf16.mxu0 %v4202
    %4344 = vmatpush1.bf16.msra.mxu0 %v4201
    %4345 = vmatprep.subr.bf16.mxu0 %v4232
    %4346 = vmatpush2.bf16.msra.mxu0 %v4231
    %4347 = vmatprep.subr.bf16.mxu0 %v4230
    %4348 = vmatpush2.bf16.msra.mxu0 %v4229
    %4349 = vmatprep.subr.bf16.mxu0 %v4228
    %4350 = vmatpush2.bf16.msra.mxu0 %v4227
    %4351 = vmatprep.subr.bf16.mxu0 %v4226
    %4352 = vmatpush2.bf16.msra.mxu0 %v4225
    %4353 = vmatprep.subr.bf16.mxu0 %v4224
    %4354 = vmatpush2.bf16.msra.mxu0 %v4223
    %4355 = vmatprep.subr.bf16.mxu0 %v4222
    %4356 = vmatpush2.bf16.msra.mxu0 %v4221
    %4357 = vmatprep.subr.bf16.mxu0 %v4220
    %4358 = vmatpush2.bf16.msra.mxu0 %v4219
    %4359 = vmatprep.subr.bf16.mxu0 %v4218
    %4360 = vmatpush2.bf16.msra.mxu0 %v4217
    %4361 = vmatprep.mubr.bf16.mxu0 %v3930
    %4362 = vmatmul.mubr.bf16.gmra.mxu0 %v3929
    %v4363 = vpop.f32.mrf.mxu0
    %v4364 = vadd.f32 %v4002, %v4363
    %v4365 = vpop.f32.mrf.mxu0
    %v4366 = vadd.f32 %v4006, %v4365
    %v4367 = vpop.f32.mrf.mxu0
    %v4368 = vpop.f32.mrf.mxu0
    %4369 = vdwg.mxu0
    %4370 = vmatprep.subr.bf16.mxu0 %v4248
    %4371 = vmatpush1.bf16.msra.mxu0 %v4247
    %4372 = vmatprep.subr.bf16.mxu0 %v4246
    %4373 = vmatpush1.bf16.msra.mxu0 %v4245
    %4374 = vmatprep.subr.bf16.mxu0 %v4244
    %4375 = vmatpush1.bf16.msra.mxu0 %v4243
    %4376 = vmatprep.subr.bf16.mxu0 %v4242
    %4377 = vmatpush1.bf16.msra.mxu0 %v4241
    %4378 = vmatprep.subr.bf16.mxu0 %v4240
    %4379 = vmatpush1.bf16.msra.mxu0 %v4239
    %4380 = vmatprep.subr.bf16.mxu0 %v4238
    %4381 = vmatpush1.bf16.msra.mxu0 %v4237
    %4382 = vmatprep.subr.bf16.mxu0 %v4236
    %4383 = vmatpush1.bf16.msra.mxu0 %v4235
    %4384 = vmatprep.subr.bf16.mxu0 %v4234
    %4385 = vmatpush1.bf16.msra.mxu0 %v4233
    %4386 = vmatprep.subr.bf16.mxu0 %v4264
    %4387 = vmatpush2.bf16.msra.mxu0 %v4263
    %4388 = vmatprep.subr.bf16.mxu0 %v4262
    %4389 = vmatpush2.bf16.msra.mxu0 %v4261
    %4390 = vmatprep.subr.bf16.mxu0 %v4260
    %4391 = vmatpush2.bf16.msra.mxu0 %v4259
    %4392 = vmatprep.subr.bf16.mxu0 %v4258
    %4393 = vmatpush2.bf16.msra.mxu0 %v4257
    %4394 = vmatprep.subr.bf16.mxu0 %v4256
    %4395 = vmatpush2.bf16.msra.mxu0 %v4255
    %4396 = vmatprep.subr.bf16.mxu0 %v4254
    %4397 = vmatpush2.bf16.msra.mxu0 %v4253
    %4398 = vmatprep.subr.bf16.mxu0 %v4252
    %4399 = vmatpush2.bf16.msra.mxu0 %v4251
    %4400 = vmatprep.subr.bf16.mxu0 %v4250
    %4401 = vmatpush2.bf16.msra.mxu0 %v4249
    %4402 = vmatprep.mubr.bf16.mxu0 %v3932
    %4403 = vmatmul.mubr.bf16.gmra.mxu0 %v3931
    %v4404 = vpop.f32.mrf.mxu0
    %v4405 = vadd.f32 %v4364, %v4404
    %v4406 = vpop.f32.mrf.mxu0
    %v4407 = vadd.f32 %v4366, %v4406
    %v4408 = vpop.f32.mrf.mxu0
    %v4409 = vpop.f32.mrf.mxu0
    %4410 = vdwg.mxu0
    %v4411 = vmax.f32 %v4405, 0.0
    %v4412 = vmax.f32 %v4407, 0.0
    %v4413 = vpack.c.bf16 %v4411, %v4411
    %v4414 = vpack.c.bf16 %v4412, %v4412
    %v4415 = vld [vmem:[#allocation11] sm:$0xf]
    %v4416 = vld [vmem:[#allocation11 + $0x4] sm:$0xf]
    %v4417 = vld [vmem:[#allocation11 + $0x8] sm:$0xf]
    %v4418 = vld [vmem:[#allocation11 + $0xc] sm:$0xf]
    %v4419 = vld [vmem:[#allocation11 + $0x10] sm:$0xf]
    %v4420 = vld [vmem:[#allocation11 + $0x14] sm:$0xf]
    %v4421 = vld [vmem:[#allocation11 + $0x18] sm:$0xf]
    %v4422 = vld [vmem:[#allocation11 + $0x1c] sm:$0xf]
    %v4423 = vld [vmem:[#allocation11 + $0x20] sm:$0xf]
    %v4424 = vld [vmem:[#allocation11 + $0x24] sm:$0xf]
    %v4425 = vld [vmem:[#allocation11 + $0x28] sm:$0xf]
    %v4426 = vld [vmem:[#allocation11 + $0x2c] sm:$0xf]
    %v4427 = vld [vmem:[#allocation11 + $0x30] sm:$0xf]
    %v4428 = vld [vmem:[#allocation11 + $0x34] sm:$0xf]
    %v4429 = vld [vmem:[#allocation11 + $0x38] sm:$0xf]
    %v4430 = vld [vmem:[#allocation11 + $0x3c] sm:$0xf]
    %v4431 = vld [vmem:[#allocation11 + $0x40] sm:$0xf]
    %v4432 = vld [vmem:[#allocation11 + $0x44] sm:$0xf]
    %v4433 = vld [vmem:[#allocation11 + $0x48] sm:$0xf]
    %v4434 = vld [vmem:[#allocation11 + $0x4c] sm:$0xf]
    %v4435 = vld [vmem:[#allocation11 + $0x50] sm:$0xf]
    %v4436 = vld [vmem:[#allocation11 + $0x54] sm:$0xf]
    %v4437 = vld [vmem:[#allocation11 + $0x58] sm:$0xf]
    %v4438 = vld [vmem:[#allocation11 + $0x5c] sm:$0xf]
    %v4439 = vld [vmem:[#allocation11 + $0x60] sm:$0xf]
    %v4440 = vld [vmem:[#allocation11 + $0x64] sm:$0xf]
    %v4441 = vld [vmem:[#allocation11 + $0x68] sm:$0xf]
    %v4442 = vld [vmem:[#allocation11 + $0x6c] sm:$0xf]
    %v4443 = vld [vmem:[#allocation11 + $0x70] sm:$0xf]
    %v4444 = vld [vmem:[#allocation11 + $0x74] sm:$0xf]
    %v4445 = vld [vmem:[#allocation11 + $0x78] sm:$0xf]
    %v4446 = vld [vmem:[#allocation11 + $0x7c] sm:$0xf]
    %v4447 = vld [vmem:[#allocation13] sm:$0x1]
    %v4449 = vlaneseq
    %v4450 = vshrl.u32 %v4449, 7
    %v4451 = vsub.s32 0, %v4450
    %v4452 = vrot.slane %v4447, %v4451
    %v4486 = vunpack.c.l.b16 %v4415
    %v4487 = vunpack.c.l.b16 %v4416
    %v4488 = vunpack.c.l.b16 %v4417
    %v4489 = vunpack.c.l.b16 %v4418
    %v4490 = vunpack.c.l.b16 %v4419
    %v4491 = vunpack.c.l.b16 %v4420
    %v4492 = vunpack.c.l.b16 %v4421
    %v4493 = vunpack.c.l.b16 %v4422
    %v4494 = vunpack.c.l.b16 %v4423
    %v4495 = vunpack.c.l.b16 %v4424
    %v4496 = vunpack.c.l.b16 %v4425
    %v4497 = vunpack.c.l.b16 %v4426
    %v4498 = vunpack.c.l.b16 %v4427
    %v4499 = vunpack.c.l.b16 %v4428
    %v4500 = vunpack.c.l.b16 %v4429
    %v4501 = vunpack.c.l.b16 %v4430
    %v4502 = vunpack.c.l.b16 %v4431
    %v4503 = vunpack.c.l.b16 %v4432
    %v4504 = vunpack.c.l.b16 %v4433
    %v4505 = vunpack.c.l.b16 %v4434
    %v4506 = vunpack.c.l.b16 %v4435
    %v4507 = vunpack.c.l.b16 %v4436
    %v4508 = vunpack.c.l.b16 %v4437
    %v4509 = vunpack.c.l.b16 %v4438
    %v4510 = vunpack.c.l.b16 %v4439
    %v4511 = vunpack.c.l.b16 %v4440
    %v4512 = vunpack.c.l.b16 %v4441
    %v4513 = vunpack.c.l.b16 %v4442
    %v4514 = vunpack.c.l.b16 %v4443
    %v4515 = vunpack.c.l.b16 %v4444
    %v4516 = vunpack.c.l.b16 %v4445
    %v4517 = vunpack.c.l.b16 %v4446
    %v4518 = vpack.c.b16 %v4487, %v4486
    %v4519 = vpack.c.b16 %v4489, %v4488
    %v4520 = vpack.c.b16 %v4491, %v4490
    %v4521 = vpack.c.b16 %v4493, %v4492
    %v4522 = vpack.c.b16 %v4495, %v4494
    %v4523 = vpack.c.b16 %v4497, %v4496
    %v4524 = vpack.c.b16 %v4499, %v4498
    %v4525 = vpack.c.b16 %v4501, %v4500
    %v4526 = vpack.c.b16 %v4503, %v4502
    %v4527 = vpack.c.b16 %v4505, %v4504
    %v4528 = vpack.c.b16 %v4507, %v4506
    %v4529 = vpack.c.b16 %v4509, %v4508
    %v4530 = vpack.c.b16 %v4511, %v4510
    %v4531 = vpack.c.b16 %v4513, %v4512
    %v4532 = vpack.c.b16 %v4515, %v4514
    %v4533 = vpack.c.b16 %v4517, %v4516
    %4550 = vmatprep.subr.bf16.mxu0 0
    %4551 = vmatpush1.bf16.msra.mxu0 %v4525
    %4552 = vmatprep.subr.bf16.mxu0 0
    %4553 = vmatpush1.bf16.msra.mxu0 %v4524
    %4554 = vmatprep.subr.bf16.mxu0 0
    %4555 = vmatpush1.bf16.msra.mxu0 %v4523
    %4556 = vmatprep.subr.bf16.mxu0 0
    %4557 = vmatpush1.bf16.msra.mxu0 %v4522
    %4558 = vmatprep.subr.bf16.mxu0 0
    %4559 = vmatpush1.bf16.msra.mxu0 %v4521
    %4560 = vmatprep.subr.bf16.mxu0 0
    %4561 = vmatpush1.bf16.msra.mxu0 %v4520
    %4562 = vmatprep.subr.bf16.mxu0 0
    %4563 = vmatpush1.bf16.msra.mxu0 %v4519
    %4564 = vmatprep.subr.bf16.mxu0 0
    %4565 = vmatpush1.bf16.msra.mxu0 %v4518
    %4566 = vmatprep.subr.bf16.mxu0 0
    %4567 = vmatpush2.bf16.msra.mxu0 %v4533
    %4568 = vmatprep.subr.bf16.mxu0 0
    %4569 = vmatpush2.bf16.msra.mxu0 %v4532
    %4570 = vmatprep.subr.bf16.mxu0 0
    %4571 = vmatpush2.bf16.msra.mxu0 %v4531
    %4572 = vmatprep.subr.bf16.mxu0 0
    %4573 = vmatpush2.bf16.msra.mxu0 %v4530
    %4574 = vmatprep.subr.bf16.mxu0 0
    %4575 = vmatpush2.bf16.msra.mxu0 %v4529
    %4576 = vmatprep.subr.bf16.mxu0 0
    %4577 = vmatpush2.bf16.msra.mxu0 %v4528
    %4578 = vmatprep.subr.bf16.mxu0 0
    %4579 = vmatpush2.bf16.msra.mxu0 %v4527
    %4580 = vmatprep.subr.bf16.mxu0 0
    %4581 = vmatpush2.bf16.msra.mxu0 %v4526
    %4582 = vmatprep.mubr.bf16.mxu0 %v4414
    %4583 = vmatmul.mubr.bf16.gmra.mxu0 %v4413
    %v4584 = vpop.f32.mrf.mxu0
    %v4585 = vadd.f32 %v4452, %v4584
    %v4586 = vpop.f32.mrf.mxu0
    %v4587 = vpop.f32.mrf.mxu0
    %v4588 = vpop.f32.mrf.mxu0
    %4589 = vdwg.mxu0
    %4590 = vmax.xlane.f32.xlu0 %v4585
    %v4591 = vpop.xlane.xlu0 %4590
    %v4592 = vsub.f32 %v4585, %v4591
    %v4593 = vmul.f32 %v4592, 1.442695
    %v4594 = vpow.pop %v4593
    %4595 = vadd.xlane.f32.xlu0 %v4594
    %v4596 = vpop.xlane.xlu0 %4595
    %v4597 = vlog2.pop %v4596
    %v4598 = vmul.f32 %v4597, 0.6931472
    %v4599 = vsub.f32 %v4592, %v4598
    %4600 = vst [vmem:[#allocation14] sm:$0xff] %v4599
    %v4601 = vpack.c.bf16 %v3925, %v3925
    %v4602 = vpack.c.bf16 %v3926, %v3926
    %v4603 = vpack.c.bf16 %v3927, %v3927
    %v4604 = vpack.c.bf16 %v3928, %v3928
    %s4605 = scalar_lea.vmem [#allocation8], 512
    %v4606 = vld [vmem:[%s4605] sm:$0xff]
    %v4607 = vld [vmem:[%s4605 + $0x8] sm:$0xff]
    %v4608 = vld [vmem:[%s4605 + $0x10] sm:$0xff]
    %v4609 = vld [vmem:[%s4605 + $0x18] sm:$0xff]
    %v4610 = vld [vmem:[%s4605 + $0x20] sm:$0xff]
    %v4611 = vld [vmem:[%s4605 + $0x28] sm:$0xff]
    %v4612 = vld [vmem:[%s4605 + $0x30] sm:$0xff]
    %v4613 = vld [vmem:[%s4605 + $0x38] sm:$0xff]
    %v4614 = vld [vmem:[%s4605 + $0x40] sm:$0xff]
    %v4615 = vld [vmem:[%s4605 + $0x48] sm:$0xff]
    %v4616 = vld [vmem:[%s4605 + $0x50] sm:$0xff]
    %v4617 = vld [vmem:[%s4605 + $0x58] sm:$0xff]
    %v4618 = vld [vmem:[%s4605 + $0x60] sm:$0xff]
    %v4619 = vld [vmem:[%s4605 + $0x68] sm:$0xff]
    %v4620 = vld [vmem:[%s4605 + $0x70] sm:$0xff]
    %v4621 = vld [vmem:[%s4605 + $0x78] sm:$0xff]
    %v4622 = vld [vmem:[%s4605 + $0x80] sm:$0xff]
    %v4623 = vld [vmem:[%s4605 + $0x88] sm:$0xff]
    %v4624 = vld [vmem:[%s4605 + $0x90] sm:$0xff]
    %v4625 = vld [vmem:[%s4605 + $0x98] sm:$0xff]
    %v4626 = vld [vmem:[%s4605 + $0xa0] sm:$0xff]
    %v4627 = vld [vmem:[%s4605 + $0xa8] sm:$0xff]
    %v4628 = vld [vmem:[%s4605 + $0xb0] sm:$0xff]
    %v4629 = vld [vmem:[%s4605 + $0xb8] sm:$0xff]
    %v4630 = vld [vmem:[%s4605 + $0xc0] sm:$0xff]
    %v4631 = vld [vmem:[%s4605 + $0xc8] sm:$0xff]
    %v4632 = vld [vmem:[%s4605 + $0xd0] sm:$0xff]
    %v4633 = vld [vmem:[%s4605 + $0xd8] sm:$0xff]
    %v4634 = vld [vmem:[%s4605 + $0xe0] sm:$0xff]
    %v4635 = vld [vmem:[%s4605 + $0xe8] sm:$0xff]
    %v4636 = vld [vmem:[%s4605 + $0xf0] sm:$0xff]
    %v4637 = vld [vmem:[%s4605 + $0xf8] sm:$0xff]
    %v4638 = vld [vmem:[%s4605 + $0x100] sm:$0xff]
    %v4639 = vld [vmem:[%s4605 + $0x108] sm:$0xff]
    %v4640 = vld [vmem:[%s4605 + $0x110] sm:$0xff]
    %v4641 = vld [vmem:[%s4605 + $0x118] sm:$0xff]
    %v4642 = vld [vmem:[%s4605 + $0x120] sm:$0xff]
    %v4643 = vld [vmem:[%s4605 + $0x128] sm:$0xff]
    %v4644 = vld [vmem:[%s4605 + $0x130] sm:$0xff]
    %v4645 = vld [vmem:[%s4605 + $0x138] sm:$0xff]
    %v4646 = vld [vmem:[%s4605 + $0x140] sm:$0xff]
    %v4647 = vld [vmem:[%s4605 + $0x148] sm:$0xff]
    %v4648 = vld [vmem:[%s4605 + $0x150] sm:$0xff]
    %v4649 = vld [vmem:[%s4605 + $0x158] sm:$0xff]
    %v4650 = vld [vmem:[%s4605 + $0x160] sm:$0xff]
    %v4651 = vld [vmem:[%s4605 + $0x168] sm:$0xff]
    %v4652 = vld [vmem:[%s4605 + $0x170] sm:$0xff]
    %v4653 = vld [vmem:[%s4605 + $0x178] sm:$0xff]
    %v4654 = vld [vmem:[%s4605 + $0x180] sm:$0xff]
    %v4655 = vld [vmem:[%s4605 + $0x188] sm:$0xff]
    %v4656 = vld [vmem:[%s4605 + $0x190] sm:$0xff]
    %v4657 = vld [vmem:[%s4605 + $0x198] sm:$0xff]
    %v4658 = vld [vmem:[%s4605 + $0x1a0] sm:$0xff]
    %v4659 = vld [vmem:[%s4605 + $0x1a8] sm:$0xff]
    %v4660 = vld [vmem:[%s4605 + $0x1b0] sm:$0xff]
    %v4661 = vld [vmem:[%s4605 + $0x1b8] sm:$0xff]
    %v4662 = vld [vmem:[%s4605 + $0x1c0] sm:$0xff]
    %v4663 = vld [vmem:[%s4605 + $0x1c8] sm:$0xff]
    %v4664 = vld [vmem:[%s4605 + $0x1d0] sm:$0xff]
    %v4665 = vld [vmem:[%s4605 + $0x1d8] sm:$0xff]
    %v4666 = vld [vmem:[%s4605 + $0x1e0] sm:$0xff]
    %v4667 = vld [vmem:[%s4605 + $0x1e8] sm:$0xff]
    %v4668 = vld [vmem:[%s4605 + $0x1f0] sm:$0xff]
    %v4669 = vld [vmem:[%s4605 + $0x1f8] sm:$0xff]
    %s4670 = scalar_lea.vmem [#allocation10], 2
    %v4671 = vld [vmem:[%s4670] sm:$0x3]
    %v4673 = vlaneseq
    %v4674 = vshrl.u32 %v4673, 7
    %v4675 = vsub.s32 0, %v4674
    %v4676 = vrot.slane %v4671, %v4675
    %v4677 = vlaneseq
    %v4678 = vshrl.u32 %v4677, 7
    %v4679 = vsub.s32 1, %v4678
    %v4680 = vrot.slane %v4671, %v4679
    %v4747 = vunpack.c.l.b16 %v4606
    %v4748 = vunpack.c.h.b16 %v4606
    %v4749 = vunpack.c.l.b16 %v4607
    %v4750 = vunpack.c.h.b16 %v4607
    %v4751 = vunpack.c.l.b16 %v4608
    %v4752 = vunpack.c.h.b16 %v4608
    %v4753 = vunpack.c.l.b16 %v4609
    %v4754 = vunpack.c.h.b16 %v4609
    %v4755 = vunpack.c.l.b16 %v4610
    %v4756 = vunpack.c.h.b16 %v4610
    %v4757 = vunpack.c.l.b16 %v4611
    %v4758 = vunpack.c.h.b16 %v4611
    %v4759 = vunpack.c.l.b16 %v4612
    %v4760 = vunpack.c.h.b16 %v4612
    %v4761 = vunpack.c.l.b16 %v4613
    %v4762 = vunpack.c.h.b16 %v4613
    %v4763 = vunpack.c.l.b16 %v4614
    %v4764 = vunpack.c.h.b16 %v4614
    %v4765 = vunpack.c.l.b16 %v4615
    %v4766 = vunpack.c.h.b16 %v4615
    %v4767 = vunpack.c.l.b16 %v4616
    %v4768 = vunpack.c.h.b16 %v4616
    %v4769 = vunpack.c.l.b16 %v4617
    %v4770 = vunpack.c.h.b16 %v4617
    %v4771 = vunpack.c.l.b16 %v4618
    %v4772 = vunpack.c.h.b16 %v4618
    %v4773 = vunpack.c.l.b16 %v4619
    %v4774 = vunpack.c.h.b16 %v4619
    %v4775 = vunpack.c.l.b16 %v4620
    %v4776 = vunpack.c.h.b16 %v4620
    %v4777 = vunpack.c.l.b16 %v4621
    %v4778 = vunpack.c.h.b16 %v4621
    %v4779 = vunpack.c.l.b16 %v4622
    %v4780 = vunpack.c.h.b16 %v4622
    %v4781 = vunpack.c.l.b16 %v4623
    %v4782 = vunpack.c.h.b16 %v4623
    %v4783 = vunpack.c.l.b16 %v4624
    %v4784 = vunpack.c.h.b16 %v4624
    %v4785 = vunpack.c.l.b16 %v4625
    %v4786 = vunpack.c.h.b16 %v4625
    %v4787 = vunpack.c.l.b16 %v4626
    %v4788 = vunpack.c.h.b16 %v4626
    %v4789 = vunpack.c.l.b16 %v4627
    %v4790 = vunpack.c.h.b16 %v4627
    %v4791 = vunpack.c.l.b16 %v4628
    %v4792 = vunpack.c.h.b16 %v4628
    %v4793 = vunpack.c.l.b16 %v4629
    %v4794 = vunpack.c.h.b16 %v4629
    %v4795 = vunpack.c.l.b16 %v4630
    %v4796 = vunpack.c.h.b16 %v4630
    %v4797 = vunpack.c.l.b16 %v4631
    %v4798 = vunpack.c.h.b16 %v4631
    %v4799 = vunpack.c.l.b16 %v4632
    %v4800 = vunpack.c.h.b16 %v4632
    %v4801 = vunpack.c.l.b16 %v4633
    %v4802 = vunpack.c.h.b16 %v4633
    %v4803 = vunpack.c.l.b16 %v4634
    %v4804 = vunpack.c.h.b16 %v4634
    %v4805 = vunpack.c.l.b16 %v4635
    %v4806 = vunpack.c.h.b16 %v4635
    %v4807 = vunpack.c.l.b16 %v4636
    %v4808 = vunpack.c.h.b16 %v4636
    %v4809 = vunpack.c.l.b16 %v4637
    %v4810 = vunpack.c.h.b16 %v4637
    %v4811 = vunpack.c.l.b16 %v4638
    %v4812 = vunpack.c.h.b16 %v4638
    %v4813 = vunpack.c.l.b16 %v4639
    %v4814 = vunpack.c.h.b16 %v4639
    %v4815 = vunpack.c.l.b16 %v4640
    %v4816 = vunpack.c.h.b16 %v4640
    %v4817 = vunpack.c.l.b16 %v4641
    %v4818 = vunpack.c.h.b16 %v4641
    %v4819 = vunpack.c.l.b16 %v4642
    %v4820 = vunpack.c.h.b16 %v4642
    %v4821 = vunpack.c.l.b16 %v4643
    %v4822 = vunpack.c.h.b16 %v4643
    %v4823 = vunpack.c.l.b16 %v4644
    %v4824 = vunpack.c.h.b16 %v4644
    %v4825 = vunpack.c.l.b16 %v4645
    %v4826 = vunpack.c.h.b16 %v4645
    %v4827 = vunpack.c.l.b16 %v4646
    %v4828 = vunpack.c.h.b16 %v4646
    %v4829 = vunpack.c.l.b16 %v4647
    %v4830 = vunpack.c.h.b16 %v4647
    %v4831 = vunpack.c.l.b16 %v4648
    %v4832 = vunpack.c.h.b16 %v4648
    %v4833 = vunpack.c.l.b16 %v4649
    %v4834 = vunpack.c.h.b16 %v4649
    %v4835 = vunpack.c.l.b16 %v4650
    %v4836 = vunpack.c.h.b16 %v4650
    %v4837 = vunpack.c.l.b16 %v4651
    %v4838 = vunpack.c.h.b16 %v4651
    %v4839 = vunpack.c.l.b16 %v4652
    %v4840 = vunpack.c.h.b16 %v4652
    %v4841 = vunpack.c.l.b16 %v4653
    %v4842 = vunpack.c.h.b16 %v4653
    %v4843 = vunpack.c.l.b16 %v4654
    %v4844 = vunpack.c.h.b16 %v4654
    %v4845 = vunpack.c.l.b16 %v4655
    %v4846 = vunpack.c.h.b16 %v4655
    %v4847 = vunpack.c.l.b16 %v4656
    %v4848 = vunpack.c.h.b16 %v4656
    %v4849 = vunpack.c.l.b16 %v4657
    %v4850 = vunpack.c.h.b16 %v4657
    %v4851 = vunpack.c.l.b16 %v4658
    %v4852 = vunpack.c.h.b16 %v4658
    %v4853 = vunpack.c.l.b16 %v4659
    %v4854 = vunpack.c.h.b16 %v4659
    %v4855 = vunpack.c.l.b16 %v4660
    %v4856 = vunpack.c.h.b16 %v4660
    %v4857 = vunpack.c.l.b16 %v4661
    %v4858 = vunpack.c.h.b16 %v4661
    %v4859 = vunpack.c.l.b16 %v4662
    %v4860 = vunpack.c.h.b16 %v4662
    %v4861 = vunpack.c.l.b16 %v4663
    %v4862 = vunpack.c.h.b16 %v4663
    %v4863 = vunpack.c.l.b16 %v4664
    %v4864 = vunpack.c.h.b16 %v4664
    %v4865 = vunpack.c.l.b16 %v4665
    %v4866 = vunpack.c.h.b16 %v4665
    %v4867 = vunpack.c.l.b16 %v4666
    %v4868 = vunpack.c.h.b16 %v4666
    %v4869 = vunpack.c.l.b16 %v4667
    %v4870 = vunpack.c.h.b16 %v4667
    %v4871 = vunpack.c.l.b16 %v4668
    %v4872 = vunpack.c.h.b16 %v4668
    %v4873 = vunpack.c.l.b16 %v4669
    %v4874 = vunpack.c.h.b16 %v4669
    %v4875 = vpack.c.b16 %v4749, %v4747
    %v4876 = vpack.c.b16 %v4750, %v4748
    %v4877 = vpack.c.b16 %v4753, %v4751
    %v4878 = vpack.c.b16 %v4754, %v4752
    %v4879 = vpack.c.b16 %v4757, %v4755
    %v4880 = vpack.c.b16 %v4758, %v4756
    %v4881 = vpack.c.b16 %v4761, %v4759
    %v4882 = vpack.c.b16 %v4762, %v4760
    %v4883 = vpack.c.b16 %v4765, %v4763
    %v4884 = vpack.c.b16 %v4766, %v4764
    %v4885 = vpack.c.b16 %v4769, %v4767
    %v4886 = vpack.c.b16 %v4770, %v4768
    %v4887 = vpack.c.b16 %v4773, %v4771
    %v4888 = vpack.c.b16 %v4774, %v4772
    %v4889 = vpack.c.b16 %v4777, %v4775
    %v4890 = vpack.c.b16 %v4778, %v4776
    %v4891 = vpack.c.b16 %v4781, %v4779
    %v4892 = vpack.c.b16 %v4782, %v4780
    %v4893 = vpack.c.b16 %v4785, %v4783
    %v4894 = vpack.c.b16 %v4786, %v4784
    %v4895 = vpack.c.b16 %v4789, %v4787
    %v4896 = vpack.c.b16 %v4790, %v4788
    %v4897 = vpack.c.b16 %v4793, %v4791
    %v4898 = vpack.c.b16 %v4794, %v4792
    %v4899 = vpack.c.b16 %v4797, %v4795
    %v4900 = vpack.c.b16 %v4798, %v4796
    %v4901 = vpack.c.b16 %v4801, %v4799
    %v4902 = vpack.c.b16 %v4802, %v4800
    %v4903 = vpack.c.b16 %v4805, %v4803
    %v4904 = vpack.c.b16 %v4806, %v4804
    %v4905 = vpack.c.b16 %v4809, %v4807
    %v4906 = vpack.c.b16 %v4810, %v4808
    %v4907 = vpack.c.b16 %v4813, %v4811
    %v4908 = vpack.c.b16 %v4814, %v4812
    %v4909 = vpack.c.b16 %v4817, %v4815
    %v4910 = vpack.c.b16 %v4818, %v4816
    %v4911 = vpack.c.b16 %v4821, %v4819
    %v4912 = vpack.c.b16 %v4822, %v4820
    %v4913 = vpack.c.b16 %v4825, %v4823
    %v4914 = vpack.c.b16 %v4826, %v4824
    %v4915 = vpack.c.b16 %v4829, %v4827
    %v4916 = vpack.c.b16 %v4830, %v4828
    %v4917 = vpack.c.b16 %v4833, %v4831
    %v4918 = vpack.c.b16 %v4834, %v4832
    %v4919 = vpack.c.b16 %v4837, %v4835
    %v4920 = vpack.c.b16 %v4838, %v4836
    %v4921 = vpack.c.b16 %v4841, %v4839
    %v4922 = vpack.c.b16 %v4842, %v4840
    %v4923 = vpack.c.b16 %v4845, %v4843
    %v4924 = vpack.c.b16 %v4846, %v4844
    %v4925 = vpack.c.b16 %v4849, %v4847
    %v4926 = vpack.c.b16 %v4850, %v4848
    %v4927 = vpack.c.b16 %v4853, %v4851
    %v4928 = vpack.c.b16 %v4854, %v4852
    %v4929 = vpack.c.b16 %v4857, %v4855
    %v4930 = vpack.c.b16 %v4858, %v4856
    %v4931 = vpack.c.b16 %v4861, %v4859
    %v4932 = vpack.c.b16 %v4862, %v4860
    %v4933 = vpack.c.b16 %v4865, %v4863
    %v4934 = vpack.c.b16 %v4866, %v4864
    %v4935 = vpack.c.b16 %v4869, %v4867
    %v4936 = vpack.c.b16 %v4870, %v4868
    %v4937 = vpack.c.b16 %v4873, %v4871
    %v4938 = vpack.c.b16 %v4874, %v4872
    %5003 = vmatprep.subr.bf16.mxu0 %v4890
    %5004 = vmatpush1.bf16.msra.mxu0 %v4889
    %5005 = vmatprep.subr.bf16.mxu0 %v4888
    %5006 = vmatpush1.bf16.msra.mxu0 %v4887
    %5007 = vmatprep.subr.bf16.mxu0 %v4886
    %5008 = vmatpush1.bf16.msra.mxu0 %v4885
    %5009 = vmatprep.subr.bf16.mxu0 %v4884
    %5010 = vmatpush1.bf16.msra.mxu0 %v4883
    %5011 = vmatprep.subr.bf16.mxu0 %v4882
    %5012 = vmatpush1.bf16.msra.mxu0 %v4881
    %5013 = vmatprep.subr.bf16.mxu0 %v4880
    %5014 = vmatpush1.bf16.msra.mxu0 %v4879
    %5015 = vmatprep.subr.bf16.mxu0 %v4878
    %5016 = vmatpush1.bf16.msra.mxu0 %v4877
    %5017 = vmatprep.subr.bf16.mxu0 %v4876
    %5018 = vmatpush1.bf16.msra.mxu0 %v4875
    %5019 = vmatprep.subr.bf16.mxu0 %v4906
    %5020 = vmatpush2.bf16.msra.mxu0 %v4905
    %5021 = vmatprep.subr.bf16.mxu0 %v4904
    %5022 = vmatpush2.bf16.msra.mxu0 %v4903
    %5023 = vmatprep.subr.bf16.mxu0 %v4902
    %5024 = vmatpush2.bf16.msra.mxu0 %v4901
    %5025 = vmatprep.subr.bf16.mxu0 %v4900
    %5026 = vmatpush2.bf16.msra.mxu0 %v4899
    %5027 = vmatprep.subr.bf16.mxu0 %v4898
    %5028 = vmatpush2.bf16.msra.mxu0 %v4897
    %5029 = vmatprep.subr.bf16.mxu0 %v4896
    %5030 = vmatpush2.bf16.msra.mxu0 %v4895
    %5031 = vmatprep.subr.bf16.mxu0 %v4894
    %5032 = vmatpush2.bf16.msra.mxu0 %v4893
    %5033 = vmatprep.subr.bf16.mxu0 %v4892
    %5034 = vmatpush2.bf16.msra.mxu0 %v4891
    %5035 = vmatprep.mubr.bf16.mxu0 %v4602
    %5036 = vmatmul.mubr.bf16.gmra.mxu0 %v4601
    %v5037 = vpop.f32.mrf.mxu0
    %v5038 = vadd.f32 %v4676, %v5037
    %v5039 = vpop.f32.mrf.mxu0
    %v5040 = vadd.f32 %v4680, %v5039
    %v5041 = vpop.f32.mrf.mxu0
    %v5042 = vpop.f32.mrf.mxu0
    %5043 = vdwg.mxu0
    %5044 = vmatprep.subr.bf16.mxu0 %v4922
    %5045 = vmatpush1.bf16.msra.mxu0 %v4921
    %5046 = vmatprep.subr.bf16.mxu0 %v4920
    %5047 = vmatpush1.bf16.msra.mxu0 %v4919
    %5048 = vmatprep.subr.bf16.mxu0 %v4918
    %5049 = vmatpush1.bf16.msra.mxu0 %v4917
    %5050 = vmatprep.subr.bf16.mxu0 %v4916
    %5051 = vmatpush1.bf16.msra.mxu0 %v4915
    %5052 = vmatprep.subr.bf16.mxu0 %v4914
    %5053 = vmatpush1.bf16.msra.mxu0 %v4913
    %5054 = vmatprep.subr.bf16.mxu0 %v4912
    %5055 = vmatpush1.bf16.msra.mxu0 %v4911
    %5056 = vmatprep.subr.bf16.mxu0 %v4910
    %5057 = vmatpush1.bf16.msra.mxu0 %v4909
    %5058 = vmatprep.subr.bf16.mxu0 %v4908
    %5059 = vmatpush1.bf16.msra.mxu0 %v4907
    %5060 = vmatprep.subr.bf16.mxu0 %v4938
    %5061 = vmatpush2.bf16.msra.mxu0 %v4937
    %5062 = vmatprep.subr.bf16.mxu0 %v4936
    %5063 = vmatpush2.bf16.msra.mxu0 %v4935
    %5064 = vmatprep.subr.bf16.mxu0 %v4934
    %5065 = vmatpush2.bf16.msra.mxu0 %v4933
    %5066 = vmatprep.subr.bf16.mxu0 %v4932
    %5067 = vmatpush2.bf16.msra.mxu0 %v4931
    %5068 = vmatprep.subr.bf16.mxu0 %v4930
    %5069 = vmatpush2.bf16.msra.mxu0 %v4929
    %5070 = vmatprep.subr.bf16.mxu0 %v4928
    %5071 = vmatpush2.bf16.msra.mxu0 %v4927
    %5072 = vmatprep.subr.bf16.mxu0 %v4926
    %5073 = vmatpush2.bf16.msra.mxu0 %v4925
    %5074 = vmatprep.subr.bf16.mxu0 %v4924
    %5075 = vmatpush2.bf16.msra.mxu0 %v4923
    %5076 = vmatprep.mubr.bf16.mxu0 %v4604
    %5077 = vmatmul.mubr.bf16.gmra.mxu0 %v4603
    %v5078 = vpop.f32.mrf.mxu0
    %v5079 = vadd.f32 %v5038, %v5078
    %v5080 = vpop.f32.mrf.mxu0
    %v5081 = vadd.f32 %v5040, %v5080
    %v5082 = vpop.f32.mrf.mxu0
    %v5083 = vpop.f32.mrf.mxu0
    %5084 = vdwg.mxu0
    %v5085 = vmax.f32 %v5079, 0.0
    %v5086 = vmax.f32 %v5081, 0.0
    %v5087 = vpack.c.bf16 %v5085, %v5085
    %v5088 = vpack.c.bf16 %v5086, %v5086
    %s5089 = scalar_lea.vmem [#allocation11], 128
    %v5090 = vld [vmem:[%s5089] sm:$0xf]
    %v5091 = vld [vmem:[%s5089 + $0x4] sm:$0xf]
    %v5092 = vld [vmem:[%s5089 + $0x8] sm:$0xf]
    %v5093 = vld [vmem:[%s5089 + $0xc] sm:$0xf]
    %v5094 = vld [vmem:[%s5089 + $0x10] sm:$0xf]
    %v5095 = vld [vmem:[%s5089 + $0x14] sm:$0xf]
    %v5096 = vld [vmem:[%s5089 + $0x18] sm:$0xf]
    %v5097 = vld [vmem:[%s5089 + $0x1c] sm:$0xf]
    %v5098 = vld [vmem:[%s5089 + $0x20] sm:$0xf]
    %v5099 = vld [vmem:[%s5089 + $0x24] sm:$0xf]
    %v5100 = vld [vmem:[%s5089 + $0x28] sm:$0xf]
    %v5101 = vld [vmem:[%s5089 + $0x2c] sm:$0xf]
    %v5102 = vld [vmem:[%s5089 + $0x30] sm:$0xf]
    %v5103 = vld [vmem:[%s5089 + $0x34] sm:$0xf]
    %v5104 = vld [vmem:[%s5089 + $0x38] sm:$0xf]
    %v5105 = vld [vmem:[%s5089 + $0x3c] sm:$0xf]
    %v5106 = vld [vmem:[%s5089 + $0x40] sm:$0xf]
    %v5107 = vld [vmem:[%s5089 + $0x44] sm:$0xf]
    %v5108 = vld [vmem:[%s5089 + $0x48] sm:$0xf]
    %v5109 = vld [vmem:[%s5089 + $0x4c] sm:$0xf]
    %v5110 = vld [vmem:[%s5089 + $0x50] sm:$0xf]
    %v5111 = vld [vmem:[%s5089 + $0x54] sm:$0xf]
    %v5112 = vld [vmem:[%s5089 + $0x58] sm:$0xf]
    %v5113 = vld [vmem:[%s5089 + $0x5c] sm:$0xf]
    %v5114 = vld [vmem:[%s5089 + $0x60] sm:$0xf]
    %v5115 = vld [vmem:[%s5089 + $0x64] sm:$0xf]
    %v5116 = vld [vmem:[%s5089 + $0x68] sm:$0xf]
    %v5117 = vld [vmem:[%s5089 + $0x6c] sm:$0xf]
    %v5118 = vld [vmem:[%s5089 + $0x70] sm:$0xf]
    %v5119 = vld [vmem:[%s5089 + $0x74] sm:$0xf]
    %v5120 = vld [vmem:[%s5089 + $0x78] sm:$0xf]
    %v5121 = vld [vmem:[%s5089 + $0x7c] sm:$0xf]
    %s5122 = scalar_lea.vmem [#allocation13], 1
    %v5123 = vld [vmem:[%s5122] sm:$0x1]
    %v5125 = vlaneseq
    %v5126 = vshrl.u32 %v5125, 7
    %v5127 = vsub.s32 0, %v5126
    %v5128 = vrot.slane %v5123, %v5127
    %v5162 = vunpack.c.l.b16 %v5090
    %v5163 = vunpack.c.l.b16 %v5091
    %v5164 = vunpack.c.l.b16 %v5092
    %v5165 = vunpack.c.l.b16 %v5093
    %v5166 = vunpack.c.l.b16 %v5094
    %v5167 = vunpack.c.l.b16 %v5095
    %v5168 = vunpack.c.l.b16 %v5096
    %v5169 = vunpack.c.l.b16 %v5097
    %v5170 = vunpack.c.l.b16 %v5098
    %v5171 = vunpack.c.l.b16 %v5099
    %v5172 = vunpack.c.l.b16 %v5100
    %v5173 = vunpack.c.l.b16 %v5101
    %v5174 = vunpack.c.l.b16 %v5102
    %v5175 = vunpack.c.l.b16 %v5103
    %v5176 = vunpack.c.l.b16 %v5104
    %v5177 = vunpack.c.l.b16 %v5105
    %v5178 = vunpack.c.l.b16 %v5106
    %v5179 = vunpack.c.l.b16 %v5107
    %v5180 = vunpack.c.l.b16 %v5108
    %v5181 = vunpack.c.l.b16 %v5109
    %v5182 = vunpack.c.l.b16 %v5110
    %v5183 = vunpack.c.l.b16 %v5111
    %v5184 = vunpack.c.l.b16 %v5112
    %v5185 = vunpack.c.l.b16 %v5113
    %v5186 = vunpack.c.l.b16 %v5114
    %v5187 = vunpack.c.l.b16 %v5115
    %v5188 = vunpack.c.l.b16 %v5116
    %v5189 = vunpack.c.l.b16 %v5117
    %v5190 = vunpack.c.l.b16 %v5118
    %v5191 = vunpack.c.l.b16 %v5119
    %v5192 = vunpack.c.l.b16 %v5120
    %v5193 = vunpack.c.l.b16 %v5121
    %v5194 = vpack.c.b16 %v5163, %v5162
    %v5195 = vpack.c.b16 %v5165, %v5164
    %v5196 = vpack.c.b16 %v5167, %v5166
    %v5197 = vpack.c.b16 %v5169, %v5168
    %v5198 = vpack.c.b16 %v5171, %v5170
    %v5199 = vpack.c.b16 %v5173, %v5172
    %v5200 = vpack.c.b16 %v5175, %v5174
    %v5201 = vpack.c.b16 %v5177, %v5176
    %v5202 = vpack.c.b16 %v5179, %v5178
    %v5203 = vpack.c.b16 %v5181, %v5180
    %v5204 = vpack.c.b16 %v5183, %v5182
    %v5205 = vpack.c.b16 %v5185, %v5184
    %v5206 = vpack.c.b16 %v5187, %v5186
    %v5207 = vpack.c.b16 %v5189, %v5188
    %v5208 = vpack.c.b16 %v5191, %v5190
    %v5209 = vpack.c.b16 %v5193, %v5192
    %5226 = vmatprep.subr.bf16.mxu0 0
    %5227 = vmatpush1.bf16.msra.mxu0 %v5201
    %5228 = vmatprep.subr.bf16.mxu0 0
    %5229 = vmatpush1.bf16.msra.mxu0 %v5200
    %5230 = vmatprep.subr.bf16.mxu0 0
    %5231 = vmatpush1.bf16.msra.mxu0 %v5199
    %5232 = vmatprep.subr.bf16.mxu0 0
    %5233 = vmatpush1.bf16.msra.mxu0 %v5198
    %5234 = vmatprep.subr.bf16.mxu0 0
    %5235 = vmatpush1.bf16.msra.mxu0 %v5197
    %5236 = vmatprep.subr.bf16.mxu0 0
    %5237 = vmatpush1.bf16.msra.mxu0 %v5196
    %5238 = vmatprep.subr.bf16.mxu0 0
    %5239 = vmatpush1.bf16.msra.mxu0 %v5195
    %5240 = vmatprep.subr.bf16.mxu0 0
    %5241 = vmatpush1.bf16.msra.mxu0 %v5194
    %5242 = vmatprep.subr.bf16.mxu0 0
    %5243 = vmatpush2.bf16.msra.mxu0 %v5209
    %5244 = vmatprep.subr.bf16.mxu0 0
    %5245 = vmatpush2.bf16.msra.mxu0 %v5208
    %5246 = vmatprep.subr.bf16.mxu0 0
    %5247 = vmatpush2.bf16.msra.mxu0 %v5207
    %5248 = vmatprep.subr.bf16.mxu0 0
    %5249 = vmatpush2.bf16.msra.mxu0 %v5206
    %5250 = vmatprep.subr.bf16.mxu0 0
    %5251 = vmatpush2.bf16.msra.mxu0 %v5205
    %5252 = vmatprep.subr.bf16.mxu0 0
    %5253 = vmatpush2.bf16.msra.mxu0 %v5204
    %5254 = vmatprep.subr.bf16.mxu0 0
    %5255 = vmatpush2.bf16.msra.mxu0 %v5203
    %5256 = vmatprep.subr.bf16.mxu0 0
    %5257 = vmatpush2.bf16.msra.mxu0 %v5202
    %5258 = vmatprep.mubr.bf16.mxu0 %v5088
    %5259 = vmatmul.mubr.bf16.gmra.mxu0 %v5087
    %v5260 = vpop.f32.mrf.mxu0
    %v5261 = vadd.f32 %v5128, %v5260
    %v5262 = vpop.f32.mrf.mxu0
    %v5263 = vpop.f32.mrf.mxu0
    %v5264 = vpop.f32.mrf.mxu0
    %5265 = vdwg.mxu0
    %5266 = vmax.xlane.f32.xlu0 %v5261
    %v5267 = vpop.xlane.xlu0 %5266
    %v5268 = vsub.f32 %v5261, %v5267
    %v5269 = vmul.f32 %v5268, 1.442695
    %v5270 = vpow.pop %v5269
    %5271 = vadd.xlane.f32.xlu0 %v5270
    %v5272 = vpop.xlane.xlu0 %5271
    %v5273 = vlog2.pop %v5272
    %v5274 = vmul.f32 %v5273, 0.6931472
    %v5275 = vsub.f32 %v5268, %v5274
    %s5276 = scalar_lea.vmem [#allocation14], 8
    %5277 = vst [vmem:[%s5276] sm:$0xff] %v5275
    // Predicated region
    $region58: #{tpu_custom_call.1} parent=1 // pred_check
      _
    $region59: #{tpu_custom_call.1} parent=1 // pred_check_branch
      %5279 = sbr.rel (0) target = $region61
    $region60: #{tpu_custom_call.1} parent=1 // pred_region
      %s5281 = ssub.s32 256, 256
      %5282 = vsyncadd [#allocation4], %s5281
      %s5283 = sshll.u32 [#allocation14], 4
      %s5284 = int_to_ptr.vmem [resolvable:$true] %s5283
      %5289 = dma.vmem_to_hbm [thread:$0]  %s5284, 256, %s7, [#allocation4], 128, 128, 8
    $region61: #{tpu_custom_call.1} parent=1 // pred_fallthru
      _
    // Predicated region
    $region62: #{tpu_custom_call.1} parent=1 // pred_check
      _
    $region63: #{tpu_custom_call.1} parent=1 // pred_check_branch
      %5291 = sbr.rel (0) target = $region65
    $region64: #{tpu_custom_call.1} parent=1 // pred_region
      %5292 = dma.done [#allocation4], 256
    $region65: #{tpu_custom_call.1} parent=1 // pred_fallthru
      _
    %5293 = vsyncpa [#allocation3], 1
    %5294 = vsyncpa [#allocation6], 1
    %5295 = vsyncpa [#allocation9], 1
    %5296 = vsyncpa [#allocation12], 1
    %5297 = vsyncpa [#allocation4], 1

</llo_original>
